<compile_context>
chip_gen: v7x
topology: tpu7x:2x2x1
jax: 0.10.0
libtpu: 0.0.40
codegen_flags: <defaults>
</compile_context>

<pallas_src>
import functools
import math

import jax
import jax.numpy as jnp
from jax.experimental import pallas as pl
from jax.experimental.pallas import tpu as pltpu


# ---------------------------------------------------------------------------
# In-kernel math helpers (all f32)
# ---------------------------------------------------------------------------
_SQRT_2_OVER_PI = math.sqrt(2.0 / math.pi)


def _gelu(x):
    # tanh-approximation GELU (single EUP tanh); PyTorch default is exact erf.
    inner = jnp.float32(_SQRT_2_OVER_PI) * (x + jnp.float32(0.044715) * x * x * x)
    return jnp.float32(0.5) * x * (jnp.float32(1.0) + jnp.tanh(inner))


def _layernorm(x, gamma, beta):
    mu = jnp.mean(x, axis=-1, keepdims=True)
    var = jnp.mean(jnp.square(x - mu), axis=-1, keepdims=True)
    return (x - mu) * jax.lax.rsqrt(var + jnp.float32(1e-5)) * gamma + beta


def _softmax_lastdim(s):
    s = s - jnp.max(s, axis=-1, keepdims=True)
    p = jnp.exp(s)
    return p * pl.reciprocal(jnp.sum(p, axis=-1, keepdims=True), approx=True)


def _attention(q2d, kv2d, *, bt, nq, nk, q_shared,
               wq, bq, wk, bk, wv, bv, wo, bo, num_heads, scaling, cd):
    """EstiformerAttention with per-head weight slabs pre-split in the wrapper.

    q2d:  (nq, H) if q_shared (batch-shared queries, e.g. the inducer)
          else (bt*nq, H).
    kv2d: (bt*nk, H).
    wq/wk/wv: refs (num_heads, H, hd); bq/bk/bv: refs (num_heads, 1, hd);
    wo: ref (num_heads, hd, H); bo: ref (1, H).
    Head outputs are summed through the per-head slice of the output
    projection, so there is no lane-axis slicing or concatenation.
    Returns (bt*nq, H) float32.
    """
    scale = jnp.float32(scaling)
    out = None
    for h in range(num_heads):                     # static unroll, small nh
        wq_h, wk_h, wv_h, wo_h = wq[h], wk[h], wv[h], wo[h]
        qh = (jnp.dot(q2d.astype(cd), wq_h, preferred_element_type=jnp.float32)
              + bq[h]) * scale                     # scale AFTER bias (PyTorch)
        kh = jnp.dot(kv2d.astype(cd), wk_h, preferred_element_type=jnp.float32) + bk[h]
        vh = jnp.dot(kv2d.astype(cd), wv_h, preferred_element_type=jnp.float32) + bv[h]
        hd = qh.shape[-1]
        if q_shared:
            q3 = jnp.broadcast_to(qh[None], (bt, nq, hd))
        else:
            q3 = qh.reshape(bt, nq, hd)
        k3 = kh.reshape(bt, nk, hd)
        v3 = vh.reshape(bt, nk, hd)
        s = jnp.einsum('bqd,bkd->bqk', q3.astype(cd), k3.astype(cd),
                       preferred_element_type=jnp.float32)
        p = _softmax_lastdim(s)
        o3 = jnp.einsum('bqk,bkd->bqd', p.astype(cd), v3.astype(cd),
                        preferred_element_type=jnp.float32)
        contrib = jnp.dot(o3.reshape(bt * nq, hd).astype(cd), wo_h,
                          preferred_element_type=jnp.float32)
        out = contrib if out is None else out + contrib
    return out + bo[...]


# ---------------------------------------------------------------------------
# Kernel: one grid step == one (batch block, layer) pair
# ---------------------------------------------------------------------------
def _encoder_layer_kernel(
        x_ref,
        ind_ref, ln0_g, ln0_b,
        in_wq, in_bq, in_wk, in_bk, in_wv, in_bv, in_wo, in_bo,
        out_wq, out_bq, out_wk, out_bk, out_wv, out_bv, out_wo, out_bo,
        ln1_g, ln1_b, w1, b1, w2, b2,
        o_ref, carry_ref,
        *, num_heads, scaling, compute_dtype):
    layer = pl.program_id(1)
    bt, t, hidden = carry_ref.shape
    ni = ind_ref.shape[0]
    cd = compute_dtype

    @pl.when(layer == 0)
    def _():
        carry_ref[...] = x_ref[...]

    x2d = carry_ref[...].reshape(bt * t, hidden)             # f32 activation

    # ---------------- attention block (pre-LN) ----------------
    xn2d = _layernorm(x2d, ln0_g[...], ln0_b[...])

    # (1) input_inducer_attn: queries = batch-shared inducer, K/V = ln0(x).
    #     Inducer Q projection is identical for all batch elements -> once.
    mem2d = _attention(
        ind_ref[...], xn2d, bt=bt, nq=ni, nk=t, q_shared=True,
        wq=in_wq, bq=in_bq, wk=in_wk, bk=in_bk, wv=in_wv, bv=in_bv,
        wo=in_wo, bo=in_bo, num_heads=num_heads, scaling=scaling, cd=cd)

    # (2) inducer_output_attn: queries = ln0(x), K/V = inducer memory.
    attn2d = _attention(
        xn2d, mem2d, bt=bt, nq=t, nk=ni, q_shared=False,
        wq=out_wq, bq=out_bq, wk=out_wk, bk=out_bk, wv=out_wv, bv=out_bv,
        wo=out_wo, bo=out_bo, num_heads=num_heads, scaling=scaling, cd=cd)

    x2d = attn2d + x2d                                        # residual

    # ---------------- FFN block (dropout = identity, eval) ----------------
    xn2d = _layernorm(x2d, ln1_g[...], ln1_b[...])
    h1 = _gelu(jnp.dot(xn2d.astype(cd), w1[...],
                       preferred_element_type=jnp.float32) + b1[...])
    x2d = (jnp.dot(h1.astype(cd), w2[...],
                   preferred_element_type=jnp.float32) + b2[...]) + x2d

    carry_ref[...] = x2d.reshape(bt, t, hidden)

    @pl.when(layer == pl.num_programs(1) - 1)
    def _():
        o_ref[...] = carry_ref[...]                           # one HBM writeback / block


_WEIGHT_NAMES = ("inducer", "ln0_g", "ln0_b",
                 "in_wq", "in_bq", "in_wk", "in_bk", "in_wv", "in_bv",
                 "in_wo", "in_bo",
                 "out_wq", "out_bq", "out_wk", "out_bk", "out_wv", "out_bv",
                 "out_wo", "out_bo",
                 "ln1_g", "ln1_b", "w1", "b1", "w2", "b2")


def _pick_batch_tile(b, t, target_rows=256):
    """Largest divisor of b with bt*t <= target_rows, keeping >= 2 batch blocks
    (v7x has 2 TensorCores) whenever b >= 2."""
    want = max(1, target_rows // max(t, 1))
    divisors = [d for d in range(1, b + 1) if b % d == 0]
    bt = max([d for d in divisors if d <= want] or [1])
    if b >= 2 and b // bt < 2:
        smaller = [d for d in divisors if b // d >= 2]
        if smaller:
            bt = max(smaller)
    return bt


def _layer_index_map(ndim):
    zeros = (0,) * (ndim - 1)
    return lambda i, l: (l,) + zeros


def estiformer_encoder_forward(params, x, *, num_heads, batch_tile=None):
    b, t, h = x.shape
    num_layers = params["inducer"].shape[0]
    scaling = float((h // num_heads) ** (-0.5))
    bt = batch_tile if batch_tile is not None else _pick_batch_tile(b, t)
    assert b % bt == 0, "batch_tile must divide batch"
    nb = b // bt

    weights = [params[name] for name in _WEIGHT_NAMES]

    def layer_spec(arr):
        # Per-layer parameter: leading (squeezed) layer axis selected by the
        # inner "arbitrary" grid axis -> weight streaming + next-layer prefetch.
        return pl.BlockSpec((None,) + arr.shape[1:], _layer_index_map(arr.ndim))

    kernel = functools.partial(
        _encoder_layer_kernel, num_heads=num_heads, scaling=scaling,
        compute_dtype=params["in_wq"].dtype)

    return pl.pallas_call(
        kernel,
        out_shape=jax.ShapeDtypeStruct((b, t, h), jnp.float32),
        grid=(nb, num_layers),
        in_specs=([pl.BlockSpec((bt, t, h), lambda i, l: (i, 0, 0))]
                  + [layer_spec(w) for w in weights]),
        out_specs=pl.BlockSpec((bt, t, h), lambda i, l: (i, 0, 0)),
        scratch_shapes=[pltpu.VMEM((bt, t, h), jnp.float32)],   # layer carry
        compiler_params=pltpu.CompilerParams(
            dimension_semantics=("parallel", "arbitrary"),
            # Explicit VMEM budget (safe on v5e/v6e/v7x); re-derive per
            # generation when blocks grow to production sizes.
            vmem_limit_bytes=48 * 1024 * 1024),
    )(x, *weights)


# ---------------------------------------------------------------------------
# Deterministic parameter initialization (PyTorch-layout -> kernel layout)
# ---------------------------------------------------------------------------
def _uniform(key, shape, bound):
    return jax.random.uniform(key, shape, jnp.float32, -bound, bound)


def _xavier(key, shape, fan_in, fan_out):
    return _uniform(key, shape, math.sqrt(6.0 / (fan_in + fan_out)))


def _init_linear(key, fin, fout, wdtype):
    kw, kb = jax.random.split(key)
    w = _xavier(kw, (fin, fout), fin, fout).astype(wdtype)   # (in, out) = W^T
    bvec = _uniform(kb, (1, fout), 1.0 / math.sqrt(fin))     # bias stays f32
    return w, bvec


def _split_heads_w(w, num_heads):
    # (in, out) -> (num_heads, in, head_dim): per-head output-column slabs.
    fin, fout = w.shape
    hd = fout // num_heads
    return jnp.transpose(w.reshape(fin, num_heads, hd), (1, 0, 2))


def _split_heads_b(bvec, num_heads):
    # (1, out) -> (num_heads, 1, head_dim)
    hd = bvec.shape[-1] // num_heads
    return bvec.reshape(num_heads, hd)[:, None, :]


def _split_heads_wo(w, num_heads):
    # out_proj (in=H, out=H) -> (num_heads, head_dim, H): per-head input slabs.
    fin, fout = w.shape
    hd = fin // num_heads
    return w.reshape(num_heads, hd, fout)


def init_encoder(key, *, hidden_size, num_heads, num_inducers, num_layers,
                 weight_dtype=jnp.bfloat16):
    h, ni = hidden_size, num_inducers

    def attn_params(prefix, keys):
        wq, bq = _init_linear(keys[0], h, h, weight_dtype)
        wk, bk = _init_linear(keys[1], h, h, weight_dtype)
        wv, bv = _init_linear(keys[2], h, h, weight_dtype)
        wo, bo = _init_linear(keys[3], h, h, weight_dtype)
        return {
            f"{prefix}_wq": _split_heads_w(wq, num_heads),
            f"{prefix}_bq": _split_heads_b(bq, num_heads),
            f"{prefix}_wk": _split_heads_w(wk, num_heads),
            f"{prefix}_bk": _split_heads_b(bk, num_heads),
            f"{prefix}_wv": _split_heads_w(wv, num_heads),
            f"{prefix}_bv": _split_heads_b(bv, num_heads),
            f"{prefix}_wo": _split_heads_wo(wo, num_heads),
            f"{prefix}_bo": bo,
        }

    per_layer = []
    for lk in jax.random.split(key, num_layers):
        ks = jax.random.split(lk, 5)
        lp = {}
        lp.update(attn_params("in", jax.random.split(ks[0], 4)))
        lp.update(attn_params("out", jax.random.split(ks[1], 4)))
        w1, b1 = _init_linear(ks[2], h, 2 * h, weight_dtype)
        w2, b2 = _init_linear(ks[3], 2 * h, h, weight_dtype)
        lp.update(dict(
            # inducer stays f32 (activation-side operand; cast at the dot)
            inducer=_xavier(ks[4], (ni, h), ni * h, h),
            ln0_g=jnp.ones((1, h), jnp.float32), ln0_b=jnp.zeros((1, h), jnp.float32),
            ln1_g=jnp.ones((1, h), jnp.float32), ln1_b=jnp.zeros((1, h), jnp.float32),
            w1=w1, b1=b1, w2=w2, b2=b2,
        ))
        per_layer.append(lp)

    # Stack on a leading layer axis -> streamed per layer via the grid.
    return {name: jnp.stack([lp[name] for lp in per_layer], axis=0)
            for name in _WEIGHT_NAMES}


# ---------------------------------------------------------------------------
if __name__ == "__main__":
    cfg = dict(hidden_size=32, num_heads=4, num_inducers=8, num_layers=2)
    batch, seq = 2, 16

    key = jax.random.PRNGKey(0)
    pkey, xkey = jax.random.split(key)
    params = init_encoder(pkey, **cfg)
    x = jax.random.normal(xkey, (batch, seq, cfg["hidden_size"]), dtype=jnp.float32)

    fwd = jax.jit(functools.partial(estiformer_encoder_forward,
                                    num_heads=cfg["num_heads"]))
    out = jax.block_until_ready(fwd(params, x))

    assert out.shape == (batch, seq, cfg["hidden_size"]) and out.dtype == jnp.float32
    assert bool(jnp.all(jnp.isfinite(out)))
    print("KERNEL_OK")
</pallas_src>

<mosaic_0001>
module attributes {stable_mosaic.version = 11 : i64} {
  func.func @_encoder_layer_kernel(%arg0: i32, %arg1: i32, %arg2: memref<1x16x32xf32, #tpu.memory_space<vmem>>, %arg3: memref<1x8x32xf32, #tpu.memory_space<vmem>>, %arg4: memref<1x1x32xf32, #tpu.memory_space<vmem>>, %arg5: memref<1x1x32xf32, #tpu.memory_space<vmem>>, %arg6: memref<1x4x32x8xbf16, #tpu.memory_space<vmem>>, %arg7: memref<1x4x1x8xf32, #tpu.memory_space<vmem>>, %arg8: memref<1x4x32x8xbf16, #tpu.memory_space<vmem>>, %arg9: memref<1x4x1x8xf32, #tpu.memory_space<vmem>>, %arg10: memref<1x4x32x8xbf16, #tpu.memory_space<vmem>>, %arg11: memref<1x4x1x8xf32, #tpu.memory_space<vmem>>, %arg12: memref<1x4x8x32xbf16, #tpu.memory_space<vmem>>, %arg13: memref<1x1x32xf32, #tpu.memory_space<vmem>>, %arg14: memref<1x4x32x8xbf16, #tpu.memory_space<vmem>>, %arg15: memref<1x4x1x8xf32, #tpu.memory_space<vmem>>, %arg16: memref<1x4x32x8xbf16, #tpu.memory_space<vmem>>, %arg17: memref<1x4x1x8xf32, #tpu.memory_space<vmem>>, %arg18: memref<1x4x32x8xbf16, #tpu.memory_space<vmem>>, %arg19: memref<1x4x1x8xf32, #tpu.memory_space<vmem>>, %arg20: memref<1x4x8x32xbf16, #tpu.memory_space<vmem>>, %arg21: memref<1x1x32xf32, #tpu.memory_space<vmem>>, %arg22: memref<1x1x32xf32, #tpu.memory_space<vmem>>, %arg23: memref<1x1x32xf32, #tpu.memory_space<vmem>>, %arg24: memref<1x32x64xbf16, #tpu.memory_space<vmem>>, %arg25: memref<1x1x64xf32, #tpu.memory_space<vmem>>, %arg26: memref<1x64x32xbf16, #tpu.memory_space<vmem>>, %arg27: memref<1x1x32xf32, #tpu.memory_space<vmem>>, %arg28: memref<1x16x32xf32, #tpu.memory_space<vmem>>, %arg29: memref<1x16x32xf32, #tpu.memory_space<vmem>>) attributes {dimension_semantics = [#tpu.dimension_semantics<parallel>, #tpu.dimension_semantics<arbitrary>], iteration_bounds = array<i64: 2, 2>, scalar_prefetch = 0 : i64, scratch_operands = 1 : i64, tpu.core_type = #tpu.core_type<tc>, window_params = [{transform_indices = @transform_0, window_bounds = array<i64: 1, 16, 32>}, {transform_indices = @transform_1, window_bounds = array<i64: 1, 8, 32>}, {transform_indices = @transform_2, window_bounds = array<i64: 1, 1, 32>}, {transform_indices = @transform_3, window_bounds = array<i64: 1, 1, 32>}, {transform_indices = @transform_4, window_bounds = array<i64: 1, 4, 32, 8>}, {transform_indices = @transform_5, window_bounds = array<i64: 1, 4, 1, 8>}, {transform_indices = @transform_6, window_bounds = array<i64: 1, 4, 32, 8>}, {transform_indices = @transform_7, window_bounds = array<i64: 1, 4, 1, 8>}, {transform_indices = @transform_8, window_bounds = array<i64: 1, 4, 32, 8>}, {transform_indices = @transform_9, window_bounds = array<i64: 1, 4, 1, 8>}, {transform_indices = @transform_10, window_bounds = array<i64: 1, 4, 8, 32>}, {transform_indices = @transform_11, window_bounds = array<i64: 1, 1, 32>}, {transform_indices = @transform_12, window_bounds = array<i64: 1, 4, 32, 8>}, {transform_indices = @transform_13, window_bounds = array<i64: 1, 4, 1, 8>}, {transform_indices = @transform_14, window_bounds = array<i64: 1, 4, 32, 8>}, {transform_indices = @transform_15, window_bounds = array<i64: 1, 4, 1, 8>}, {transform_indices = @transform_16, window_bounds = array<i64: 1, 4, 32, 8>}, {transform_indices = @transform_17, window_bounds = array<i64: 1, 4, 1, 8>}, {transform_indices = @transform_18, window_bounds = array<i64: 1, 4, 8, 32>}, {transform_indices = @transform_19, window_bounds = array<i64: 1, 1, 32>}, {transform_indices = @transform_20, window_bounds = array<i64: 1, 1, 32>}, {transform_indices = @transform_21, window_bounds = array<i64: 1, 1, 32>}, {transform_indices = @transform_22, window_bounds = array<i64: 1, 32, 64>}, {transform_indices = @transform_23, window_bounds = array<i64: 1, 1, 64>}, {transform_indices = @transform_24, window_bounds = array<i64: 1, 64, 32>}, {transform_indices = @transform_25, window_bounds = array<i64: 1, 1, 32>}, {transform_indices = @transform_26, window_bounds = array<i64: 1, 16, 32>}]} {
    %c0_i32 = arith.constant 0 : i32
    %0 = arith.cmpi eq, %arg1, %c0_i32 : i32
    %1 = arith.extui %0 : i1 to i32
    %c0_i32_0 = arith.constant 0 : i32
    %2 = arith.cmpi ne, %1, %c0_i32_0 : i32
    scf.if %2 {
      %c0_348 = arith.constant 0 : index
      %c0_349 = arith.constant 0 : index
      %c0_350 = arith.constant 0 : index
      %509 = vector.load %arg2[%c0_348, %c0_349, %c0_350] : memref<1x16x32xf32, #tpu.memory_space<vmem>>, vector<1x16x32xf32>
      %c0_351 = arith.constant 0 : index
      %c0_352 = arith.constant 0 : index
      %c0_353 = arith.constant 0 : index
      %510 = vector.load %arg29[%c0_351, %c0_352, %c0_353] : memref<1x16x32xf32, #tpu.memory_space<vmem>>, vector<1x16x32xf32>
      tpu.vector_store %arg29[%c0_351, %c0_352, %c0_353], %509 {strides = array<i32>} : memref<1x16x32xf32, #tpu.memory_space<vmem>>, vector<1x16x32xf32>,
    } else {
    }
    %c0 = arith.constant 0 : index
    %c0_1 = arith.constant 0 : index
    %c0_2 = arith.constant 0 : index
    %3 = vector.load %arg29[%c0, %c0_1, %c0_2] : memref<1x16x32xf32, #tpu.memory_space<vmem>>, vector<1x16x32xf32>
    %4 = vector.shape_cast %3 : vector<1x16x32xf32> to vector<16x32xf32>
    %c0_3 = arith.constant 0 : index
    %c0_4 = arith.constant 0 : index
    %c0_5 = arith.constant 0 : index
    %5 = vector.load %arg4[%c0_3, %c0_4, %c0_5] : memref<1x1x32xf32, #tpu.memory_space<vmem>>, vector<1x1x32xf32>
    %6 = vector.shape_cast %5 : vector<1x1x32xf32> to vector<1x32xf32>
    %c0_6 = arith.constant 0 : index
    %c0_7 = arith.constant 0 : index
    %c0_8 = arith.constant 0 : index
    %7 = vector.load %arg5[%c0_6, %c0_7, %c0_8] : memref<1x1x32xf32, #tpu.memory_space<vmem>>, vector<1x1x32xf32>
    %8 = vector.shape_cast %7 : vector<1x1x32xf32> to vector<1x32xf32>
    %cst = arith.constant dense<0.000000e+00> : vector<16xf32>
    %9 = vector.multi_reduction <add>, %4, %cst [1] : vector<16x32xf32> to vector<16xf32>
    %10 = vector.shape_cast %9 : vector<16xf32> to vector<16x1xf32>
    %cst_9 = arith.constant 3.200000e+01 : f32
    %11 = vector.broadcast %cst_9 : f32 to vector<16x1xf32>
    %12 = arith.divf %10, %11 : vector<16x1xf32>
    %13 = vector.broadcast %12 : vector<16x1xf32> to vector<16x32xf32>
    %14 = arith.subf %4, %13 : vector<16x32xf32>
    %15 = arith.mulf %14, %14 : vector<16x32xf32>
    %cst_10 = arith.constant dense<0.000000e+00> : vector<16xf32>
    %16 = vector.multi_reduction <add>, %15, %cst_10 [1] : vector<16x32xf32> to vector<16xf32>
    %17 = vector.shape_cast %16 : vector<16xf32> to vector<16x1xf32>
    %cst_11 = arith.constant 3.200000e+01 : f32
    %18 = vector.broadcast %cst_11 : f32 to vector<16x1xf32>
    %19 = arith.divf %17, %18 : vector<16x1xf32>
    %20 = vector.broadcast %12 : vector<16x1xf32> to vector<16x32xf32>
    %21 = arith.subf %4, %20 : vector<16x32xf32>
    %cst_12 = arith.constant 9.99999974E-6 : f32
    %22 = vector.broadcast %cst_12 : f32 to vector<16x1xf32>
    %23 = arith.addf %19, %22 : vector<16x1xf32>
    %24 = math.rsqrt %23 : vector<16x1xf32>
    %25 = vector.broadcast %24 : vector<16x1xf32> to vector<16x32xf32>
    %26 = arith.mulf %21, %25 : vector<16x32xf32>
    %27 = vector.broadcast %6 : vector<1x32xf32> to vector<16x32xf32>
    %28 = arith.mulf %26, %27 : vector<16x32xf32>
    %29 = vector.broadcast %8 : vector<1x32xf32> to vector<16x32xf32>
    %30 = arith.addf %28, %29 : vector<16x32xf32>
    %c0_13 = arith.constant 0 : index
    %c0_14 = arith.constant 0 : index
    %c0_15 = arith.constant 0 : index
    %31 = vector.load %arg3[%c0_13, %c0_14, %c0_15] : memref<1x8x32xf32, #tpu.memory_space<vmem>>, vector<1x8x32xf32>
    %32 = vector.shape_cast %31 : vector<1x8x32xf32> to vector<8x32xf32>
    %c0_16 = arith.constant 0 : index
    %c0_17 = arith.constant 0 : index
    %c0_18 = arith.constant 0 : index
    %c0_19 = arith.constant 0 : index
    %33 = vector.load %arg6[%c0_16, %c0_17, %c0_18, %c0_19] : memref<1x4x32x8xbf16, #tpu.memory_space<vmem>>, vector<1x1x32x8xbf16>
    %34 = vector.shape_cast %33 : vector<1x1x32x8xbf16> to vector<32x8xbf16>
    %c0_20 = arith.constant 0 : index
    %c0_21 = arith.constant 0 : index
    %c0_22 = arith.constant 0 : index
    %c0_23 = arith.constant 0 : index
    %35 = vector.load %arg8[%c0_20, %c0_21, %c0_22, %c0_23] : memref<1x4x32x8xbf16, #tpu.memory_space<vmem>>, vector<1x1x32x8xbf16>
    %36 = vector.shape_cast %35 : vector<1x1x32x8xbf16> to vector<32x8xbf16>
    %c0_24 = arith.constant 0 : index
    %c0_25 = arith.constant 0 : index
    %c0_26 = arith.constant 0 : index
    %c0_27 = arith.constant 0 : index
    %37 = vector.load %arg10[%c0_24, %c0_25, %c0_26, %c0_27] : memref<1x4x32x8xbf16, #tpu.memory_space<vmem>>, vector<1x1x32x8xbf16>
    %38 = vector.shape_cast %37 : vector<1x1x32x8xbf16> to vector<32x8xbf16>
    %c0_28 = arith.constant 0 : index
    %c0_29 = arith.constant 0 : index
    %c0_30 = arith.constant 0 : index
    %c0_31 = arith.constant 0 : index
    %39 = vector.load %arg12[%c0_28, %c0_29, %c0_30, %c0_31] : memref<1x4x8x32xbf16, #tpu.memory_space<vmem>>, vector<1x1x8x32xbf16>
    %40 = vector.shape_cast %39 : vector<1x1x8x32xbf16> to vector<8x32xbf16>
    %41 = arith.truncf %32 : vector<8x32xf32> to vector<8x32xbf16>
    %cst_32 = arith.constant dense<0.000000e+00> : vector<8x8xf32>
    %42 = tpu.matmul %41, %34, %cst_32 {dimension_numbers = #tpu.dot_dimension_numbers<[1], [0], [0], [1], [0, 0, 1, 1], [], []>} : vector<8x32xbf16>, vector<32x8xbf16>, vector<8x8xf32> -> vector<8x8xf32>
    %c0_33 = arith.constant 0 : index
    %c0_34 = arith.constant 0 : index
    %c0_35 = arith.constant 0 : index
    %c0_36 = arith.constant 0 : index
    %43 = vector.load %arg7[%c0_33, %c0_34, %c0_35, %c0_36] : memref<1x4x1x8xf32, #tpu.memory_space<vmem>>, vector<1x1x1x8xf32>
    %44 = vector.shape_cast %43 : vector<1x1x1x8xf32> to vector<1x8xf32>
    %45 = vector.broadcast %44 : vector<1x8xf32> to vector<8x8xf32>
    %46 = arith.addf %42, %45 : vector<8x8xf32>
    %cst_37 = arith.constant 0.353553385 : f32
    %47 = vector.broadcast %cst_37 : f32 to vector<8x8xf32>
    %48 = arith.mulf %46, %47 : vector<8x8xf32>
    %49 = arith.truncf %30 : vector<16x32xf32> to vector<16x32xbf16>
    %cst_38 = arith.constant dense<0.000000e+00> : vector<16x8xf32>
    %50 = tpu.matmul %49, %36, %cst_38 {dimension_numbers = #tpu.dot_dimension_numbers<[1], [0], [0], [1], [0, 0, 1, 1], [], []>} : vector<16x32xbf16>, vector<32x8xbf16>, vector<16x8xf32> -> vector<16x8xf32>
    %c0_39 = arith.constant 0 : index
    %c0_40 = arith.constant 0 : index
    %c0_41 = arith.constant 0 : index
    %c0_42 = arith.constant 0 : index
    %51 = vector.load %arg9[%c0_39, %c0_40, %c0_41, %c0_42] : memref<1x4x1x8xf32, #tpu.memory_space<vmem>>, vector<1x1x1x8xf32>
    %52 = vector.shape_cast %51 : vector<1x1x1x8xf32> to vector<1x8xf32>
    %53 = vector.broadcast %52 : vector<1x8xf32> to vector<16x8xf32>
    %54 = arith.addf %50, %53 : vector<16x8xf32>
    %55 = arith.truncf %30 : vector<16x32xf32> to vector<16x32xbf16>
    %cst_43 = arith.constant dense<0.000000e+00> : vector<16x8xf32>
    %56 = tpu.matmul %55, %38, %cst_43 {dimension_numbers = #tpu.dot_dimension_numbers<[1], [0], [0], [1], [0, 0, 1, 1], [], []>} : vector<16x32xbf16>, vector<32x8xbf16>, vector<16x8xf32> -> vector<16x8xf32>
    %c0_44 = arith.constant 0 : index
    %c0_45 = arith.constant 0 : index
    %c0_46 = arith.constant 0 : index
    %c0_47 = arith.constant 0 : index
    %57 = vector.load %arg11[%c0_44, %c0_45, %c0_46, %c0_47] : memref<1x4x1x8xf32, #tpu.memory_space<vmem>>, vector<1x1x1x8xf32>
    %58 = vector.shape_cast %57 : vector<1x1x1x8xf32> to vector<1x8xf32>
    %59 = vector.broadcast %58 : vector<1x8xf32> to vector<16x8xf32>
    %60 = arith.addf %56, %59 : vector<16x8xf32>
    %61 = vector.shape_cast %48 : vector<8x8xf32> to vector<1x8x8xf32>
    %62 = vector.shape_cast %54 : vector<16x8xf32> to vector<1x16x8xf32>
    %63 = vector.shape_cast %60 : vector<16x8xf32> to vector<1x16x8xf32>
    %64 = arith.truncf %61 : vector<1x8x8xf32> to vector<1x8x8xbf16>
    %65 = arith.truncf %62 : vector<1x16x8xf32> to vector<1x16x8xbf16>
    "tpu.trace_start"() <{level = 10 : i32, message = "bqd,bkd->bqk"}> : () -> ()
    %cst_48 = arith.constant dense<0.000000e+00> : vector<1x8x16xf32>
    %66 = tpu.matmul %64, %65, %cst_48 {dimension_numbers = #tpu.dot_dimension_numbers<[2], [2], [1], [1], [0, 0, 0, 1, 1, 1], [0], [0]>} : vector<1x8x8xbf16>, vector<1x16x8xbf16>, vector<1x8x16xf32> -> vector<1x8x16xf32>
    "tpu.trace_stop"() : () -> ()
    %cst_49 = arith.constant dense<0xFF800000> : vector<1x8xf32>
    %67 = vector.multi_reduction <maximumf>, %66, %cst_49 [2] : vector<1x8x16xf32> to vector<1x8xf32>
    %68 = vector.shape_cast %67 : vector<1x8xf32> to vector<1x8x1xf32>
    %69 = vector.broadcast %68 : vector<1x8x1xf32> to vector<1x8x16xf32>
    %70 = arith.subf %66, %69 : vector<1x8x16xf32>
    %71 = math.exp %70 : vector<1x8x16xf32>
    %cst_50 = arith.constant dense<0.000000e+00> : vector<1x8xf32>
    %72 = vector.multi_reduction <add>, %71, %cst_50 [2] : vector<1x8x16xf32> to vector<1x8xf32>
    %73 = vector.shape_cast %72 : vector<1x8xf32> to vector<1x8x1xf32>
    %74 = tpu.reciprocal %73 {approx = true} : vector<1x8x1xf32> -> vector<1x8x1xf32>
    %75 = vector.broadcast %74 : vector<1x8x1xf32> to vector<1x8x16xf32>
    %76 = arith.mulf %71, %75 : vector<1x8x16xf32>
    %77 = arith.truncf %76 : vector<1x8x16xf32> to vector<1x8x16xbf16>
    %78 = arith.truncf %63 : vector<1x16x8xf32> to vector<1x16x8xbf16>
    "tpu.trace_start"() <{level = 10 : i32, message = "bqk,bkd->bqd"}> : () -> ()
    %cst_51 = arith.constant dense<0.000000e+00> : vector<1x8x8xf32>
    %79 = tpu.matmul %77, %78, %cst_51 {dimension_numbers = #tpu.dot_dimension_numbers<[2], [1], [1], [2], [0, 0, 0, 1, 1, 2], [0], [0]>} : vector<1x8x16xbf16>, vector<1x16x8xbf16>, vector<1x8x8xf32> -> vector<1x8x8xf32>
    "tpu.trace_stop"() : () -> ()
    %80 = vector.shape_cast %79 : vector<1x8x8xf32> to vector<8x8xf32>
    %81 = arith.truncf %80 : vector<8x8xf32> to vector<8x8xbf16>
    %cst_52 = arith.constant dense<0.000000e+00> : vector<8x32xf32>
    %82 = tpu.matmul %81, %40, %cst_52 {dimension_numbers = #tpu.dot_dimension_numbers<[1], [0], [0], [1], [0, 0, 1, 1], [], []>} : vector<8x8xbf16>, vector<8x32xbf16>, vector<8x32xf32> -> vector<8x32xf32>
    %c0_53 = arith.constant 0 : index
    %c1 = arith.constant 1 : index
    %c0_54 = arith.constant 0 : index
    %c0_55 = arith.constant 0 : index
    %83 = vector.load %arg6[%c0_53, %c1, %c0_54, %c0_55] : memref<1x4x32x8xbf16, #tpu.memory_space<vmem>>, vector<1x1x32x8xbf16>
    %84 = vector.shape_cast %83 : vector<1x1x32x8xbf16> to vector<32x8xbf16>
    %c0_56 = arith.constant 0 : index
    %c1_57 = arith.constant 1 : index
    %c0_58 = arith.constant 0 : index
    %c0_59 = arith.constant 0 : index
    %85 = vector.load %arg8[%c0_56, %c1_57, %c0_58, %c0_59] : memref<1x4x32x8xbf16, #tpu.memory_space<vmem>>, vector<1x1x32x8xbf16>
    %86 = vector.shape_cast %85 : vector<1x1x32x8xbf16> to vector<32x8xbf16>
    %c0_60 = arith.constant 0 : index
    %c1_61 = arith.constant 1 : index
    %c0_62 = arith.constant 0 : index
    %c0_63 = arith.constant 0 : index
    %87 = vector.load %arg10[%c0_60, %c1_61, %c0_62, %c0_63] : memref<1x4x32x8xbf16, #tpu.memory_space<vmem>>, vector<1x1x32x8xbf16>
    %88 = vector.shape_cast %87 : vector<1x1x32x8xbf16> to vector<32x8xbf16>
    %c0_64 = arith.constant 0 : index
    %c1_65 = arith.constant 1 : index
    %c0_66 = arith.constant 0 : index
    %c0_67 = arith.constant 0 : index
    %89 = vector.load %arg12[%c0_64, %c1_65, %c0_66, %c0_67] : memref<1x4x8x32xbf16, #tpu.memory_space<vmem>>, vector<1x1x8x32xbf16>
    %90 = vector.shape_cast %89 : vector<1x1x8x32xbf16> to vector<8x32xbf16>
    %91 = arith.truncf %32 : vector<8x32xf32> to vector<8x32xbf16>
    %cst_68 = arith.constant dense<0.000000e+00> : vector<8x8xf32>
    %92 = tpu.matmul %91, %84, %cst_68 {dimension_numbers = #tpu.dot_dimension_numbers<[1], [0], [0], [1], [0, 0, 1, 1], [], []>} : vector<8x32xbf16>, vector<32x8xbf16>, vector<8x8xf32> -> vector<8x8xf32>
    %c0_69 = arith.constant 0 : index
    %c1_70 = arith.constant 1 : index
    %c0_71 = arith.constant 0 : index
    %c0_72 = arith.constant 0 : index
    %93 = vector.load %arg7[%c0_69, %c1_70, %c0_71, %c0_72] : memref<1x4x1x8xf32, #tpu.memory_space<vmem>>, vector<1x1x1x8xf32>
    %94 = vector.shape_cast %93 : vector<1x1x1x8xf32> to vector<1x8xf32>
    %95 = vector.broadcast %94 : vector<1x8xf32> to vector<8x8xf32>
    %96 = arith.addf %92, %95 : vector<8x8xf32>
    %cst_73 = arith.constant 0.353553385 : f32
    %97 = vector.broadcast %cst_73 : f32 to vector<8x8xf32>
    %98 = arith.mulf %96, %97 : vector<8x8xf32>
    %99 = arith.truncf %30 : vector<16x32xf32> to vector<16x32xbf16>
    %cst_74 = arith.constant dense<0.000000e+00> : vector<16x8xf32>
    %100 = tpu.matmul %99, %86, %cst_74 {dimension_numbers = #tpu.dot_dimension_numbers<[1], [0], [0], [1], [0, 0, 1, 1], [], []>} : vector<16x32xbf16>, vector<32x8xbf16>, vector<16x8xf32> -> vector<16x8xf32>
    %c0_75 = arith.constant 0 : index
    %c1_76 = arith.constant 1 : index
    %c0_77 = arith.constant 0 : index
    %c0_78 = arith.constant 0 : index
    %101 = vector.load %arg9[%c0_75, %c1_76, %c0_77, %c0_78] : memref<1x4x1x8xf32, #tpu.memory_space<vmem>>, vector<1x1x1x8xf32>
    %102 = vector.shape_cast %101 : vector<1x1x1x8xf32> to vector<1x8xf32>
    %103 = vector.broadcast %102 : vector<1x8xf32> to vector<16x8xf32>
    %104 = arith.addf %100, %103 : vector<16x8xf32>
    %105 = arith.truncf %30 : vector<16x32xf32> to vector<16x32xbf16>
    %cst_79 = arith.constant dense<0.000000e+00> : vector<16x8xf32>
    %106 = tpu.matmul %105, %88, %cst_79 {dimension_numbers = #tpu.dot_dimension_numbers<[1], [0], [0], [1], [0, 0, 1, 1], [], []>} : vector<16x32xbf16>, vector<32x8xbf16>, vector<16x8xf32> -> vector<16x8xf32>
    %c0_80 = arith.constant 0 : index
    %c1_81 = arith.constant 1 : index
    %c0_82 = arith.constant 0 : index
    %c0_83 = arith.constant 0 : index
    %107 = vector.load %arg11[%c0_80, %c1_81, %c0_82, %c0_83] : memref<1x4x1x8xf32, #tpu.memory_space<vmem>>, vector<1x1x1x8xf32>
    %108 = vector.shape_cast %107 : vector<1x1x1x8xf32> to vector<1x8xf32>
    %109 = vector.broadcast %108 : vector<1x8xf32> to vector<16x8xf32>
    %110 = arith.addf %106, %109 : vector<16x8xf32>
    %111 = vector.shape_cast %98 : vector<8x8xf32> to vector<1x8x8xf32>
    %112 = vector.shape_cast %104 : vector<16x8xf32> to vector<1x16x8xf32>
    %113 = vector.shape_cast %110 : vector<16x8xf32> to vector<1x16x8xf32>
    %114 = arith.truncf %111 : vector<1x8x8xf32> to vector<1x8x8xbf16>
    %115 = arith.truncf %112 : vector<1x16x8xf32> to vector<1x16x8xbf16>
    "tpu.trace_start"() <{level = 10 : i32, message = "bqd,bkd->bqk"}> : () -> ()
    %cst_84 = arith.constant dense<0.000000e+00> : vector<1x8x16xf32>
    %116 = tpu.matmul %114, %115, %cst_84 {dimension_numbers = #tpu.dot_dimension_numbers<[2], [2], [1], [1], [0, 0, 0, 1, 1, 1], [0], [0]>} : vector<1x8x8xbf16>, vector<1x16x8xbf16>, vector<1x8x16xf32> -> vector<1x8x16xf32>
    "tpu.trace_stop"() : () -> ()
    %cst_85 = arith.constant dense<0xFF800000> : vector<1x8xf32>
    %117 = vector.multi_reduction <maximumf>, %116, %cst_85 [2] : vector<1x8x16xf32> to vector<1x8xf32>
    %118 = vector.shape_cast %117 : vector<1x8xf32> to vector<1x8x1xf32>
    %119 = vector.broadcast %118 : vector<1x8x1xf32> to vector<1x8x16xf32>
    %120 = arith.subf %116, %119 : vector<1x8x16xf32>
    %121 = math.exp %120 : vector<1x8x16xf32>
    %cst_86 = arith.constant dense<0.000000e+00> : vector<1x8xf32>
    %122 = vector.multi_reduction <add>, %121, %cst_86 [2] : vector<1x8x16xf32> to vector<1x8xf32>
    %123 = vector.shape_cast %122 : vector<1x8xf32> to vector<1x8x1xf32>
    %124 = tpu.reciprocal %123 {approx = true} : vector<1x8x1xf32> -> vector<1x8x1xf32>
    %125 = vector.broadcast %124 : vector<1x8x1xf32> to vector<1x8x16xf32>
    %126 = arith.mulf %121, %125 : vector<1x8x16xf32>
    %127 = arith.truncf %126 : vector<1x8x16xf32> to vector<1x8x16xbf16>
    %128 = arith.truncf %113 : vector<1x16x8xf32> to vector<1x16x8xbf16>
    "tpu.trace_start"() <{level = 10 : i32, message = "bqk,bkd->bqd"}> : () -> ()
    %cst_87 = arith.constant dense<0.000000e+00> : vector<1x8x8xf32>
    %129 = tpu.matmul %127, %128, %cst_87 {dimension_numbers = #tpu.dot_dimension_numbers<[2], [1], [1], [2], [0, 0, 0, 1, 1, 2], [0], [0]>} : vector<1x8x16xbf16>, vector<1x16x8xbf16>, vector<1x8x8xf32> -> vector<1x8x8xf32>
    "tpu.trace_stop"() : () -> ()
    %130 = vector.shape_cast %129 : vector<1x8x8xf32> to vector<8x8xf32>
    %131 = arith.truncf %130 : vector<8x8xf32> to vector<8x8xbf16>
    %cst_88 = arith.constant dense<0.000000e+00> : vector<8x32xf32>
    %132 = tpu.matmul %131, %90, %cst_88 {dimension_numbers = #tpu.dot_dimension_numbers<[1], [0], [0], [1], [0, 0, 1, 1], [], []>} : vector<8x8xbf16>, vector<8x32xbf16>, vector<8x32xf32> -> vector<8x32xf32>
    %133 = arith.addf %82, %132 : vector<8x32xf32>
    %c0_89 = arith.constant 0 : index
    %c2 = arith.constant 2 : index
    %c0_90 = arith.constant 0 : index
    %c0_91 = arith.constant 0 : index
    %134 = vector.load %arg6[%c0_89, %c2, %c0_90, %c0_91] : memref<1x4x32x8xbf16, #tpu.memory_space<vmem>>, vector<1x1x32x8xbf16>
    %135 = vector.shape_cast %134 : vector<1x1x32x8xbf16> to vector<32x8xbf16>
    %c0_92 = arith.constant 0 : index
    %c2_93 = arith.constant 2 : index
    %c0_94 = arith.constant 0 : index
    %c0_95 = arith.constant 0 : index
    %136 = vector.load %arg8[%c0_92, %c2_93, %c0_94, %c0_95] : memref<1x4x32x8xbf16, #tpu.memory_space<vmem>>, vector<1x1x32x8xbf16>
    %137 = vector.shape_cast %136 : vector<1x1x32x8xbf16> to vector<32x8xbf16>
    %c0_96 = arith.constant 0 : index
    %c2_97 = arith.constant 2 : index
    %c0_98 = arith.constant 0 : index
    %c0_99 = arith.constant 0 : index
    %138 = vector.load %arg10[%c0_96, %c2_97, %c0_98, %c0_99] : memref<1x4x32x8xbf16, #tpu.memory_space<vmem>>, vector<1x1x32x8xbf16>
    %139 = vector.shape_cast %138 : vector<1x1x32x8xbf16> to vector<32x8xbf16>
    %c0_100 = arith.constant 0 : index
    %c2_101 = arith.constant 2 : index
    %c0_102 = arith.constant 0 : index
    %c0_103 = arith.constant 0 : index
    %140 = vector.load %arg12[%c0_100, %c2_101, %c0_102, %c0_103] : memref<1x4x8x32xbf16, #tpu.memory_space<vmem>>, vector<1x1x8x32xbf16>
    %141 = vector.shape_cast %140 : vector<1x1x8x32xbf16> to vector<8x32xbf16>
    %142 = arith.truncf %32 : vector<8x32xf32> to vector<8x32xbf16>
    %cst_104 = arith.constant dense<0.000000e+00> : vector<8x8xf32>
    %143 = tpu.matmul %142, %135, %cst_104 {dimension_numbers = #tpu.dot_dimension_numbers<[1], [0], [0], [1], [0, 0, 1, 1], [], []>} : vector<8x32xbf16>, vector<32x8xbf16>, vector<8x8xf32> -> vector<8x8xf32>
    %c0_105 = arith.constant 0 : index
    %c2_106 = arith.constant 2 : index
    %c0_107 = arith.constant 0 : index
    %c0_108 = arith.constant 0 : index
    %144 = vector.load %arg7[%c0_105, %c2_106, %c0_107, %c0_108] : memref<1x4x1x8xf32, #tpu.memory_space<vmem>>, vector<1x1x1x8xf32>
    %145 = vector.shape_cast %144 : vector<1x1x1x8xf32> to vector<1x8xf32>
    %146 = vector.broadcast %145 : vector<1x8xf32> to vector<8x8xf32>
    %147 = arith.addf %143, %146 : vector<8x8xf32>
    %cst_109 = arith.constant 0.353553385 : f32
    %148 = vector.broadcast %cst_109 : f32 to vector<8x8xf32>
    %149 = arith.mulf %147, %148 : vector<8x8xf32>
    %150 = arith.truncf %30 : vector<16x32xf32> to vector<16x32xbf16>
    %cst_110 = arith.constant dense<0.000000e+00> : vector<16x8xf32>
    %151 = tpu.matmul %150, %137, %cst_110 {dimension_numbers = #tpu.dot_dimension_numbers<[1], [0], [0], [1], [0, 0, 1, 1], [], []>} : vector<16x32xbf16>, vector<32x8xbf16>, vector<16x8xf32> -> vector<16x8xf32>
    %c0_111 = arith.constant 0 : index
    %c2_112 = arith.constant 2 : index
    %c0_113 = arith.constant 0 : index
    %c0_114 = arith.constant 0 : index
    %152 = vector.load %arg9[%c0_111, %c2_112, %c0_113, %c0_114] : memref<1x4x1x8xf32, #tpu.memory_space<vmem>>, vector<1x1x1x8xf32>
    %153 = vector.shape_cast %152 : vector<1x1x1x8xf32> to vector<1x8xf32>
    %154 = vector.broadcast %153 : vector<1x8xf32> to vector<16x8xf32>
    %155 = arith.addf %151, %154 : vector<16x8xf32>
    %156 = arith.truncf %30 : vector<16x32xf32> to vector<16x32xbf16>
    %cst_115 = arith.constant dense<0.000000e+00> : vector<16x8xf32>
    %157 = tpu.matmul %156, %139, %cst_115 {dimension_numbers = #tpu.dot_dimension_numbers<[1], [0], [0], [1], [0, 0, 1, 1], [], []>} : vector<16x32xbf16>, vector<32x8xbf16>, vector<16x8xf32> -> vector<16x8xf32>
    %c0_116 = arith.constant 0 : index
    %c2_117 = arith.constant 2 : index
    %c0_118 = arith.constant 0 : index
    %c0_119 = arith.constant 0 : index
    %158 = vector.load %arg11[%c0_116, %c2_117, %c0_118, %c0_119] : memref<1x4x1x8xf32, #tpu.memory_space<vmem>>, vector<1x1x1x8xf32>
    %159 = vector.shape_cast %158 : vector<1x1x1x8xf32> to vector<1x8xf32>
    %160 = vector.broadcast %159 : vector<1x8xf32> to vector<16x8xf32>
    %161 = arith.addf %157, %160 : vector<16x8xf32>
    %162 = vector.shape_cast %149 : vector<8x8xf32> to vector<1x8x8xf32>
    %163 = vector.shape_cast %155 : vector<16x8xf32> to vector<1x16x8xf32>
    %164 = vector.shape_cast %161 : vector<16x8xf32> to vector<1x16x8xf32>
    %165 = arith.truncf %162 : vector<1x8x8xf32> to vector<1x8x8xbf16>
    %166 = arith.truncf %163 : vector<1x16x8xf32> to vector<1x16x8xbf16>
    "tpu.trace_start"() <{level = 10 : i32, message = "bqd,bkd->bqk"}> : () -> ()
    %cst_120 = arith.constant dense<0.000000e+00> : vector<1x8x16xf32>
    %167 = tpu.matmul %165, %166, %cst_120 {dimension_numbers = #tpu.dot_dimension_numbers<[2], [2], [1], [1], [0, 0, 0, 1, 1, 1], [0], [0]>} : vector<1x8x8xbf16>, vector<1x16x8xbf16>, vector<1x8x16xf32> -> vector<1x8x16xf32>
    "tpu.trace_stop"() : () -> ()
    %cst_121 = arith.constant dense<0xFF800000> : vector<1x8xf32>
    %168 = vector.multi_reduction <maximumf>, %167, %cst_121 [2] : vector<1x8x16xf32> to vector<1x8xf32>
    %169 = vector.shape_cast %168 : vector<1x8xf32> to vector<1x8x1xf32>
    %170 = vector.broadcast %169 : vector<1x8x1xf32> to vector<1x8x16xf32>
    %171 = arith.subf %167, %170 : vector<1x8x16xf32>
    %172 = math.exp %171 : vector<1x8x16xf32>
    %cst_122 = arith.constant dense<0.000000e+00> : vector<1x8xf32>
    %173 = vector.multi_reduction <add>, %172, %cst_122 [2] : vector<1x8x16xf32> to vector<1x8xf32>
    %174 = vector.shape_cast %173 : vector<1x8xf32> to vector<1x8x1xf32>
    %175 = tpu.reciprocal %174 {approx = true} : vector<1x8x1xf32> -> vector<1x8x1xf32>
    %176 = vector.broadcast %175 : vector<1x8x1xf32> to vector<1x8x16xf32>
    %177 = arith.mulf %172, %176 : vector<1x8x16xf32>
    %178 = arith.truncf %177 : vector<1x8x16xf32> to vector<1x8x16xbf16>
    %179 = arith.truncf %164 : vector<1x16x8xf32> to vector<1x16x8xbf16>
    "tpu.trace_start"() <{level = 10 : i32, message = "bqk,bkd->bqd"}> : () -> ()
    %cst_123 = arith.constant dense<0.000000e+00> : vector<1x8x8xf32>
    %180 = tpu.matmul %178, %179, %cst_123 {dimension_numbers = #tpu.dot_dimension_numbers<[2], [1], [1], [2], [0, 0, 0, 1, 1, 2], [0], [0]>} : vector<1x8x16xbf16>, vector<1x16x8xbf16>, vector<1x8x8xf32> -> vector<1x8x8xf32>
    "tpu.trace_stop"() : () -> ()
    %181 = vector.shape_cast %180 : vector<1x8x8xf32> to vector<8x8xf32>
    %182 = arith.truncf %181 : vector<8x8xf32> to vector<8x8xbf16>
    %cst_124 = arith.constant dense<0.000000e+00> : vector<8x32xf32>
    %183 = tpu.matmul %182, %141, %cst_124 {dimension_numbers = #tpu.dot_dimension_numbers<[1], [0], [0], [1], [0, 0, 1, 1], [], []>} : vector<8x8xbf16>, vector<8x32xbf16>, vector<8x32xf32> -> vector<8x32xf32>
    %184 = arith.addf %133, %183 : vector<8x32xf32>
    %c0_125 = arith.constant 0 : index
    %c3 = arith.constant 3 : index
    %c0_126 = arith.constant 0 : index
    %c0_127 = arith.constant 0 : index
    %185 = vector.load %arg6[%c0_125, %c3, %c0_126, %c0_127] : memref<1x4x32x8xbf16, #tpu.memory_space<vmem>>, vector<1x1x32x8xbf16>
    %186 = vector.shape_cast %185 : vector<1x1x32x8xbf16> to vector<32x8xbf16>
    %c0_128 = arith.constant 0 : index
    %c3_129 = arith.constant 3 : index
    %c0_130 = arith.constant 0 : index
    %c0_131 = arith.constant 0 : index
    %187 = vector.load %arg8[%c0_128, %c3_129, %c0_130, %c0_131] : memref<1x4x32x8xbf16, #tpu.memory_space<vmem>>, vector<1x1x32x8xbf16>
    %188 = vector.shape_cast %187 : vector<1x1x32x8xbf16> to vector<32x8xbf16>
    %c0_132 = arith.constant 0 : index
    %c3_133 = arith.constant 3 : index
    %c0_134 = arith.constant 0 : index
    %c0_135 = arith.constant 0 : index
    %189 = vector.load %arg10[%c0_132, %c3_133, %c0_134, %c0_135] : memref<1x4x32x8xbf16, #tpu.memory_space<vmem>>, vector<1x1x32x8xbf16>
    %190 = vector.shape_cast %189 : vector<1x1x32x8xbf16> to vector<32x8xbf16>
    %c0_136 = arith.constant 0 : index
    %c3_137 = arith.constant 3 : index
    %c0_138 = arith.constant 0 : index
    %c0_139 = arith.constant 0 : index
    %191 = vector.load %arg12[%c0_136, %c3_137, %c0_138, %c0_139] : memref<1x4x8x32xbf16, #tpu.memory_space<vmem>>, vector<1x1x8x32xbf16>
    %192 = vector.shape_cast %191 : vector<1x1x8x32xbf16> to vector<8x32xbf16>
    %193 = arith.truncf %32 : vector<8x32xf32> to vector<8x32xbf16>
    %cst_140 = arith.constant dense<0.000000e+00> : vector<8x8xf32>
    %194 = tpu.matmul %193, %186, %cst_140 {dimension_numbers = #tpu.dot_dimension_numbers<[1], [0], [0], [1], [0, 0, 1, 1], [], []>} : vector<8x32xbf16>, vector<32x8xbf16>, vector<8x8xf32> -> vector<8x8xf32>
    %c0_141 = arith.constant 0 : index
    %c3_142 = arith.constant 3 : index
    %c0_143 = arith.constant 0 : index
    %c0_144 = arith.constant 0 : index
    %195 = vector.load %arg7[%c0_141, %c3_142, %c0_143, %c0_144] : memref<1x4x1x8xf32, #tpu.memory_space<vmem>>, vector<1x1x1x8xf32>
    %196 = vector.shape_cast %195 : vector<1x1x1x8xf32> to vector<1x8xf32>
    %197 = vector.broadcast %196 : vector<1x8xf32> to vector<8x8xf32>
    %198 = arith.addf %194, %197 : vector<8x8xf32>
    %cst_145 = arith.constant 0.353553385 : f32
    %199 = vector.broadcast %cst_145 : f32 to vector<8x8xf32>
    %200 = arith.mulf %198, %199 : vector<8x8xf32>
    %201 = arith.truncf %30 : vector<16x32xf32> to vector<16x32xbf16>
    %cst_146 = arith.constant dense<0.000000e+00> : vector<16x8xf32>
    %202 = tpu.matmul %201, %188, %cst_146 {dimension_numbers = #tpu.dot_dimension_numbers<[1], [0], [0], [1], [0, 0, 1, 1], [], []>} : vector<16x32xbf16>, vector<32x8xbf16>, vector<16x8xf32> -> vector<16x8xf32>
    %c0_147 = arith.constant 0 : index
    %c3_148 = arith.constant 3 : index
    %c0_149 = arith.constant 0 : index
    %c0_150 = arith.constant 0 : index
    %203 = vector.load %arg9[%c0_147, %c3_148, %c0_149, %c0_150] : memref<1x4x1x8xf32, #tpu.memory_space<vmem>>, vector<1x1x1x8xf32>
    %204 = vector.shape_cast %203 : vector<1x1x1x8xf32> to vector<1x8xf32>
    %205 = vector.broadcast %204 : vector<1x8xf32> to vector<16x8xf32>
    %206 = arith.addf %202, %205 : vector<16x8xf32>
    %207 = arith.truncf %30 : vector<16x32xf32> to vector<16x32xbf16>
    %cst_151 = arith.constant dense<0.000000e+00> : vector<16x8xf32>
    %208 = tpu.matmul %207, %190, %cst_151 {dimension_numbers = #tpu.dot_dimension_numbers<[1], [0], [0], [1], [0, 0, 1, 1], [], []>} : vector<16x32xbf16>, vector<32x8xbf16>, vector<16x8xf32> -> vector<16x8xf32>
    %c0_152 = arith.constant 0 : index
    %c3_153 = arith.constant 3 : index
    %c0_154 = arith.constant 0 : index
    %c0_155 = arith.constant 0 : index
    %209 = vector.load %arg11[%c0_152, %c3_153, %c0_154, %c0_155] : memref<1x4x1x8xf32, #tpu.memory_space<vmem>>, vector<1x1x1x8xf32>
    %210 = vector.shape_cast %209 : vector<1x1x1x8xf32> to vector<1x8xf32>
    %211 = vector.broadcast %210 : vector<1x8xf32> to vector<16x8xf32>
    %212 = arith.addf %208, %211 : vector<16x8xf32>
    %213 = vector.shape_cast %200 : vector<8x8xf32> to vector<1x8x8xf32>
    %214 = vector.shape_cast %206 : vector<16x8xf32> to vector<1x16x8xf32>
    %215 = vector.shape_cast %212 : vector<16x8xf32> to vector<1x16x8xf32>
    %216 = arith.truncf %213 : vector<1x8x8xf32> to vector<1x8x8xbf16>
    %217 = arith.truncf %214 : vector<1x16x8xf32> to vector<1x16x8xbf16>
    "tpu.trace_start"() <{level = 10 : i32, message = "bqd,bkd->bqk"}> : () -> ()
    %cst_156 = arith.constant dense<0.000000e+00> : vector<1x8x16xf32>
    %218 = tpu.matmul %216, %217, %cst_156 {dimension_numbers = #tpu.dot_dimension_numbers<[2], [2], [1], [1], [0, 0, 0, 1, 1, 1], [0], [0]>} : vector<1x8x8xbf16>, vector<1x16x8xbf16>, vector<1x8x16xf32> -> vector<1x8x16xf32>
    "tpu.trace_stop"() : () -> ()
    %cst_157 = arith.constant dense<0xFF800000> : vector<1x8xf32>
    %219 = vector.multi_reduction <maximumf>, %218, %cst_157 [2] : vector<1x8x16xf32> to vector<1x8xf32>
    %220 = vector.shape_cast %219 : vector<1x8xf32> to vector<1x8x1xf32>
    %221 = vector.broadcast %220 : vector<1x8x1xf32> to vector<1x8x16xf32>
    %222 = arith.subf %218, %221 : vector<1x8x16xf32>
    %223 = math.exp %222 : vector<1x8x16xf32>
    %cst_158 = arith.constant dense<0.000000e+00> : vector<1x8xf32>
    %224 = vector.multi_reduction <add>, %223, %cst_158 [2] : vector<1x8x16xf32> to vector<1x8xf32>
    %225 = vector.shape_cast %224 : vector<1x8xf32> to vector<1x8x1xf32>
    %226 = tpu.reciprocal %225 {approx = true} : vector<1x8x1xf32> -> vector<1x8x1xf32>
    %227 = vector.broadcast %226 : vector<1x8x1xf32> to vector<1x8x16xf32>
    %228 = arith.mulf %223, %227 : vector<1x8x16xf32>
    %229 = arith.truncf %228 : vector<1x8x16xf32> to vector<1x8x16xbf16>
    %230 = arith.truncf %215 : vector<1x16x8xf32> to vector<1x16x8xbf16>
    "tpu.trace_start"() <{level = 10 : i32, message = "bqk,bkd->bqd"}> : () -> ()
    %cst_159 = arith.constant dense<0.000000e+00> : vector<1x8x8xf32>
    %231 = tpu.matmul %229, %230, %cst_159 {dimension_numbers = #tpu.dot_dimension_numbers<[2], [1], [1], [2], [0, 0, 0, 1, 1, 2], [0], [0]>} : vector<1x8x16xbf16>, vector<1x16x8xbf16>, vector<1x8x8xf32> -> vector<1x8x8xf32>
    "tpu.trace_stop"() : () -> ()
    %232 = vector.shape_cast %231 : vector<1x8x8xf32> to vector<8x8xf32>
    %233 = arith.truncf %232 : vector<8x8xf32> to vector<8x8xbf16>
    %cst_160 = arith.constant dense<0.000000e+00> : vector<8x32xf32>
    %234 = tpu.matmul %233, %192, %cst_160 {dimension_numbers = #tpu.dot_dimension_numbers<[1], [0], [0], [1], [0, 0, 1, 1], [], []>} : vector<8x8xbf16>, vector<8x32xbf16>, vector<8x32xf32> -> vector<8x32xf32>
    %235 = arith.addf %184, %234 : vector<8x32xf32>
    %c0_161 = arith.constant 0 : index
    %c0_162 = arith.constant 0 : index
    %c0_163 = arith.constant 0 : index
    %236 = vector.load %arg13[%c0_161, %c0_162, %c0_163] : memref<1x1x32xf32, #tpu.memory_space<vmem>>, vector<1x1x32xf32>
    %237 = vector.shape_cast %236 : vector<1x1x32xf32> to vector<1x32xf32>
    %238 = vector.broadcast %237 : vector<1x32xf32> to vector<8x32xf32>
    %239 = arith.addf %235, %238 : vector<8x32xf32>
    %c0_164 = arith.constant 0 : index
    %c0_165 = arith.constant 0 : index
    %c0_166 = arith.constant 0 : index
    %c0_167 = arith.constant 0 : index
    %240 = vector.load %arg14[%c0_164, %c0_165, %c0_166, %c0_167] : memref<1x4x32x8xbf16, #tpu.memory_space<vmem>>, vector<1x1x32x8xbf16>
    %241 = vector.shape_cast %240 : vector<1x1x32x8xbf16> to vector<32x8xbf16>
    %c0_168 = arith.constant 0 : index
    %c0_169 = arith.constant 0 : index
    %c0_170 = arith.constant 0 : index
    %c0_171 = arith.constant 0 : index
    %242 = vector.load %arg16[%c0_168, %c0_169, %c0_170, %c0_171] : memref<1x4x32x8xbf16, #tpu.memory_space<vmem>>, vector<1x1x32x8xbf16>
    %243 = vector.shape_cast %242 : vector<1x1x32x8xbf16> to vector<32x8xbf16>
    %c0_172 = arith.constant 0 : index
    %c0_173 = arith.constant 0 : index
    %c0_174 = arith.constant 0 : index
    %c0_175 = arith.constant 0 : index
    %244 = vector.load %arg18[%c0_172, %c0_173, %c0_174, %c0_175] : memref<1x4x32x8xbf16, #tpu.memory_space<vmem>>, vector<1x1x32x8xbf16>
    %245 = vector.shape_cast %244 : vector<1x1x32x8xbf16> to vector<32x8xbf16>
    %c0_176 = arith.constant 0 : index
    %c0_177 = arith.constant 0 : index
    %c0_178 = arith.constant 0 : index
    %c0_179 = arith.constant 0 : index
    %246 = vector.load %arg20[%c0_176, %c0_177, %c0_178, %c0_179] : memref<1x4x8x32xbf16, #tpu.memory_space<vmem>>, vector<1x1x8x32xbf16>
    %247 = vector.shape_cast %246 : vector<1x1x8x32xbf16> to vector<8x32xbf16>
    %248 = arith.truncf %30 : vector<16x32xf32> to vector<16x32xbf16>
    %cst_180 = arith.constant dense<0.000000e+00> : vector<16x8xf32>
    %249 = tpu.matmul %248, %241, %cst_180 {dimension_numbers = #tpu.dot_dimension_numbers<[1], [0], [0], [1], [0, 0, 1, 1], [], []>} : vector<16x32xbf16>, vector<32x8xbf16>, vector<16x8xf32> -> vector<16x8xf32>
    %c0_181 = arith.constant 0 : index
    %c0_182 = arith.constant 0 : index
    %c0_183 = arith.constant 0 : index
    %c0_184 = arith.constant 0 : index
    %250 = vector.load %arg15[%c0_181, %c0_182, %c0_183, %c0_184] : memref<1x4x1x8xf32, #tpu.memory_space<vmem>>, vector<1x1x1x8xf32>
    %251 = vector.shape_cast %250 : vector<1x1x1x8xf32> to vector<1x8xf32>
    %252 = vector.broadcast %251 : vector<1x8xf32> to vector<16x8xf32>
    %253 = arith.addf %249, %252 : vector<16x8xf32>
    %cst_185 = arith.constant 0.353553385 : f32
    %254 = vector.broadcast %cst_185 : f32 to vector<16x8xf32>
    %255 = arith.mulf %253, %254 : vector<16x8xf32>
    %256 = arith.truncf %239 : vector<8x32xf32> to vector<8x32xbf16>
    %cst_186 = arith.constant dense<0.000000e+00> : vector<8x8xf32>
    %257 = tpu.matmul %256, %243, %cst_186 {dimension_numbers = #tpu.dot_dimension_numbers<[1], [0], [0], [1], [0, 0, 1, 1], [], []>} : vector<8x32xbf16>, vector<32x8xbf16>, vector<8x8xf32> -> vector<8x8xf32>
    %c0_187 = arith.constant 0 : index
    %c0_188 = arith.constant 0 : index
    %c0_189 = arith.constant 0 : index
    %c0_190 = arith.constant 0 : index
    %258 = vector.load %arg17[%c0_187, %c0_188, %c0_189, %c0_190] : memref<1x4x1x8xf32, #tpu.memory_space<vmem>>, vector<1x1x1x8xf32>
    %259 = vector.shape_cast %258 : vector<1x1x1x8xf32> to vector<1x8xf32>
    %260 = vector.broadcast %259 : vector<1x8xf32> to vector<8x8xf32>
    %261 = arith.addf %257, %260 : vector<8x8xf32>
    %262 = arith.truncf %239 : vector<8x32xf32> to vector<8x32xbf16>
    %cst_191 = arith.constant dense<0.000000e+00> : vector<8x8xf32>
    %263 = tpu.matmul %262, %245, %cst_191 {dimension_numbers = #tpu.dot_dimension_numbers<[1], [0], [0], [1], [0, 0, 1, 1], [], []>} : vector<8x32xbf16>, vector<32x8xbf16>, vector<8x8xf32> -> vector<8x8xf32>
    %c0_192 = arith.constant 0 : index
    %c0_193 = arith.constant 0 : index
    %c0_194 = arith.constant 0 : index
    %c0_195 = arith.constant 0 : index
    %264 = vector.load %arg19[%c0_192, %c0_193, %c0_194, %c0_195] : memref<1x4x1x8xf32, #tpu.memory_space<vmem>>, vector<1x1x1x8xf32>
    %265 = vector.shape_cast %264 : vector<1x1x1x8xf32> to vector<1x8xf32>
    %266 = vector.broadcast %265 : vector<1x8xf32> to vector<8x8xf32>
    %267 = arith.addf %263, %266 : vector<8x8xf32>
    %268 = vector.shape_cast %255 : vector<16x8xf32> to vector<1x16x8xf32>
    %269 = vector.shape_cast %261 : vector<8x8xf32> to vector<1x8x8xf32>
    %270 = vector.shape_cast %267 : vector<8x8xf32> to vector<1x8x8xf32>
    %271 = arith.truncf %268 : vector<1x16x8xf32> to vector<1x16x8xbf16>
    %272 = arith.truncf %269 : vector<1x8x8xf32> to vector<1x8x8xbf16>
    "tpu.trace_start"() <{level = 10 : i32, message = "bqd,bkd->bqk"}> : () -> ()
    %cst_196 = arith.constant dense<0.000000e+00> : vector<1x16x8xf32>
    %273 = tpu.matmul %271, %272, %cst_196 {dimension_numbers = #tpu.dot_dimension_numbers<[2], [2], [1], [1], [0, 0, 0, 1, 1, 1], [0], [0]>} : vector<1x16x8xbf16>, vector<1x8x8xbf16>, vector<1x16x8xf32> -> vector<1x16x8xf32>
    "tpu.trace_stop"() : () -> ()
    %cst_197 = arith.constant dense<0xFF800000> : vector<1x16xf32>
    %274 = vector.multi_reduction <maximumf>, %273, %cst_197 [2] : vector<1x16x8xf32> to vector<1x16xf32>
    %275 = vector.shape_cast %274 : vector<1x16xf32> to vector<1x16x1xf32>
    %276 = vector.broadcast %275 : vector<1x16x1xf32> to vector<1x16x8xf32>
    %277 = arith.subf %273, %276 : vector<1x16x8xf32>
    %278 = math.exp %277 : vector<1x16x8xf32>
    %cst_198 = arith.constant dense<0.000000e+00> : vector<1x16xf32>
    %279 = vector.multi_reduction <add>, %278, %cst_198 [2] : vector<1x16x8xf32> to vector<1x16xf32>
    %280 = vector.shape_cast %279 : vector<1x16xf32> to vector<1x16x1xf32>
    %281 = tpu.reciprocal %280 {approx = true} : vector<1x16x1xf32> -> vector<1x16x1xf32>
    %282 = vector.broadcast %281 : vector<1x16x1xf32> to vector<1x16x8xf32>
    %283 = arith.mulf %278, %282 : vector<1x16x8xf32>
    %284 = arith.truncf %283 : vector<1x16x8xf32> to vector<1x16x8xbf16>
    %285 = arith.truncf %270 : vector<1x8x8xf32> to vector<1x8x8xbf16>
    "tpu.trace_start"() <{level = 10 : i32, message = "bqk,bkd->bqd"}> : () -> ()
    %cst_199 = arith.constant dense<0.000000e+00> : vector<1x16x8xf32>
    %286 = tpu.matmul %284, %285, %cst_199 {dimension_numbers = #tpu.dot_dimension_numbers<[2], [1], [1], [2], [0, 0, 0, 1, 1, 2], [0], [0]>} : vector<1x16x8xbf16>, vector<1x8x8xbf16>, vector<1x16x8xf32> -> vector<1x16x8xf32>
    "tpu.trace_stop"() : () -> ()
    %287 = vector.shape_cast %286 : vector<1x16x8xf32> to vector<16x8xf32>
    %288 = arith.truncf %287 : vector<16x8xf32> to vector<16x8xbf16>
    %cst_200 = arith.constant dense<0.000000e+00> : vector<16x32xf32>
    %289 = tpu.matmul %288, %247, %cst_200 {dimension_numbers = #tpu.dot_dimension_numbers<[1], [0], [0], [1], [0, 0, 1, 1], [], []>} : vector<16x8xbf16>, vector<8x32xbf16>, vector<16x32xf32> -> vector<16x32xf32>
    %c0_201 = arith.constant 0 : index
    %c1_202 = arith.constant 1 : index
    %c0_203 = arith.constant 0 : index
    %c0_204 = arith.constant 0 : index
    %290 = vector.load %arg14[%c0_201, %c1_202, %c0_203, %c0_204] : memref<1x4x32x8xbf16, #tpu.memory_space<vmem>>, vector<1x1x32x8xbf16>
    %291 = vector.shape_cast %290 : vector<1x1x32x8xbf16> to vector<32x8xbf16>
    %c0_205 = arith.constant 0 : index
    %c1_206 = arith.constant 1 : index
    %c0_207 = arith.constant 0 : index
    %c0_208 = arith.constant 0 : index
    %292 = vector.load %arg16[%c0_205, %c1_206, %c0_207, %c0_208] : memref<1x4x32x8xbf16, #tpu.memory_space<vmem>>, vector<1x1x32x8xbf16>
    %293 = vector.shape_cast %292 : vector<1x1x32x8xbf16> to vector<32x8xbf16>
    %c0_209 = arith.constant 0 : index
    %c1_210 = arith.constant 1 : index
    %c0_211 = arith.constant 0 : index
    %c0_212 = arith.constant 0 : index
    %294 = vector.load %arg18[%c0_209, %c1_210, %c0_211, %c0_212] : memref<1x4x32x8xbf16, #tpu.memory_space<vmem>>, vector<1x1x32x8xbf16>
    %295 = vector.shape_cast %294 : vector<1x1x32x8xbf16> to vector<32x8xbf16>
    %c0_213 = arith.constant 0 : index
    %c1_214 = arith.constant 1 : index
    %c0_215 = arith.constant 0 : index
    %c0_216 = arith.constant 0 : index
    %296 = vector.load %arg20[%c0_213, %c1_214, %c0_215, %c0_216] : memref<1x4x8x32xbf16, #tpu.memory_space<vmem>>, vector<1x1x8x32xbf16>
    %297 = vector.shape_cast %296 : vector<1x1x8x32xbf16> to vector<8x32xbf16>
    %298 = arith.truncf %30 : vector<16x32xf32> to vector<16x32xbf16>
    %cst_217 = arith.constant dense<0.000000e+00> : vector<16x8xf32>
    %299 = tpu.matmul %298, %291, %cst_217 {dimension_numbers = #tpu.dot_dimension_numbers<[1], [0], [0], [1], [0, 0, 1, 1], [], []>} : vector<16x32xbf16>, vector<32x8xbf16>, vector<16x8xf32> -> vector<16x8xf32>
    %c0_218 = arith.constant 0 : index
    %c1_219 = arith.constant 1 : index
    %c0_220 = arith.constant 0 : index
    %c0_221 = arith.constant 0 : index
    %300 = vector.load %arg15[%c0_218, %c1_219, %c0_220, %c0_221] : memref<1x4x1x8xf32, #tpu.memory_space<vmem>>, vector<1x1x1x8xf32>
    %301 = vector.shape_cast %300 : vector<1x1x1x8xf32> to vector<1x8xf32>
    %302 = vector.broadcast %301 : vector<1x8xf32> to vector<16x8xf32>
    %303 = arith.addf %299, %302 : vector<16x8xf32>
    %cst_222 = arith.constant 0.353553385 : f32
    %304 = vector.broadcast %cst_222 : f32 to vector<16x8xf32>
    %305 = arith.mulf %303, %304 : vector<16x8xf32>
    %306 = arith.truncf %239 : vector<8x32xf32> to vector<8x32xbf16>
    %cst_223 = arith.constant dense<0.000000e+00> : vector<8x8xf32>
    %307 = tpu.matmul %306, %293, %cst_223 {dimension_numbers = #tpu.dot_dimension_numbers<[1], [0], [0], [1], [0, 0, 1, 1], [], []>} : vector<8x32xbf16>, vector<32x8xbf16>, vector<8x8xf32> -> vector<8x8xf32>
    %c0_224 = arith.constant 0 : index
    %c1_225 = arith.constant 1 : index
    %c0_226 = arith.constant 0 : index
    %c0_227 = arith.constant 0 : index
    %308 = vector.load %arg17[%c0_224, %c1_225, %c0_226, %c0_227] : memref<1x4x1x8xf32, #tpu.memory_space<vmem>>, vector<1x1x1x8xf32>
    %309 = vector.shape_cast %308 : vector<1x1x1x8xf32> to vector<1x8xf32>
    %310 = vector.broadcast %309 : vector<1x8xf32> to vector<8x8xf32>
    %311 = arith.addf %307, %310 : vector<8x8xf32>
    %312 = arith.truncf %239 : vector<8x32xf32> to vector<8x32xbf16>
    %cst_228 = arith.constant dense<0.000000e+00> : vector<8x8xf32>
    %313 = tpu.matmul %312, %295, %cst_228 {dimension_numbers = #tpu.dot_dimension_numbers<[1], [0], [0], [1], [0, 0, 1, 1], [], []>} : vector<8x32xbf16>, vector<32x8xbf16>, vector<8x8xf32> -> vector<8x8xf32>
    %c0_229 = arith.constant 0 : index
    %c1_230 = arith.constant 1 : index
    %c0_231 = arith.constant 0 : index
    %c0_232 = arith.constant 0 : index
    %314 = vector.load %arg19[%c0_229, %c1_230, %c0_231, %c0_232] : memref<1x4x1x8xf32, #tpu.memory_space<vmem>>, vector<1x1x1x8xf32>
    %315 = vector.shape_cast %314 : vector<1x1x1x8xf32> to vector<1x8xf32>
    %316 = vector.broadcast %315 : vector<1x8xf32> to vector<8x8xf32>
    %317 = arith.addf %313, %316 : vector<8x8xf32>
    %318 = vector.shape_cast %305 : vector<16x8xf32> to vector<1x16x8xf32>
    %319 = vector.shape_cast %311 : vector<8x8xf32> to vector<1x8x8xf32>
    %320 = vector.shape_cast %317 : vector<8x8xf32> to vector<1x8x8xf32>
    %321 = arith.truncf %318 : vector<1x16x8xf32> to vector<1x16x8xbf16>
    %322 = arith.truncf %319 : vector<1x8x8xf32> to vector<1x8x8xbf16>
    "tpu.trace_start"() <{level = 10 : i32, message = "bqd,bkd->bqk"}> : () -> ()
    %cst_233 = arith.constant dense<0.000000e+00> : vector<1x16x8xf32>
    %323 = tpu.matmul %321, %322, %cst_233 {dimension_numbers = #tpu.dot_dimension_numbers<[2], [2], [1], [1], [0, 0, 0, 1, 1, 1], [0], [0]>} : vector<1x16x8xbf16>, vector<1x8x8xbf16>, vector<1x16x8xf32> -> vector<1x16x8xf32>
    "tpu.trace_stop"() : () -> ()
    %cst_234 = arith.constant dense<0xFF800000> : vector<1x16xf32>
    %324 = vector.multi_reduction <maximumf>, %323, %cst_234 [2] : vector<1x16x8xf32> to vector<1x16xf32>
    %325 = vector.shape_cast %324 : vector<1x16xf32> to vector<1x16x1xf32>
    %326 = vector.broadcast %325 : vector<1x16x1xf32> to vector<1x16x8xf32>
    %327 = arith.subf %323, %326 : vector<1x16x8xf32>
    %328 = math.exp %327 : vector<1x16x8xf32>
    %cst_235 = arith.constant dense<0.000000e+00> : vector<1x16xf32>
    %329 = vector.multi_reduction <add>, %328, %cst_235 [2] : vector<1x16x8xf32> to vector<1x16xf32>
    %330 = vector.shape_cast %329 : vector<1x16xf32> to vector<1x16x1xf32>
    %331 = tpu.reciprocal %330 {approx = true} : vector<1x16x1xf32> -> vector<1x16x1xf32>
    %332 = vector.broadcast %331 : vector<1x16x1xf32> to vector<1x16x8xf32>
    %333 = arith.mulf %328, %332 : vector<1x16x8xf32>
    %334 = arith.truncf %333 : vector<1x16x8xf32> to vector<1x16x8xbf16>
    %335 = arith.truncf %320 : vector<1x8x8xf32> to vector<1x8x8xbf16>
    "tpu.trace_start"() <{level = 10 : i32, message = "bqk,bkd->bqd"}> : () -> ()
    %cst_236 = arith.constant dense<0.000000e+00> : vector<1x16x8xf32>
    %336 = tpu.matmul %334, %335, %cst_236 {dimension_numbers = #tpu.dot_dimension_numbers<[2], [1], [1], [2], [0, 0, 0, 1, 1, 2], [0], [0]>} : vector<1x16x8xbf16>, vector<1x8x8xbf16>, vector<1x16x8xf32> -> vector<1x16x8xf32>
    "tpu.trace_stop"() : () -> ()
    %337 = vector.shape_cast %336 : vector<1x16x8xf32> to vector<16x8xf32>
    %338 = arith.truncf %337 : vector<16x8xf32> to vector<16x8xbf16>
    %cst_237 = arith.constant dense<0.000000e+00> : vector<16x32xf32>
    %339 = tpu.matmul %338, %297, %cst_237 {dimension_numbers = #tpu.dot_dimension_numbers<[1], [0], [0], [1], [0, 0, 1, 1], [], []>} : vector<16x8xbf16>, vector<8x32xbf16>, vector<16x32xf32> -> vector<16x32xf32>
    %340 = arith.addf %289, %339 : vector<16x32xf32>
    %c0_238 = arith.constant 0 : index
    %c2_239 = arith.constant 2 : index
    %c0_240 = arith.constant 0 : index
    %c0_241 = arith.constant 0 : index
    %341 = vector.load %arg14[%c0_238, %c2_239, %c0_240, %c0_241] : memref<1x4x32x8xbf16, #tpu.memory_space<vmem>>, vector<1x1x32x8xbf16>
    %342 = vector.shape_cast %341 : vector<1x1x32x8xbf16> to vector<32x8xbf16>
    %c0_242 = arith.constant 0 : index
    %c2_243 = arith.constant 2 : index
    %c0_244 = arith.constant 0 : index
    %c0_245 = arith.constant 0 : index
    %343 = vector.load %arg16[%c0_242, %c2_243, %c0_244, %c0_245] : memref<1x4x32x8xbf16, #tpu.memory_space<vmem>>, vector<1x1x32x8xbf16>
    %344 = vector.shape_cast %343 : vector<1x1x32x8xbf16> to vector<32x8xbf16>
    %c0_246 = arith.constant 0 : index
    %c2_247 = arith.constant 2 : index
    %c0_248 = arith.constant 0 : index
    %c0_249 = arith.constant 0 : index
    %345 = vector.load %arg18[%c0_246, %c2_247, %c0_248, %c0_249] : memref<1x4x32x8xbf16, #tpu.memory_space<vmem>>, vector<1x1x32x8xbf16>
    %346 = vector.shape_cast %345 : vector<1x1x32x8xbf16> to vector<32x8xbf16>
    %c0_250 = arith.constant 0 : index
    %c2_251 = arith.constant 2 : index
    %c0_252 = arith.constant 0 : index
    %c0_253 = arith.constant 0 : index
    %347 = vector.load %arg20[%c0_250, %c2_251, %c0_252, %c0_253] : memref<1x4x8x32xbf16, #tpu.memory_space<vmem>>, vector<1x1x8x32xbf16>
    %348 = vector.shape_cast %347 : vector<1x1x8x32xbf16> to vector<8x32xbf16>
    %349 = arith.truncf %30 : vector<16x32xf32> to vector<16x32xbf16>
    %cst_254 = arith.constant dense<0.000000e+00> : vector<16x8xf32>
    %350 = tpu.matmul %349, %342, %cst_254 {dimension_numbers = #tpu.dot_dimension_numbers<[1], [0], [0], [1], [0, 0, 1, 1], [], []>} : vector<16x32xbf16>, vector<32x8xbf16>, vector<16x8xf32> -> vector<16x8xf32>
    %c0_255 = arith.constant 0 : index
    %c2_256 = arith.constant 2 : index
    %c0_257 = arith.constant 0 : index
    %c0_258 = arith.constant 0 : index
    %351 = vector.load %arg15[%c0_255, %c2_256, %c0_257, %c0_258] : memref<1x4x1x8xf32, #tpu.memory_space<vmem>>, vector<1x1x1x8xf32>
    %352 = vector.shape_cast %351 : vector<1x1x1x8xf32> to vector<1x8xf32>
    %353 = vector.broadcast %352 : vector<1x8xf32> to vector<16x8xf32>
    %354 = arith.addf %350, %353 : vector<16x8xf32>
    %cst_259 = arith.constant 0.353553385 : f32
    %355 = vector.broadcast %cst_259 : f32 to vector<16x8xf32>
    %356 = arith.mulf %354, %355 : vector<16x8xf32>
    %357 = arith.truncf %239 : vector<8x32xf32> to vector<8x32xbf16>
    %cst_260 = arith.constant dense<0.000000e+00> : vector<8x8xf32>
    %358 = tpu.matmul %357, %344, %cst_260 {dimension_numbers = #tpu.dot_dimension_numbers<[1], [0], [0], [1], [0, 0, 1, 1], [], []>} : vector<8x32xbf16>, vector<32x8xbf16>, vector<8x8xf32> -> vector<8x8xf32>
    %c0_261 = arith.constant 0 : index
    %c2_262 = arith.constant 2 : index
    %c0_263 = arith.constant 0 : index
    %c0_264 = arith.constant 0 : index
    %359 = vector.load %arg17[%c0_261, %c2_262, %c0_263, %c0_264] : memref<1x4x1x8xf32, #tpu.memory_space<vmem>>, vector<1x1x1x8xf32>
    %360 = vector.shape_cast %359 : vector<1x1x1x8xf32> to vector<1x8xf32>
    %361 = vector.broadcast %360 : vector<1x8xf32> to vector<8x8xf32>
    %362 = arith.addf %358, %361 : vector<8x8xf32>
    %363 = arith.truncf %239 : vector<8x32xf32> to vector<8x32xbf16>
    %cst_265 = arith.constant dense<0.000000e+00> : vector<8x8xf32>
    %364 = tpu.matmul %363, %346, %cst_265 {dimension_numbers = #tpu.dot_dimension_numbers<[1], [0], [0], [1], [0, 0, 1, 1], [], []>} : vector<8x32xbf16>, vector<32x8xbf16>, vector<8x8xf32> -> vector<8x8xf32>
    %c0_266 = arith.constant 0 : index
    %c2_267 = arith.constant 2 : index
    %c0_268 = arith.constant 0 : index
    %c0_269 = arith.constant 0 : index
    %365 = vector.load %arg19[%c0_266, %c2_267, %c0_268, %c0_269] : memref<1x4x1x8xf32, #tpu.memory_space<vmem>>, vector<1x1x1x8xf32>
    %366 = vector.shape_cast %365 : vector<1x1x1x8xf32> to vector<1x8xf32>
    %367 = vector.broadcast %366 : vector<1x8xf32> to vector<8x8xf32>
    %368 = arith.addf %364, %367 : vector<8x8xf32>
    %369 = vector.shape_cast %356 : vector<16x8xf32> to vector<1x16x8xf32>
    %370 = vector.shape_cast %362 : vector<8x8xf32> to vector<1x8x8xf32>
    %371 = vector.shape_cast %368 : vector<8x8xf32> to vector<1x8x8xf32>
    %372 = arith.truncf %369 : vector<1x16x8xf32> to vector<1x16x8xbf16>
    %373 = arith.truncf %370 : vector<1x8x8xf32> to vector<1x8x8xbf16>
    "tpu.trace_start"() <{level = 10 : i32, message = "bqd,bkd->bqk"}> : () -> ()
    %cst_270 = arith.constant dense<0.000000e+00> : vector<1x16x8xf32>
    %374 = tpu.matmul %372, %373, %cst_270 {dimension_numbers = #tpu.dot_dimension_numbers<[2], [2], [1], [1], [0, 0, 0, 1, 1, 1], [0], [0]>} : vector<1x16x8xbf16>, vector<1x8x8xbf16>, vector<1x16x8xf32> -> vector<1x16x8xf32>
    "tpu.trace_stop"() : () -> ()
    %cst_271 = arith.constant dense<0xFF800000> : vector<1x16xf32>
    %375 = vector.multi_reduction <maximumf>, %374, %cst_271 [2] : vector<1x16x8xf32> to vector<1x16xf32>
    %376 = vector.shape_cast %375 : vector<1x16xf32> to vector<1x16x1xf32>
    %377 = vector.broadcast %376 : vector<1x16x1xf32> to vector<1x16x8xf32>
    %378 = arith.subf %374, %377 : vector<1x16x8xf32>
    %379 = math.exp %378 : vector<1x16x8xf32>
    %cst_272 = arith.constant dense<0.000000e+00> : vector<1x16xf32>
    %380 = vector.multi_reduction <add>, %379, %cst_272 [2] : vector<1x16x8xf32> to vector<1x16xf32>
    %381 = vector.shape_cast %380 : vector<1x16xf32> to vector<1x16x1xf32>
    %382 = tpu.reciprocal %381 {approx = true} : vector<1x16x1xf32> -> vector<1x16x1xf32>
    %383 = vector.broadcast %382 : vector<1x16x1xf32> to vector<1x16x8xf32>
    %384 = arith.mulf %379, %383 : vector<1x16x8xf32>
    %385 = arith.truncf %384 : vector<1x16x8xf32> to vector<1x16x8xbf16>
    %386 = arith.truncf %371 : vector<1x8x8xf32> to vector<1x8x8xbf16>
    "tpu.trace_start"() <{level = 10 : i32, message = "bqk,bkd->bqd"}> : () -> ()
    %cst_273 = arith.constant dense<0.000000e+00> : vector<1x16x8xf32>
    %387 = tpu.matmul %385, %386, %cst_273 {dimension_numbers = #tpu.dot_dimension_numbers<[2], [1], [1], [2], [0, 0, 0, 1, 1, 2], [0], [0]>} : vector<1x16x8xbf16>, vector<1x8x8xbf16>, vector<1x16x8xf32> -> vector<1x16x8xf32>
    "tpu.trace_stop"() : () -> ()
    %388 = vector.shape_cast %387 : vector<1x16x8xf32> to vector<16x8xf32>
    %389 = arith.truncf %388 : vector<16x8xf32> to vector<16x8xbf16>
    %cst_274 = arith.constant dense<0.000000e+00> : vector<16x32xf32>
    %390 = tpu.matmul %389, %348, %cst_274 {dimension_numbers = #tpu.dot_dimension_numbers<[1], [0], [0], [1], [0, 0, 1, 1], [], []>} : vector<16x8xbf16>, vector<8x32xbf16>, vector<16x32xf32> -> vector<16x32xf32>
    %391 = arith.addf %340, %390 : vector<16x32xf32>
    %c0_275 = arith.constant 0 : index
    %c3_276 = arith.constant 3 : index
    %c0_277 = arith.constant 0 : index
    %c0_278 = arith.constant 0 : index
    %392 = vector.load %arg14[%c0_275, %c3_276, %c0_277, %c0_278] : memref<1x4x32x8xbf16, #tpu.memory_space<vmem>>, vector<1x1x32x8xbf16>
    %393 = vector.shape_cast %392 : vector<1x1x32x8xbf16> to vector<32x8xbf16>
    %c0_279 = arith.constant 0 : index
    %c3_280 = arith.constant 3 : index
    %c0_281 = arith.constant 0 : index
    %c0_282 = arith.constant 0 : index
    %394 = vector.load %arg16[%c0_279, %c3_280, %c0_281, %c0_282] : memref<1x4x32x8xbf16, #tpu.memory_space<vmem>>, vector<1x1x32x8xbf16>
    %395 = vector.shape_cast %394 : vector<1x1x32x8xbf16> to vector<32x8xbf16>
    %c0_283 = arith.constant 0 : index
    %c3_284 = arith.constant 3 : index
    %c0_285 = arith.constant 0 : index
    %c0_286 = arith.constant 0 : index
    %396 = vector.load %arg18[%c0_283, %c3_284, %c0_285, %c0_286] : memref<1x4x32x8xbf16, #tpu.memory_space<vmem>>, vector<1x1x32x8xbf16>
    %397 = vector.shape_cast %396 : vector<1x1x32x8xbf16> to vector<32x8xbf16>
    %c0_287 = arith.constant 0 : index
    %c3_288 = arith.constant 3 : index
    %c0_289 = arith.constant 0 : index
    %c0_290 = arith.constant 0 : index
    %398 = vector.load %arg20[%c0_287, %c3_288, %c0_289, %c0_290] : memref<1x4x8x32xbf16, #tpu.memory_space<vmem>>, vector<1x1x8x32xbf16>
    %399 = vector.shape_cast %398 : vector<1x1x8x32xbf16> to vector<8x32xbf16>
    %400 = arith.truncf %30 : vector<16x32xf32> to vector<16x32xbf16>
    %cst_291 = arith.constant dense<0.000000e+00> : vector<16x8xf32>
    %401 = tpu.matmul %400, %393, %cst_291 {dimension_numbers = #tpu.dot_dimension_numbers<[1], [0], [0], [1], [0, 0, 1, 1], [], []>} : vector<16x32xbf16>, vector<32x8xbf16>, vector<16x8xf32> -> vector<16x8xf32>
    %c0_292 = arith.constant 0 : index
    %c3_293 = arith.constant 3 : index
    %c0_294 = arith.constant 0 : index
    %c0_295 = arith.constant 0 : index
    %402 = vector.load %arg15[%c0_292, %c3_293, %c0_294, %c0_295] : memref<1x4x1x8xf32, #tpu.memory_space<vmem>>, vector<1x1x1x8xf32>
    %403 = vector.shape_cast %402 : vector<1x1x1x8xf32> to vector<1x8xf32>
    %404 = vector.broadcast %403 : vector<1x8xf32> to vector<16x8xf32>
    %405 = arith.addf %401, %404 : vector<16x8xf32>
    %cst_296 = arith.constant 0.353553385 : f32
    %406 = vector.broadcast %cst_296 : f32 to vector<16x8xf32>
    %407 = arith.mulf %405, %406 : vector<16x8xf32>
    %408 = arith.truncf %239 : vector<8x32xf32> to vector<8x32xbf16>
    %cst_297 = arith.constant dense<0.000000e+00> : vector<8x8xf32>
    %409 = tpu.matmul %408, %395, %cst_297 {dimension_numbers = #tpu.dot_dimension_numbers<[1], [0], [0], [1], [0, 0, 1, 1], [], []>} : vector<8x32xbf16>, vector<32x8xbf16>, vector<8x8xf32> -> vector<8x8xf32>
    %c0_298 = arith.constant 0 : index
    %c3_299 = arith.constant 3 : index
    %c0_300 = arith.constant 0 : index
    %c0_301 = arith.constant 0 : index
    %410 = vector.load %arg17[%c0_298, %c3_299, %c0_300, %c0_301] : memref<1x4x1x8xf32, #tpu.memory_space<vmem>>, vector<1x1x1x8xf32>
    %411 = vector.shape_cast %410 : vector<1x1x1x8xf32> to vector<1x8xf32>
    %412 = vector.broadcast %411 : vector<1x8xf32> to vector<8x8xf32>
    %413 = arith.addf %409, %412 : vector<8x8xf32>
    %414 = arith.truncf %239 : vector<8x32xf32> to vector<8x32xbf16>
    %cst_302 = arith.constant dense<0.000000e+00> : vector<8x8xf32>
    %415 = tpu.matmul %414, %397, %cst_302 {dimension_numbers = #tpu.dot_dimension_numbers<[1], [0], [0], [1], [0, 0, 1, 1], [], []>} : vector<8x32xbf16>, vector<32x8xbf16>, vector<8x8xf32> -> vector<8x8xf32>
    %c0_303 = arith.constant 0 : index
    %c3_304 = arith.constant 3 : index
    %c0_305 = arith.constant 0 : index
    %c0_306 = arith.constant 0 : index
    %416 = vector.load %arg19[%c0_303, %c3_304, %c0_305, %c0_306] : memref<1x4x1x8xf32, #tpu.memory_space<vmem>>, vector<1x1x1x8xf32>
    %417 = vector.shape_cast %416 : vector<1x1x1x8xf32> to vector<1x8xf32>
    %418 = vector.broadcast %417 : vector<1x8xf32> to vector<8x8xf32>
    %419 = arith.addf %415, %418 : vector<8x8xf32>
    %420 = vector.shape_cast %407 : vector<16x8xf32> to vector<1x16x8xf32>
    %421 = vector.shape_cast %413 : vector<8x8xf32> to vector<1x8x8xf32>
    %422 = vector.shape_cast %419 : vector<8x8xf32> to vector<1x8x8xf32>
    %423 = arith.truncf %420 : vector<1x16x8xf32> to vector<1x16x8xbf16>
    %424 = arith.truncf %421 : vector<1x8x8xf32> to vector<1x8x8xbf16>
    "tpu.trace_start"() <{level = 10 : i32, message = "bqd,bkd->bqk"}> : () -> ()
    %cst_307 = arith.constant dense<0.000000e+00> : vector<1x16x8xf32>
    %425 = tpu.matmul %423, %424, %cst_307 {dimension_numbers = #tpu.dot_dimension_numbers<[2], [2], [1], [1], [0, 0, 0, 1, 1, 1], [0], [0]>} : vector<1x16x8xbf16>, vector<1x8x8xbf16>, vector<1x16x8xf32> -> vector<1x16x8xf32>
    "tpu.trace_stop"() : () -> ()
    %cst_308 = arith.constant dense<0xFF800000> : vector<1x16xf32>
    %426 = vector.multi_reduction <maximumf>, %425, %cst_308 [2] : vector<1x16x8xf32> to vector<1x16xf32>
    %427 = vector.shape_cast %426 : vector<1x16xf32> to vector<1x16x1xf32>
    %428 = vector.broadcast %427 : vector<1x16x1xf32> to vector<1x16x8xf32>
    %429 = arith.subf %425, %428 : vector<1x16x8xf32>
    %430 = math.exp %429 : vector<1x16x8xf32>
    %cst_309 = arith.constant dense<0.000000e+00> : vector<1x16xf32>
    %431 = vector.multi_reduction <add>, %430, %cst_309 [2] : vector<1x16x8xf32> to vector<1x16xf32>
    %432 = vector.shape_cast %431 : vector<1x16xf32> to vector<1x16x1xf32>
    %433 = tpu.reciprocal %432 {approx = true} : vector<1x16x1xf32> -> vector<1x16x1xf32>
    %434 = vector.broadcast %433 : vector<1x16x1xf32> to vector<1x16x8xf32>
    %435 = arith.mulf %430, %434 : vector<1x16x8xf32>
    %436 = arith.truncf %435 : vector<1x16x8xf32> to vector<1x16x8xbf16>
    %437 = arith.truncf %422 : vector<1x8x8xf32> to vector<1x8x8xbf16>
    "tpu.trace_start"() <{level = 10 : i32, message = "bqk,bkd->bqd"}> : () -> ()
    %cst_310 = arith.constant dense<0.000000e+00> : vector<1x16x8xf32>
    %438 = tpu.matmul %436, %437, %cst_310 {dimension_numbers = #tpu.dot_dimension_numbers<[2], [1], [1], [2], [0, 0, 0, 1, 1, 2], [0], [0]>} : vector<1x16x8xbf16>, vector<1x8x8xbf16>, vector<1x16x8xf32> -> vector<1x16x8xf32>
    "tpu.trace_stop"() : () -> ()
    %439 = vector.shape_cast %438 : vector<1x16x8xf32> to vector<16x8xf32>
    %440 = arith.truncf %439 : vector<16x8xf32> to vector<16x8xbf16>
    %cst_311 = arith.constant dense<0.000000e+00> : vector<16x32xf32>
    %441 = tpu.matmul %440, %399, %cst_311 {dimension_numbers = #tpu.dot_dimension_numbers<[1], [0], [0], [1], [0, 0, 1, 1], [], []>} : vector<16x8xbf16>, vector<8x32xbf16>, vector<16x32xf32> -> vector<16x32xf32>
    %442 = arith.addf %391, %441 : vector<16x32xf32>
    %c0_312 = arith.constant 0 : index
    %c0_313 = arith.constant 0 : index
    %c0_314 = arith.constant 0 : index
    %443 = vector.load %arg21[%c0_312, %c0_313, %c0_314] : memref<1x1x32xf32, #tpu.memory_space<vmem>>, vector<1x1x32xf32>
    %444 = vector.shape_cast %443 : vector<1x1x32xf32> to vector<1x32xf32>
    %445 = vector.broadcast %444 : vector<1x32xf32> to vector<16x32xf32>
    %446 = arith.addf %442, %445 : vector<16x32xf32>
    %447 = arith.addf %446, %4 : vector<16x32xf32>
    %c0_315 = arith.constant 0 : index
    %c0_316 = arith.constant 0 : index
    %c0_317 = arith.constant 0 : index
    %448 = vector.load %arg22[%c0_315, %c0_316, %c0_317] : memref<1x1x32xf32, #tpu.memory_space<vmem>>, vector<1x1x32xf32>
    %449 = vector.shape_cast %448 : vector<1x1x32xf32> to vector<1x32xf32>
    %c0_318 = arith.constant 0 : index
    %c0_319 = arith.constant 0 : index
    %c0_320 = arith.constant 0 : index
    %450 = vector.load %arg23[%c0_318, %c0_319, %c0_320] : memref<1x1x32xf32, #tpu.memory_space<vmem>>, vector<1x1x32xf32>
    %451 = vector.shape_cast %450 : vector<1x1x32xf32> to vector<1x32xf32>
    %cst_321 = arith.constant dense<0.000000e+00> : vector<16xf32>
    %452 = vector.multi_reduction <add>, %447, %cst_321 [1] : vector<16x32xf32> to vector<16xf32>
    %453 = vector.shape_cast %452 : vector<16xf32> to vector<16x1xf32>
    %cst_322 = arith.constant 3.200000e+01 : f32
    %454 = vector.broadcast %cst_322 : f32 to vector<16x1xf32>
    %455 = arith.divf %453, %454 : vector<16x1xf32>
    %456 = vector.broadcast %455 : vector<16x1xf32> to vector<16x32xf32>
    %457 = arith.subf %447, %456 : vector<16x32xf32>
    %458 = arith.mulf %457, %457 : vector<16x32xf32>
    %cst_323 = arith.constant dense<0.000000e+00> : vector<16xf32>
    %459 = vector.multi_reduction <add>, %458, %cst_323 [1] : vector<16x32xf32> to vector<16xf32>
    %460 = vector.shape_cast %459 : vector<16xf32> to vector<16x1xf32>
    %cst_324 = arith.constant 3.200000e+01 : f32
    %461 = vector.broadcast %cst_324 : f32 to vector<16x1xf32>
    %462 = arith.divf %460, %461 : vector<16x1xf32>
    %463 = vector.broadcast %455 : vector<16x1xf32> to vector<16x32xf32>
    %464 = arith.subf %447, %463 : vector<16x32xf32>
    %cst_325 = arith.constant 9.99999974E-6 : f32
    %465 = vector.broadcast %cst_325 : f32 to vector<16x1xf32>
    %466 = arith.addf %462, %465 : vector<16x1xf32>
    %467 = math.rsqrt %466 : vector<16x1xf32>
    %468 = vector.broadcast %467 : vector<16x1xf32> to vector<16x32xf32>
    %469 = arith.mulf %464, %468 : vector<16x32xf32>
    %470 = vector.broadcast %449 : vector<1x32xf32> to vector<16x32xf32>
    %471 = arith.mulf %469, %470 : vector<16x32xf32>
    %472 = vector.broadcast %451 : vector<1x32xf32> to vector<16x32xf32>
    %473 = arith.addf %471, %472 : vector<16x32xf32>
    %474 = arith.truncf %473 : vector<16x32xf32> to vector<16x32xbf16>
    %c0_326 = arith.constant 0 : index
    %c0_327 = arith.constant 0 : index
    %c0_328 = arith.constant 0 : index
    %475 = vector.load %arg24[%c0_326, %c0_327, %c0_328] : memref<1x32x64xbf16, #tpu.memory_space<vmem>>, vector<1x32x64xbf16>
    %476 = vector.shape_cast %475 : vector<1x32x64xbf16> to vector<32x64xbf16>
    %cst_329 = arith.constant dense<0.000000e+00> : vector<16x64xf32>
    %477 = tpu.matmul %474, %476, %cst_329 {dimension_numbers = #tpu.dot_dimension_numbers<[1], [0], [0], [1], [0, 0, 1, 1], [], []>} : vector<16x32xbf16>, vector<32x64xbf16>, vector<16x64xf32> -> vector<16x64xf32>
    %c0_330 = arith.constant 0 : index
    %c0_331 = arith.constant 0 : index
    %c0_332 = arith.constant 0 : index
    %478 = vector.load %arg25[%c0_330, %c0_331, %c0_332] : memref<1x1x64xf32, #tpu.memory_space<vmem>>, vector<1x1x64xf32>
    %479 = vector.shape_cast %478 : vector<1x1x64xf32> to vector<1x64xf32>
    %480 = vector.broadcast %479 : vector<1x64xf32> to vector<16x64xf32>
    %481 = arith.addf %477, %480 : vector<16x64xf32>
    %cst_333 = arith.constant 4.471500e-02 : f32
    %482 = vector.broadcast %cst_333 : f32 to vector<16x64xf32>
    %483 = arith.mulf %482, %481 : vector<16x64xf32>
    %484 = arith.mulf %483, %481 : vector<16x64xf32>
    %485 = arith.mulf %484, %481 : vector<16x64xf32>
    %486 = arith.addf %481, %485 : vector<16x64xf32>
    %cst_334 = arith.constant 0.797884583 : f32
    %487 = vector.broadcast %cst_334 : f32 to vector<16x64xf32>
    %488 = arith.mulf %487, %486 : vector<16x64xf32>
    %cst_335 = arith.constant 5.000000e-01 : f32
    %489 = vector.broadcast %cst_335 : f32 to vector<16x64xf32>
    %490 = arith.mulf %489, %481 : vector<16x64xf32>
    %491 = math.tanh %488 : vector<16x64xf32>
    %cst_336 = arith.constant 1.000000e+00 : f32
    %492 = vector.broadcast %cst_336 : f32 to vector<16x64xf32>
    %493 = arith.addf %492, %491 : vector<16x64xf32>
    %494 = arith.mulf %490, %493 : vector<16x64xf32>
    %495 = arith.truncf %494 : vector<16x64xf32> to vector<16x64xbf16>
    %c0_337 = arith.constant 0 : index
    %c0_338 = arith.constant 0 : index
    %c0_339 = arith.constant 0 : index
    %496 = vector.load %arg26[%c0_337, %c0_338, %c0_339] : memref<1x64x32xbf16, #tpu.memory_space<vmem>>, vector<1x64x32xbf16>
    %497 = vector.shape_cast %496 : vector<1x64x32xbf16> to vector<64x32xbf16>
    %cst_340 = arith.constant dense<0.000000e+00> : vector<16x32xf32>
    %498 = tpu.matmul %495, %497, %cst_340 {dimension_numbers = #tpu.dot_dimension_numbers<[1], [0], [0], [1], [0, 0, 1, 1], [], []>} : vector<16x64xbf16>, vector<64x32xbf16>, vector<16x32xf32> -> vector<16x32xf32>
    %c0_341 = arith.constant 0 : index
    %c0_342 = arith.constant 0 : index
    %c0_343 = arith.constant 0 : index
    %499 = vector.load %arg27[%c0_341, %c0_342, %c0_343] : memref<1x1x32xf32, #tpu.memory_space<vmem>>, vector<1x1x32xf32>
    %500 = vector.shape_cast %499 : vector<1x1x32xf32> to vector<1x32xf32>
    %501 = vector.broadcast %500 : vector<1x32xf32> to vector<16x32xf32>
    %502 = arith.addf %498, %501 : vector<16x32xf32>
    %503 = arith.addf %502, %447 : vector<16x32xf32>
    %504 = vector.shape_cast %503 : vector<16x32xf32> to vector<1x16x32xf32>
    %c0_344 = arith.constant 0 : index
    %c0_345 = arith.constant 0 : index
    %c0_346 = arith.constant 0 : index
    %505 = vector.load %arg29[%c0_344, %c0_345, %c0_346] : memref<1x16x32xf32, #tpu.memory_space<vmem>>, vector<1x16x32xf32>
    tpu.vector_store %arg29[%c0_344, %c0_345, %c0_346], %504 {strides = array<i32>} : memref<1x16x32xf32, #tpu.memory_space<vmem>>, vector<1x16x32xf32>,
    %c1_i32 = arith.constant 1 : i32
    %506 = arith.cmpi eq, %arg1, %c1_i32 : i32
    %507 = arith.extui %506 : i1 to i32
    %c0_i32_347 = arith.constant 0 : i32
    %508 = arith.cmpi ne, %507, %c0_i32_347 : i32
    scf.if %508 {
      %c0_348 = arith.constant 0 : index
      %c0_349 = arith.constant 0 : index
      %c0_350 = arith.constant 0 : index
      %509 = vector.load %arg29[%c0_348, %c0_349, %c0_350] : memref<1x16x32xf32, #tpu.memory_space<vmem>>, vector<1x16x32xf32>
      %c0_351 = arith.constant 0 : index
      %c0_352 = arith.constant 0 : index
      %c0_353 = arith.constant 0 : index
      %510 = vector.load %arg28[%c0_351, %c0_352, %c0_353] : memref<1x16x32xf32, #tpu.memory_space<vmem>>, vector<1x16x32xf32>
      tpu.vector_store %arg28[%c0_351, %c0_352, %c0_353], %509 {strides = array<i32>} : memref<1x16x32xf32, #tpu.memory_space<vmem>>, vector<1x16x32xf32>,
    } else {
    }
    return
  }
  func.func @transform_0(%arg0: i32, %arg1: i32) -> (i32, i32, i32) {
    %c0_i32 = arith.constant 0 : i32
    %c0_i32_0 = arith.constant 0 : i32
    %c0_i32_1 = arith.constant 0 : i32
    return %arg0, %c0_i32, %c0_i32_0 : i32, i32, i32
  }
  func.func @transform_1(%arg0: i32, %arg1: i32) -> (i32, i32, i32) {
    %c0_i32 = arith.constant 0 : i32
    %c0_i32_0 = arith.constant 0 : i32
    %c0_i32_1 = arith.constant 0 : i32
    return %arg1, %c0_i32, %c0_i32_0 : i32, i32, i32
  }
  func.func @transform_2(%arg0: i32, %arg1: i32) -> (i32, i32, i32) {
    %c0_i32 = arith.constant 0 : i32
    %c0_i32_0 = arith.constant 0 : i32
    %c0_i32_1 = arith.constant 0 : i32
    return %arg1, %c0_i32, %c0_i32_0 : i32, i32, i32
  }
  func.func @transform_3(%arg0: i32, %arg1: i32) -> (i32, i32, i32) {
    %c0_i32 = arith.constant 0 : i32
    %c0_i32_0 = arith.constant 0 : i32
    %c0_i32_1 = arith.constant 0 : i32
    return %arg1, %c0_i32, %c0_i32_0 : i32, i32, i32
  }
  func.func @transform_4(%arg0: i32, %arg1: i32) -> (i32, i32, i32, i32) {
    %c0_i32 = arith.constant 0 : i32
    %c0_i32_0 = arith.constant 0 : i32
    %c0_i32_1 = arith.constant 0 : i32
    %c0_i32_2 = arith.constant 0 : i32
    return %arg1, %c0_i32, %c0_i32_0, %c0_i32_1 : i32, i32, i32, i32
  }
  func.func @transform_5(%arg0: i32, %arg1: i32) -> (i32, i32, i32, i32) {
    %c0_i32 = arith.constant 0 : i32
    %c0_i32_0 = arith.constant 0 : i32
    %c0_i32_1 = arith.constant 0 : i32
    %c0_i32_2 = arith.constant 0 : i32
    return %arg1, %c0_i32, %c0_i32_0, %c0_i32_1 : i32, i32, i32, i32
  }
  func.func @transform_6(%arg0: i32, %arg1: i32) -> (i32, i32, i32, i32) {
    %c0_i32 = arith.constant 0 : i32
    %c0_i32_0 = arith.constant 0 : i32
    %c0_i32_1 = arith.constant 0 : i32
    %c0_i32_2 = arith.constant 0 : i32
    return %arg1, %c0_i32, %c0_i32_0, %c0_i32_1 : i32, i32, i32, i32
  }
  func.func @transform_7(%arg0: i32, %arg1: i32) -> (i32, i32, i32, i32) {
    %c0_i32 = arith.constant 0 : i32
    %c0_i32_0 = arith.constant 0 : i32
    %c0_i32_1 = arith.constant 0 : i32
    %c0_i32_2 = arith.constant 0 : i32
    return %arg1, %c0_i32, %c0_i32_0, %c0_i32_1 : i32, i32, i32, i32
  }
  func.func @transform_8(%arg0: i32, %arg1: i32) -> (i32, i32, i32, i32) {
    %c0_i32 = arith.constant 0 : i32
    %c0_i32_0 = arith.constant 0 : i32
    %c0_i32_1 = arith.constant 0 : i32
    %c0_i32_2 = arith.constant 0 : i32
    return %arg1, %c0_i32, %c0_i32_0, %c0_i32_1 : i32, i32, i32, i32
  }
  func.func @transform_9(%arg0: i32, %arg1: i32) -> (i32, i32, i32, i32) {
    %c0_i32 = arith.constant 0 : i32
    %c0_i32_0 = arith.constant 0 : i32
    %c0_i32_1 = arith.constant 0 : i32
    %c0_i32_2 = arith.constant 0 : i32
    return %arg1, %c0_i32, %c0_i32_0, %c0_i32_1 : i32, i32, i32, i32
  }
  func.func @transform_10(%arg0: i32, %arg1: i32) -> (i32, i32, i32, i32) {
    %c0_i32 = arith.constant 0 : i32
    %c0_i32_0 = arith.constant 0 : i32
    %c0_i32_1 = arith.constant 0 : i32
    %c0_i32_2 = arith.constant 0 : i32
    return %arg1, %c0_i32, %c0_i32_0, %c0_i32_1 : i32, i32, i32, i32
  }
  func.func @transform_11(%arg0: i32, %arg1: i32) -> (i32, i32, i32) {
    %c0_i32 = arith.constant 0 : i32
    %c0_i32_0 = arith.constant 0 : i32
    %c0_i32_1 = arith.constant 0 : i32
    return %arg1, %c0_i32, %c0_i32_0 : i32, i32, i32
  }
  func.func @transform_12(%arg0: i32, %arg1: i32) -> (i32, i32, i32, i32) {
    %c0_i32 = arith.constant 0 : i32
    %c0_i32_0 = arith.constant 0 : i32
    %c0_i32_1 = arith.constant 0 : i32
    %c0_i32_2 = arith.constant 0 : i32
    return %arg1, %c0_i32, %c0_i32_0, %c0_i32_1 : i32, i32, i32, i32
  }
  func.func @transform_13(%arg0: i32, %arg1: i32) -> (i32, i32, i32, i32) {
    %c0_i32 = arith.constant 0 : i32
    %c0_i32_0 = arith.constant 0 : i32
    %c0_i32_1 = arith.constant 0 : i32
    %c0_i32_2 = arith.constant 0 : i32
    return %arg1, %c0_i32, %c0_i32_0, %c0_i32_1 : i32, i32, i32, i32
  }
  func.func @transform_14(%arg0: i32, %arg1: i32) -> (i32, i32, i32, i32) {
    %c0_i32 = arith.constant 0 : i32
    %c0_i32_0 = arith.constant 0 : i32
    %c0_i32_1 = arith.constant 0 : i32
    %c0_i32_2 = arith.constant 0 : i32
    return %arg1, %c0_i32, %c0_i32_0, %c0_i32_1 : i32, i32, i32, i32
  }
  func.func @transform_15(%arg0: i32, %arg1: i32) -> (i32, i32, i32, i32) {
    %c0_i32 = arith.constant 0 : i32
    %c0_i32_0 = arith.constant 0 : i32
    %c0_i32_1 = arith.constant 0 : i32
    %c0_i32_2 = arith.constant 0 : i32
    return %arg1, %c0_i32, %c0_i32_0, %c0_i32_1 : i32, i32, i32, i32
  }
  func.func @transform_16(%arg0: i32, %arg1: i32) -> (i32, i32, i32, i32) {
    %c0_i32 = arith.constant 0 : i32
    %c0_i32_0 = arith.constant 0 : i32
    %c0_i32_1 = arith.constant 0 : i32
    %c0_i32_2 = arith.constant 0 : i32
    return %arg1, %c0_i32, %c0_i32_0, %c0_i32_1 : i32, i32, i32, i32
  }
  func.func @transform_17(%arg0: i32, %arg1: i32) -> (i32, i32, i32, i32) {
    %c0_i32 = arith.constant 0 : i32
    %c0_i32_0 = arith.constant 0 : i32
    %c0_i32_1 = arith.constant 0 : i32
    %c0_i32_2 = arith.constant 0 : i32
    return %arg1, %c0_i32, %c0_i32_0, %c0_i32_1 : i32, i32, i32, i32
  }
  func.func @transform_18(%arg0: i32, %arg1: i32) -> (i32, i32, i32, i32) {
    %c0_i32 = arith.constant 0 : i32
    %c0_i32_0 = arith.constant 0 : i32
    %c0_i32_1 = arith.constant 0 : i32
    %c0_i32_2 = arith.constant 0 : i32
    return %arg1, %c0_i32, %c0_i32_0, %c0_i32_1 : i32, i32, i32, i32
  }
  func.func @transform_19(%arg0: i32, %arg1: i32) -> (i32, i32, i32) {
    %c0_i32 = arith.constant 0 : i32
    %c0_i32_0 = arith.constant 0 : i32
    %c0_i32_1 = arith.constant 0 : i32
    return %arg1, %c0_i32, %c0_i32_0 : i32, i32, i32
  }
  func.func @transform_20(%arg0: i32, %arg1: i32) -> (i32, i32, i32) {
    %c0_i32 = arith.constant 0 : i32
    %c0_i32_0 = arith.constant 0 : i32
    %c0_i32_1 = arith.constant 0 : i32
    return %arg1, %c0_i32, %c0_i32_0 : i32, i32, i32
  }
  func.func @transform_21(%arg0: i32, %arg1: i32) -> (i32, i32, i32) {
    %c0_i32 = arith.constant 0 : i32
    %c0_i32_0 = arith.constant 0 : i32
    %c0_i32_1 = arith.constant 0 : i32
    return %arg1, %c0_i32, %c0_i32_0 : i32, i32, i32
  }
  func.func @transform_22(%arg0: i32, %arg1: i32) -> (i32, i32, i32) {
    %c0_i32 = arith.constant 0 : i32
    %c0_i32_0 = arith.constant 0 : i32
    %c0_i32_1 = arith.constant 0 : i32
    return %arg1, %c0_i32, %c0_i32_0 : i32, i32, i32
  }
  func.func @transform_23(%arg0: i32, %arg1: i32) -> (i32, i32, i32) {
    %c0_i32 = arith.constant 0 : i32
    %c0_i32_0 = arith.constant 0 : i32
    %c0_i32_1 = arith.constant 0 : i32
    return %arg1, %c0_i32, %c0_i32_0 : i32, i32, i32
  }
  func.func @transform_24(%arg0: i32, %arg1: i32) -> (i32, i32, i32) {
    %c0_i32 = arith.constant 0 : i32
    %c0_i32_0 = arith.constant 0 : i32
    %c0_i32_1 = arith.constant 0 : i32
    return %arg1, %c0_i32, %c0_i32_0 : i32, i32, i32
  }
  func.func @transform_25(%arg0: i32, %arg1: i32) -> (i32, i32, i32) {
    %c0_i32 = arith.constant 0 : i32
    %c0_i32_0 = arith.constant 0 : i32
    %c0_i32_1 = arith.constant 0 : i32
    return %arg1, %c0_i32, %c0_i32_0 : i32, i32, i32
  }
  func.func @transform_26(%arg0: i32, %arg1: i32) -> (i32, i32, i32) {
    %c0_i32 = arith.constant 0 : i32
    %c0_i32_0 = arith.constant 0 : i32
    %c0_i32_1 = arith.constant 0 : i32
    return %arg0, %c0_i32, %c0_i32_0 : i32, i32, i32
  }
}

</mosaic_0001>

<llo_original>
// kernel: estiformer_encoder_forward.1
$region0: #{estiformer_encoder_forward.1}
  #allocation0 [shape = 'u32[]', space=smem, size = 0x4, offset = 0x4, fixed_abs, tag = 'smem constant byte address 0x4 - core index']
  #allocation1 [shape = 'u32[144,128]{1,0:T(1,128)}', space=vmem, size = 0x12000, scoped, tag = 'internal scratch']
  #allocation2 [shape = 'f32[1,16,32]{2,1,0:T(8,128)}', space=vmem, size = 0x2000, scoped, tag = 'scratch operand']
  %s0 = inlined_call_operand.vmem [shape: f32[2,16,32], index: 0, kind: input, shape index: {}]
  %s1 = inlined_call_operand.vmem [shape: f32[2,8,32], index: 1, kind: input, shape index: {}]
  %s2 = inlined_call_operand.vmem [shape: f32[2,1,32], index: 2, kind: input, shape index: {}]
  %s3 = inlined_call_operand.vmem [shape: f32[2,1,32], index: 3, kind: input, shape index: {}]
  %s4 = inlined_call_operand.vmem [shape: bf16[2,4,32,8], index: 4, kind: input, shape index: {}]
  %s5 = inlined_call_operand.vmem [shape: f32[2,4,1,8], index: 5, kind: input, shape index: {}]
  %s6 = inlined_call_operand.vmem [shape: bf16[2,4,32,8], index: 6, kind: input, shape index: {}]
  %s7 = inlined_call_operand.vmem [shape: f32[2,4,1,8], index: 7, kind: input, shape index: {}]
  %s8 = inlined_call_operand.vmem [shape: bf16[2,4,32,8], index: 8, kind: input, shape index: {}]
  %s9 = inlined_call_operand.vmem [shape: f32[2,4,1,8], index: 9, kind: input, shape index: {}]
  %s10 = inlined_call_operand.vmem [shape: bf16[2,4,8,32], index: 10, kind: input, shape index: {}]
  %s11 = inlined_call_operand.vmem [shape: f32[2,1,32], index: 11, kind: input, shape index: {}]
  %s12 = inlined_call_operand.vmem [shape: bf16[2,4,32,8], index: 12, kind: input, shape index: {}]
  %s13 = inlined_call_operand.vmem [shape: f32[2,4,1,8], index: 13, kind: input, shape index: {}]
  %s14 = inlined_call_operand.vmem [shape: bf16[2,4,32,8], index: 14, kind: input, shape index: {}]
  %s15 = inlined_call_operand.vmem [shape: f32[2,4,1,8], index: 15, kind: input, shape index: {}]
  %s16 = inlined_call_operand.vmem [shape: bf16[2,4,32,8], index: 16, kind: input, shape index: {}]
  %s17 = inlined_call_operand.vmem [shape: f32[2,4,1,8], index: 17, kind: input, shape index: {}]
  %s18 = inlined_call_operand.vmem [shape: bf16[2,4,8,32], index: 18, kind: input, shape index: {}]
  %s19 = inlined_call_operand.vmem [shape: f32[2,1,32], index: 19, kind: input, shape index: {}]
  %s20 = inlined_call_operand.vmem [shape: f32[2,1,32], index: 20, kind: input, shape index: {}]
  %s21 = inlined_call_operand.vmem [shape: f32[2,1,32], index: 21, kind: input, shape index: {}]
  %s22 = inlined_call_operand.vmem [shape: bf16[2,32,64], index: 22, kind: input, shape index: {}]
  %s23 = inlined_call_operand.vmem [shape: f32[2,1,64], index: 23, kind: input, shape index: {}]
  %s24 = inlined_call_operand.vmem [shape: bf16[2,64,32], index: 24, kind: input, shape index: {}]
  %s25 = inlined_call_operand.vmem [shape: f32[2,1,32], index: 25, kind: input, shape index: {}]
  %s26 = inlined_call_operand.hbm [shape: f32[2,16,32], index: 26, kind: output, shape index: {}]
  %s27 = sld [smem:[#allocation0]]
  $region145: #{estiformer_encoder_forward.1} parent=0
    _
  %s29 = ssub.s32 1, %s27
  %s30 = scalar_select 0, %s29, %s27
  $region1: #{estiformer_encoder_forward.1} parent=0
    #allocation3 [shape = 'u8[16384]{0}', space=vmem, size = 0x4000, scoped, tag = 'output window, operand 0']
    #allocation4 [shape = 's32[2]{0}', space=sflag, size = 0x8, scoped, tag = 'scoped memory for estiformer_encoder_forward.1']
    %31 = vsyncpa [#allocation4], 0
    %s32 = scalar_lea.sflag [#allocation4], 1
    %33 = vsyncpa %s32, 0
    loop: start=0, step=1, limit=6
    $region2: #{estiformer_encoder_forward.1} parent=1 // loop_pre_header
      _
    $region3: #{estiformer_encoder_forward.1} parent=1 // loop_header
      %s35 = sphi 0, %s39
      %p36 = scmp.ge.s32.totalorder %s35, 6
      %s42 = sphi 0, %s54
      %s43 = sphi 0, %s50
      %s44 = sphi 0, %s42
      %s45 = sphi 0, %s43
      %s46 = sphi 0, %s44
      %s47 = sphi 0, %s45
      %s57 = sphi 0, %s59
      %s60 = sphi 0, %s57
      %s61 = sphi 0, %s60
      %s77 = sphi 0, %s61
      %s83 = sphi 0, %s85
      %s86 = sphi 0, %s83
      %s87 = sphi 0, %s86
      %s103 = sphi 0, %s87
      %s109 = sphi 0, %s111
      %s112 = sphi 0, %s109
      %s113 = sphi 0, %s112
      %s129 = sphi 0, %s113
      %s135 = sphi 0, %s137
      %s138 = sphi 0, %s135
      %s139 = sphi 0, %s138
      %s155 = sphi 0, %s139
      %s161 = sphi 0, %s163
      %s164 = sphi 0, %s161
      %s165 = sphi 0, %s164
      %s181 = sphi 0, %s165
      %s187 = sphi 0, %s189
      %s190 = sphi 0, %s187
      %s191 = sphi 0, %s190
      %s207 = sphi 0, %s191
      %s213 = sphi 0, %s215
      %s216 = sphi 0, %s213
      %s217 = sphi 0, %s216
      %s233 = sphi 0, %s217
      %s239 = sphi 0, %s241
      %s242 = sphi 0, %s239
      %s243 = sphi 0, %s242
      %s259 = sphi 0, %s243
      %s265 = sphi 0, %s267
      %s268 = sphi 0, %s265
      %s269 = sphi 0, %s268
      %s285 = sphi 0, %s269
      %s291 = sphi 0, %s293
      %s294 = sphi 0, %s291
      %s295 = sphi 0, %s294
      %s311 = sphi 0, %s295
      %s317 = sphi 0, %s319
      %s320 = sphi 0, %s317
      %s321 = sphi 0, %s320
      %s337 = sphi 0, %s321
      %s343 = sphi 0, %s345
      %s346 = sphi 0, %s343
      %s347 = sphi 0, %s346
      %s363 = sphi 0, %s347
      %s369 = sphi 0, %s371
      %s372 = sphi 0, %s369
      %s373 = sphi 0, %s372
      %s389 = sphi 0, %s373
      %s395 = sphi 0, %s397
      %s398 = sphi 0, %s395
      %s399 = sphi 0, %s398
      %s415 = sphi 0, %s399
      %s421 = sphi 0, %s423
      %s424 = sphi 0, %s421
      %s425 = sphi 0, %s424
      %s441 = sphi 0, %s425
      %s447 = sphi 0, %s449
      %s450 = sphi 0, %s447
      %s451 = sphi 0, %s450
      %s467 = sphi 0, %s451
      %s473 = sphi 0, %s475
      %s476 = sphi 0, %s473
      %s477 = sphi 0, %s476
      %s493 = sphi 0, %s477
      %s499 = sphi 0, %s501
      %s502 = sphi 0, %s499
      %s503 = sphi 0, %s502
      %s519 = sphi 0, %s503
      %s525 = sphi 0, %s527
      %s528 = sphi 0, %s525
      %s529 = sphi 0, %s528
      %s545 = sphi 0, %s529
      %s551 = sphi 0, %s553
      %s554 = sphi 0, %s551
      %s555 = sphi 0, %s554
      %s571 = sphi 0, %s555
      %s577 = sphi 0, %s579
      %s580 = sphi 0, %s577
      %s581 = sphi 0, %s580
      %s597 = sphi 0, %s581
      %s603 = sphi 0, %s605
      %s606 = sphi 0, %s603
      %s607 = sphi 0, %s606
      %s623 = sphi 0, %s607
      %s629 = sphi 0, %s631
      %s632 = sphi 0, %s629
      %s633 = sphi 0, %s632
      %s649 = sphi 0, %s633
      %s655 = sphi 0, %s657
      %s658 = sphi 0, %s655
      %s659 = sphi 0, %s658
      %s675 = sphi 0, %s659
      %s681 = sphi 0, %s683
      %s684 = sphi 0, %s681
      %s685 = sphi 0, %s684
      %s701 = sphi 0, %s685
      %s707 = sphi 0, %s709
      %s710 = sphi 0, %s707
      %s711 = sphi 0, %s710
      %s727 = sphi 0, %s711
      %s733 = sphi 0, %s735
      %s736 = sphi 0, %s733
      %s737 = sphi 0, %s736
      %s753 = sphi 0, %s737
    $region4: #{estiformer_encoder_forward.1} parent=1 // loop_header_branch
      %38 = sbr.rel (%p36) target = $region8
    $region5: #{estiformer_encoder_forward.1} parent=1 // loop_body
      %s40 = ssub.s32 %s35, 1
      %s41 = ssub.s32 %s35, 2
      %s48 = sadd.s32 1, %s43
      %p49 = scmp.ge.s32.totalorder %s48, 2
      %s50 = scalar_select %p49, 0, %s48
      %s51 = sadd.s32 1, %s42
      %s52 = scalar_select %p49, %s51, %s42
      %p53 = scmp.ge.s32.totalorder %s52, 2
      %s54 = scalar_select %p53, 0, %s52
      %s55 = ssub.s32 %s42, %s54
      %p56 = scmp.eq.s32.totalorder %s55, 0
      %s58 = sadd.s32 %s57, 1
      %s59 = scalar_select %p56, %s57, %s58
      %p62 = pneg %p56
      %p63 = scmp.eq.s32.totalorder %s35, 3
      %p64 = por %p62, %p63
      %p65 = scmp.ne.s32.totalorder %s57, %s60
      %p66 = scmp.eq.s32.totalorder %s35, 0
      %p67 = por %p65, %p66
      %p68 = scmp.ne.s32.totalorder %s57, %s60
      %p69 = scmp.eq.s32.totalorder %s40, 3
      %p70 = por %p68, %p69
      %p71 = scmp.ne.s32.totalorder %s60, %s61
      %p72 = scmp.eq.s32.totalorder %s40, 0
      %p73 = por %p71, %p72
      %p74 = scmp.ne.s32.totalorder %s60, %s61
      %p75 = scmp.eq.s32.totalorder %s41, 3
      %p76 = por %p74, %p75
      %p78 = scmp.ne.s32.totalorder %s61, %s77
      %p79 = scmp.eq.s32.totalorder %s41, 0
      %p80 = por %p78, %p79
      %s81 = ssub.s32 %s43, %s50
      %p82 = scmp.eq.s32.totalorder %s81, 0
      %s84 = sadd.s32 %s83, 1
      %s85 = scalar_select %p82, %s83, %s84
      %p88 = pneg %p82
      %p89 = scmp.eq.s32.totalorder %s35, 3
      %p90 = por %p88, %p89
      %p91 = scmp.ne.s32.totalorder %s83, %s86
      %p92 = scmp.eq.s32.totalorder %s35, 0
      %p93 = por %p91, %p92
      %p94 = scmp.ne.s32.totalorder %s83, %s86
      %p95 = scmp.eq.s32.totalorder %s40, 3
      %p96 = por %p94, %p95
      %p97 = scmp.ne.s32.totalorder %s86, %s87
      %p98 = scmp.eq.s32.totalorder %s40, 0
      %p99 = por %p97, %p98
      %p100 = scmp.ne.s32.totalorder %s86, %s87
      %p101 = scmp.eq.s32.totalorder %s41, 3
      %p102 = por %p100, %p101
      %p104 = scmp.ne.s32.totalorder %s87, %s103
      %p105 = scmp.eq.s32.totalorder %s41, 0
      %p106 = por %p104, %p105
      %s107 = ssub.s32 %s43, %s50
      %p108 = scmp.eq.s32.totalorder %s107, 0
      %s110 = sadd.s32 %s109, 1
      %s111 = scalar_select %p108, %s109, %s110
      %p114 = pneg %p108
      %p115 = scmp.eq.s32.totalorder %s35, 3
      %p116 = por %p114, %p115
      %p117 = scmp.ne.s32.totalorder %s109, %s112
      %p118 = scmp.eq.s32.totalorder %s35, 0
      %p119 = por %p117, %p118
      %p120 = scmp.ne.s32.totalorder %s109, %s112
      %p121 = scmp.eq.s32.totalorder %s40, 3
      %p122 = por %p120, %p121
      %p123 = scmp.ne.s32.totalorder %s112, %s113
      %p124 = scmp.eq.s32.totalorder %s40, 0
      %p125 = por %p123, %p124
      %p126 = scmp.ne.s32.totalorder %s112, %s113
      %p127 = scmp.eq.s32.totalorder %s41, 3
      %p128 = por %p126, %p127
      %p130 = scmp.ne.s32.totalorder %s113, %s129
      %p131 = scmp.eq.s32.totalorder %s41, 0
      %p132 = por %p130, %p131
      %s133 = ssub.s32 %s43, %s50
      %p134 = scmp.eq.s32.totalorder %s133, 0
      %s136 = sadd.s32 %s135, 1
      %s137 = scalar_select %p134, %s135, %s136
      %p140 = pneg %p134
      %p141 = scmp.eq.s32.totalorder %s35, 3
      %p142 = por %p140, %p141
      %p143 = scmp.ne.s32.totalorder %s135, %s138
      %p144 = scmp.eq.s32.totalorder %s35, 0
      %p145 = por %p143, %p144
      %p146 = scmp.ne.s32.totalorder %s135, %s138
      %p147 = scmp.eq.s32.totalorder %s40, 3
      %p148 = por %p146, %p147
      %p149 = scmp.ne.s32.totalorder %s138, %s139
      %p150 = scmp.eq.s32.totalorder %s40, 0
      %p151 = por %p149, %p150
      %p152 = scmp.ne.s32.totalorder %s138, %s139
      %p153 = scmp.eq.s32.totalorder %s41, 3
      %p154 = por %p152, %p153
      %p156 = scmp.ne.s32.totalorder %s139, %s155
      %p157 = scmp.eq.s32.totalorder %s41, 0
      %p158 = por %p156, %p157
      %s159 = ssub.s32 %s43, %s50
      %p160 = scmp.eq.s32.totalorder %s159, 0
      %s162 = sadd.s32 %s161, 1
      %s163 = scalar_select %p160, %s161, %s162
      %p166 = pneg %p160
      %p167 = scmp.eq.s32.totalorder %s35, 3
      %p168 = por %p166, %p167
      %p169 = scmp.ne.s32.totalorder %s161, %s164
      %p170 = scmp.eq.s32.totalorder %s35, 0
      %p171 = por %p169, %p170
      %p172 = scmp.ne.s32.totalorder %s161, %s164
      %p173 = scmp.eq.s32.totalorder %s40, 3
      %p174 = por %p172, %p173
      %p175 = scmp.ne.s32.totalorder %s164, %s165
      %p176 = scmp.eq.s32.totalorder %s40, 0
      %p177 = por %p175, %p176
      %p178 = scmp.ne.s32.totalorder %s164, %s165
      %p179 = scmp.eq.s32.totalorder %s41, 3
      %p180 = por %p178, %p179
      %p182 = scmp.ne.s32.totalorder %s165, %s181
      %p183 = scmp.eq.s32.totalorder %s41, 0
      %p184 = por %p182, %p183
      %s185 = ssub.s32 %s43, %s50
      %p186 = scmp.eq.s32.totalorder %s185, 0
      %s188 = sadd.s32 %s187, 1
      %s189 = scalar_select %p186, %s187, %s188
      %p192 = pneg %p186
      %p193 = scmp.eq.s32.totalorder %s35, 3
      %p194 = por %p192, %p193
      %p195 = scmp.ne.s32.totalorder %s187, %s190
      %p196 = scmp.eq.s32.totalorder %s35, 0
      %p197 = por %p195, %p196
      %p198 = scmp.ne.s32.totalorder %s187, %s190
      %p199 = scmp.eq.s32.totalorder %s40, 3
      %p200 = por %p198, %p199
      %p201 = scmp.ne.s32.totalorder %s190, %s191
      %p202 = scmp.eq.s32.totalorder %s40, 0
      %p203 = por %p201, %p202
      %p204 = scmp.ne.s32.totalorder %s190, %s191
      %p205 = scmp.eq.s32.totalorder %s41, 3
      %p206 = por %p204, %p205
      %p208 = scmp.ne.s32.totalorder %s191, %s207
      %p209 = scmp.eq.s32.totalorder %s41, 0
      %p210 = por %p208, %p209
      %s211 = ssub.s32 %s43, %s50
      %p212 = scmp.eq.s32.totalorder %s211, 0
      %s214 = sadd.s32 %s213, 1
      %s215 = scalar_select %p212, %s213, %s214
      %p218 = pneg %p212
      %p219 = scmp.eq.s32.totalorder %s35, 3
      %p220 = por %p218, %p219
      %p221 = scmp.ne.s32.totalorder %s213, %s216
      %p222 = scmp.eq.s32.totalorder %s35, 0
      %p223 = por %p221, %p222
      %p224 = scmp.ne.s32.totalorder %s213, %s216
      %p225 = scmp.eq.s32.totalorder %s40, 3
      %p226 = por %p224, %p225
      %p227 = scmp.ne.s32.totalorder %s216, %s217
      %p228 = scmp.eq.s32.totalorder %s40, 0
      %p229 = por %p227, %p228
      %p230 = scmp.ne.s32.totalorder %s216, %s217
      %p231 = scmp.eq.s32.totalorder %s41, 3
      %p232 = por %p230, %p231
      %p234 = scmp.ne.s32.totalorder %s217, %s233
      %p235 = scmp.eq.s32.totalorder %s41, 0
      %p236 = por %p234, %p235
      %s237 = ssub.s32 %s43, %s50
      %p238 = scmp.eq.s32.totalorder %s237, 0
      %s240 = sadd.s32 %s239, 1
      %s241 = scalar_select %p238, %s239, %s240
      %p244 = pneg %p238
      %p245 = scmp.eq.s32.totalorder %s35, 3
      %p246 = por %p244, %p245
      %p247 = scmp.ne.s32.totalorder %s239, %s242
      %p248 = scmp.eq.s32.totalorder %s35, 0
      %p249 = por %p247, %p248
      %p250 = scmp.ne.s32.totalorder %s239, %s242
      %p251 = scmp.eq.s32.totalorder %s40, 3
      %p252 = por %p250, %p251
      %p253 = scmp.ne.s32.totalorder %s242, %s243
      %p254 = scmp.eq.s32.totalorder %s40, 0
      %p255 = por %p253, %p254
      %p256 = scmp.ne.s32.totalorder %s242, %s243
      %p257 = scmp.eq.s32.totalorder %s41, 3
      %p258 = por %p256, %p257
      %p260 = scmp.ne.s32.totalorder %s243, %s259
      %p261 = scmp.eq.s32.totalorder %s41, 0
      %p262 = por %p260, %p261
      %s263 = ssub.s32 %s43, %s50
      %p264 = scmp.eq.s32.totalorder %s263, 0
      %s266 = sadd.s32 %s265, 1
      %s267 = scalar_select %p264, %s265, %s266
      %p270 = pneg %p264
      %p271 = scmp.eq.s32.totalorder %s35, 3
      %p272 = por %p270, %p271
      %p273 = scmp.ne.s32.totalorder %s265, %s268
      %p274 = scmp.eq.s32.totalorder %s35, 0
      %p275 = por %p273, %p274
      %p276 = scmp.ne.s32.totalorder %s265, %s268
      %p277 = scmp.eq.s32.totalorder %s40, 3
      %p278 = por %p276, %p277
      %p279 = scmp.ne.s32.totalorder %s268, %s269
      %p280 = scmp.eq.s32.totalorder %s40, 0
      %p281 = por %p279, %p280
      %p282 = scmp.ne.s32.totalorder %s268, %s269
      %p283 = scmp.eq.s32.totalorder %s41, 3
      %p284 = por %p282, %p283
      %p286 = scmp.ne.s32.totalorder %s269, %s285
      %p287 = scmp.eq.s32.totalorder %s41, 0
      %p288 = por %p286, %p287
      %s289 = ssub.s32 %s43, %s50
      %p290 = scmp.eq.s32.totalorder %s289, 0
      %s292 = sadd.s32 %s291, 1
      %s293 = scalar_select %p290, %s291, %s292
      %p296 = pneg %p290
      %p297 = scmp.eq.s32.totalorder %s35, 3
      %p298 = por %p296, %p297
      %p299 = scmp.ne.s32.totalorder %s291, %s294
      %p300 = scmp.eq.s32.totalorder %s35, 0
      %p301 = por %p299, %p300
      %p302 = scmp.ne.s32.totalorder %s291, %s294
      %p303 = scmp.eq.s32.totalorder %s40, 3
      %p304 = por %p302, %p303
      %p305 = scmp.ne.s32.totalorder %s294, %s295
      %p306 = scmp.eq.s32.totalorder %s40, 0
      %p307 = por %p305, %p306
      %p308 = scmp.ne.s32.totalorder %s294, %s295
      %p309 = scmp.eq.s32.totalorder %s41, 3
      %p310 = por %p308, %p309
      %p312 = scmp.ne.s32.totalorder %s295, %s311
      %p313 = scmp.eq.s32.totalorder %s41, 0
      %p314 = por %p312, %p313
      %s315 = ssub.s32 %s43, %s50
      %p316 = scmp.eq.s32.totalorder %s315, 0
      %s318 = sadd.s32 %s317, 1
      %s319 = scalar_select %p316, %s317, %s318
      %p322 = pneg %p316
      %p323 = scmp.eq.s32.totalorder %s35, 3
      %p324 = por %p322, %p323
      %p325 = scmp.ne.s32.totalorder %s317, %s320
      %p326 = scmp.eq.s32.totalorder %s35, 0
      %p327 = por %p325, %p326
      %p328 = scmp.ne.s32.totalorder %s317, %s320
      %p329 = scmp.eq.s32.totalorder %s40, 3
      %p330 = por %p328, %p329
      %p331 = scmp.ne.s32.totalorder %s320, %s321
      %p332 = scmp.eq.s32.totalorder %s40, 0
      %p333 = por %p331, %p332
      %p334 = scmp.ne.s32.totalorder %s320, %s321
      %p335 = scmp.eq.s32.totalorder %s41, 3
      %p336 = por %p334, %p335
      %p338 = scmp.ne.s32.totalorder %s321, %s337
      %p339 = scmp.eq.s32.totalorder %s41, 0
      %p340 = por %p338, %p339
      %s341 = ssub.s32 %s43, %s50
      %p342 = scmp.eq.s32.totalorder %s341, 0
      %s344 = sadd.s32 %s343, 1
      %s345 = scalar_select %p342, %s343, %s344
      %p348 = pneg %p342
      %p349 = scmp.eq.s32.totalorder %s35, 3
      %p350 = por %p348, %p349
      %p351 = scmp.ne.s32.totalorder %s343, %s346
      %p352 = scmp.eq.s32.totalorder %s35, 0
      %p353 = por %p351, %p352
      %p354 = scmp.ne.s32.totalorder %s343, %s346
      %p355 = scmp.eq.s32.totalorder %s40, 3
      %p356 = por %p354, %p355
      %p357 = scmp.ne.s32.totalorder %s346, %s347
      %p358 = scmp.eq.s32.totalorder %s40, 0
      %p359 = por %p357, %p358
      %p360 = scmp.ne.s32.totalorder %s346, %s347
      %p361 = scmp.eq.s32.totalorder %s41, 3
      %p362 = por %p360, %p361
      %p364 = scmp.ne.s32.totalorder %s347, %s363
      %p365 = scmp.eq.s32.totalorder %s41, 0
      %p366 = por %p364, %p365
      %s367 = ssub.s32 %s43, %s50
      %p368 = scmp.eq.s32.totalorder %s367, 0
      %s370 = sadd.s32 %s369, 1
      %s371 = scalar_select %p368, %s369, %s370
      %p374 = pneg %p368
      %p375 = scmp.eq.s32.totalorder %s35, 3
      %p376 = por %p374, %p375
      %p377 = scmp.ne.s32.totalorder %s369, %s372
      %p378 = scmp.eq.s32.totalorder %s35, 0
      %p379 = por %p377, %p378
      %p380 = scmp.ne.s32.totalorder %s369, %s372
      %p381 = scmp.eq.s32.totalorder %s40, 3
      %p382 = por %p380, %p381
      %p383 = scmp.ne.s32.totalorder %s372, %s373
      %p384 = scmp.eq.s32.totalorder %s40, 0
      %p385 = por %p383, %p384
      %p386 = scmp.ne.s32.totalorder %s372, %s373
      %p387 = scmp.eq.s32.totalorder %s41, 3
      %p388 = por %p386, %p387
      %p390 = scmp.ne.s32.totalorder %s373, %s389
      %p391 = scmp.eq.s32.totalorder %s41, 0
      %p392 = por %p390, %p391
      %s393 = ssub.s32 %s43, %s50
      %p394 = scmp.eq.s32.totalorder %s393, 0
      %s396 = sadd.s32 %s395, 1
      %s397 = scalar_select %p394, %s395, %s396
      %p400 = pneg %p394
      %p401 = scmp.eq.s32.totalorder %s35, 3
      %p402 = por %p400, %p401
      %p403 = scmp.ne.s32.totalorder %s395, %s398
      %p404 = scmp.eq.s32.totalorder %s35, 0
      %p405 = por %p403, %p404
      %p406 = scmp.ne.s32.totalorder %s395, %s398
      %p407 = scmp.eq.s32.totalorder %s40, 3
      %p408 = por %p406, %p407
      %p409 = scmp.ne.s32.totalorder %s398, %s399
      %p410 = scmp.eq.s32.totalorder %s40, 0
      %p411 = por %p409, %p410
      %p412 = scmp.ne.s32.totalorder %s398, %s399
      %p413 = scmp.eq.s32.totalorder %s41, 3
      %p414 = por %p412, %p413
      %p416 = scmp.ne.s32.totalorder %s399, %s415
      %p417 = scmp.eq.s32.totalorder %s41, 0
      %p418 = por %p416, %p417
      %s419 = ssub.s32 %s43, %s50
      %p420 = scmp.eq.s32.totalorder %s419, 0
      %s422 = sadd.s32 %s421, 1
      %s423 = scalar_select %p420, %s421, %s422
      %p426 = pneg %p420
      %p427 = scmp.eq.s32.totalorder %s35, 3
      %p428 = por %p426, %p427
      %p429 = scmp.ne.s32.totalorder %s421, %s424
      %p430 = scmp.eq.s32.totalorder %s35, 0
      %p431 = por %p429, %p430
      %p432 = scmp.ne.s32.totalorder %s421, %s424
      %p433 = scmp.eq.s32.totalorder %s40, 3
      %p434 = por %p432, %p433
      %p435 = scmp.ne.s32.totalorder %s424, %s425
      %p436 = scmp.eq.s32.totalorder %s40, 0
      %p437 = por %p435, %p436
      %p438 = scmp.ne.s32.totalorder %s424, %s425
      %p439 = scmp.eq.s32.totalorder %s41, 3
      %p440 = por %p438, %p439
      %p442 = scmp.ne.s32.totalorder %s425, %s441
      %p443 = scmp.eq.s32.totalorder %s41, 0
      %p444 = por %p442, %p443
      %s445 = ssub.s32 %s43, %s50
      %p446 = scmp.eq.s32.totalorder %s445, 0
      %s448 = sadd.s32 %s447, 1
      %s449 = scalar_select %p446, %s447, %s448
      %p452 = pneg %p446
      %p453 = scmp.eq.s32.totalorder %s35, 3
      %p454 = por %p452, %p453
      %p455 = scmp.ne.s32.totalorder %s447, %s450
      %p456 = scmp.eq.s32.totalorder %s35, 0
      %p457 = por %p455, %p456
      %p458 = scmp.ne.s32.totalorder %s447, %s450
      %p459 = scmp.eq.s32.totalorder %s40, 3
      %p460 = por %p458, %p459
      %p461 = scmp.ne.s32.totalorder %s450, %s451
      %p462 = scmp.eq.s32.totalorder %s40, 0
      %p463 = por %p461, %p462
      %p464 = scmp.ne.s32.totalorder %s450, %s451
      %p465 = scmp.eq.s32.totalorder %s41, 3
      %p466 = por %p464, %p465
      %p468 = scmp.ne.s32.totalorder %s451, %s467
      %p469 = scmp.eq.s32.totalorder %s41, 0
      %p470 = por %p468, %p469
      %s471 = ssub.s32 %s43, %s50
      %p472 = scmp.eq.s32.totalorder %s471, 0
      %s474 = sadd.s32 %s473, 1
      %s475 = scalar_select %p472, %s473, %s474
      %p478 = pneg %p472
      %p479 = scmp.eq.s32.totalorder %s35, 3
      %p480 = por %p478, %p479
      %p481 = scmp.ne.s32.totalorder %s473, %s476
      %p482 = scmp.eq.s32.totalorder %s35, 0
      %p483 = por %p481, %p482
      %p484 = scmp.ne.s32.totalorder %s473, %s476
      %p485 = scmp.eq.s32.totalorder %s40, 3
      %p486 = por %p484, %p485
      %p487 = scmp.ne.s32.totalorder %s476, %s477
      %p488 = scmp.eq.s32.totalorder %s40, 0
      %p489 = por %p487, %p488
      %p490 = scmp.ne.s32.totalorder %s476, %s477
      %p491 = scmp.eq.s32.totalorder %s41, 3
      %p492 = por %p490, %p491
      %p494 = scmp.ne.s32.totalorder %s477, %s493
      %p495 = scmp.eq.s32.totalorder %s41, 0
      %p496 = por %p494, %p495
      %s497 = ssub.s32 %s43, %s50
      %p498 = scmp.eq.s32.totalorder %s497, 0
      %s500 = sadd.s32 %s499, 1
      %s501 = scalar_select %p498, %s499, %s500
      %p504 = pneg %p498
      %p505 = scmp.eq.s32.totalorder %s35, 3
      %p506 = por %p504, %p505
      %p507 = scmp.ne.s32.totalorder %s499, %s502
      %p508 = scmp.eq.s32.totalorder %s35, 0
      %p509 = por %p507, %p508
      %p510 = scmp.ne.s32.totalorder %s499, %s502
      %p511 = scmp.eq.s32.totalorder %s40, 3
      %p512 = por %p510, %p511
      %p513 = scmp.ne.s32.totalorder %s502, %s503
      %p514 = scmp.eq.s32.totalorder %s40, 0
      %p515 = por %p513, %p514
      %p516 = scmp.ne.s32.totalorder %s502, %s503
      %p517 = scmp.eq.s32.totalorder %s41, 3
      %p518 = por %p516, %p517
      %p520 = scmp.ne.s32.totalorder %s503, %s519
      %p521 = scmp.eq.s32.totalorder %s41, 0
      %p522 = por %p520, %p521
      %s523 = ssub.s32 %s43, %s50
      %p524 = scmp.eq.s32.totalorder %s523, 0
      %s526 = sadd.s32 %s525, 1
      %s527 = scalar_select %p524, %s525, %s526
      %p530 = pneg %p524
      %p531 = scmp.eq.s32.totalorder %s35, 3
      %p532 = por %p530, %p531
      %p533 = scmp.ne.s32.totalorder %s525, %s528
      %p534 = scmp.eq.s32.totalorder %s35, 0
      %p535 = por %p533, %p534
      %p536 = scmp.ne.s32.totalorder %s525, %s528
      %p537 = scmp.eq.s32.totalorder %s40, 3
      %p538 = por %p536, %p537
      %p539 = scmp.ne.s32.totalorder %s528, %s529
      %p540 = scmp.eq.s32.totalorder %s40, 0
      %p541 = por %p539, %p540
      %p542 = scmp.ne.s32.totalorder %s528, %s529
      %p543 = scmp.eq.s32.totalorder %s41, 3
      %p544 = por %p542, %p543
      %p546 = scmp.ne.s32.totalorder %s529, %s545
      %p547 = scmp.eq.s32.totalorder %s41, 0
      %p548 = por %p546, %p547
      %s549 = ssub.s32 %s43, %s50
      %p550 = scmp.eq.s32.totalorder %s549, 0
      %s552 = sadd.s32 %s551, 1
      %s553 = scalar_select %p550, %s551, %s552
      %p556 = pneg %p550
      %p557 = scmp.eq.s32.totalorder %s35, 3
      %p558 = por %p556, %p557
      %p559 = scmp.ne.s32.totalorder %s551, %s554
      %p560 = scmp.eq.s32.totalorder %s35, 0
      %p561 = por %p559, %p560
      %p562 = scmp.ne.s32.totalorder %s551, %s554
      %p563 = scmp.eq.s32.totalorder %s40, 3
      %p564 = por %p562, %p563
      %p565 = scmp.ne.s32.totalorder %s554, %s555
      %p566 = scmp.eq.s32.totalorder %s40, 0
      %p567 = por %p565, %p566
      %p568 = scmp.ne.s32.totalorder %s554, %s555
      %p569 = scmp.eq.s32.totalorder %s41, 3
      %p570 = por %p568, %p569
      %p572 = scmp.ne.s32.totalorder %s555, %s571
      %p573 = scmp.eq.s32.totalorder %s41, 0
      %p574 = por %p572, %p573
      %s575 = ssub.s32 %s43, %s50
      %p576 = scmp.eq.s32.totalorder %s575, 0
      %s578 = sadd.s32 %s577, 1
      %s579 = scalar_select %p576, %s577, %s578
      %p582 = pneg %p576
      %p583 = scmp.eq.s32.totalorder %s35, 3
      %p584 = por %p582, %p583
      %p585 = scmp.ne.s32.totalorder %s577, %s580
      %p586 = scmp.eq.s32.totalorder %s35, 0
      %p587 = por %p585, %p586
      %p588 = scmp.ne.s32.totalorder %s577, %s580
      %p589 = scmp.eq.s32.totalorder %s40, 3
      %p590 = por %p588, %p589
      %p591 = scmp.ne.s32.totalorder %s580, %s581
      %p592 = scmp.eq.s32.totalorder %s40, 0
      %p593 = por %p591, %p592
      %p594 = scmp.ne.s32.totalorder %s580, %s581
      %p595 = scmp.eq.s32.totalorder %s41, 3
      %p596 = por %p594, %p595
      %p598 = scmp.ne.s32.totalorder %s581, %s597
      %p599 = scmp.eq.s32.totalorder %s41, 0
      %p600 = por %p598, %p599
      %s601 = ssub.s32 %s43, %s50
      %p602 = scmp.eq.s32.totalorder %s601, 0
      %s604 = sadd.s32 %s603, 1
      %s605 = scalar_select %p602, %s603, %s604
      %p608 = pneg %p602
      %p609 = scmp.eq.s32.totalorder %s35, 3
      %p610 = por %p608, %p609
      %p611 = scmp.ne.s32.totalorder %s603, %s606
      %p612 = scmp.eq.s32.totalorder %s35, 0
      %p613 = por %p611, %p612
      %p614 = scmp.ne.s32.totalorder %s603, %s606
      %p615 = scmp.eq.s32.totalorder %s40, 3
      %p616 = por %p614, %p615
      %p617 = scmp.ne.s32.totalorder %s606, %s607
      %p618 = scmp.eq.s32.totalorder %s40, 0
      %p619 = por %p617, %p618
      %p620 = scmp.ne.s32.totalorder %s606, %s607
      %p621 = scmp.eq.s32.totalorder %s41, 3
      %p622 = por %p620, %p621
      %p624 = scmp.ne.s32.totalorder %s607, %s623
      %p625 = scmp.eq.s32.totalorder %s41, 0
      %p626 = por %p624, %p625
      %s627 = ssub.s32 %s43, %s50
      %p628 = scmp.eq.s32.totalorder %s627, 0
      %s630 = sadd.s32 %s629, 1
      %s631 = scalar_select %p628, %s629, %s630
      %p634 = pneg %p628
      %p635 = scmp.eq.s32.totalorder %s35, 3
      %p636 = por %p634, %p635
      %p637 = scmp.ne.s32.totalorder %s629, %s632
      %p638 = scmp.eq.s32.totalorder %s35, 0
      %p639 = por %p637, %p638
      %p640 = scmp.ne.s32.totalorder %s629, %s632
      %p641 = scmp.eq.s32.totalorder %s40, 3
      %p642 = por %p640, %p641
      %p643 = scmp.ne.s32.totalorder %s632, %s633
      %p644 = scmp.eq.s32.totalorder %s40, 0
      %p645 = por %p643, %p644
      %p646 = scmp.ne.s32.totalorder %s632, %s633
      %p647 = scmp.eq.s32.totalorder %s41, 3
      %p648 = por %p646, %p647
      %p650 = scmp.ne.s32.totalorder %s633, %s649
      %p651 = scmp.eq.s32.totalorder %s41, 0
      %p652 = por %p650, %p651
      %s653 = ssub.s32 %s43, %s50
      %p654 = scmp.eq.s32.totalorder %s653, 0
      %s656 = sadd.s32 %s655, 1
      %s657 = scalar_select %p654, %s655, %s656
      %p660 = pneg %p654
      %p661 = scmp.eq.s32.totalorder %s35, 3
      %p662 = por %p660, %p661
      %p663 = scmp.ne.s32.totalorder %s655, %s658
      %p664 = scmp.eq.s32.totalorder %s35, 0
      %p665 = por %p663, %p664
      %p666 = scmp.ne.s32.totalorder %s655, %s658
      %p667 = scmp.eq.s32.totalorder %s40, 3
      %p668 = por %p666, %p667
      %p669 = scmp.ne.s32.totalorder %s658, %s659
      %p670 = scmp.eq.s32.totalorder %s40, 0
      %p671 = por %p669, %p670
      %p672 = scmp.ne.s32.totalorder %s658, %s659
      %p673 = scmp.eq.s32.totalorder %s41, 3
      %p674 = por %p672, %p673
      %p676 = scmp.ne.s32.totalorder %s659, %s675
      %p677 = scmp.eq.s32.totalorder %s41, 0
      %p678 = por %p676, %p677
      %s679 = ssub.s32 %s43, %s50
      %p680 = scmp.eq.s32.totalorder %s679, 0
      %s682 = sadd.s32 %s681, 1
      %s683 = scalar_select %p680, %s681, %s682
      %p686 = pneg %p680
      %p687 = scmp.eq.s32.totalorder %s35, 3
      %p688 = por %p686, %p687
      %p689 = scmp.ne.s32.totalorder %s681, %s684
      %p690 = scmp.eq.s32.totalorder %s35, 0
      %p691 = por %p689, %p690
      %p692 = scmp.ne.s32.totalorder %s681, %s684
      %p693 = scmp.eq.s32.totalorder %s40, 3
      %p694 = por %p692, %p693
      %p695 = scmp.ne.s32.totalorder %s684, %s685
      %p696 = scmp.eq.s32.totalorder %s40, 0
      %p697 = por %p695, %p696
      %p698 = scmp.ne.s32.totalorder %s684, %s685
      %p699 = scmp.eq.s32.totalorder %s41, 3
      %p700 = por %p698, %p699
      %p702 = scmp.ne.s32.totalorder %s685, %s701
      %p703 = scmp.eq.s32.totalorder %s41, 0
      %p704 = por %p702, %p703
      %s705 = ssub.s32 %s43, %s50
      %p706 = scmp.eq.s32.totalorder %s705, 0
      %s708 = sadd.s32 %s707, 1
      %s709 = scalar_select %p706, %s707, %s708
      %p712 = pneg %p706
      %p713 = scmp.eq.s32.totalorder %s35, 3
      %p714 = por %p712, %p713
      %p715 = scmp.ne.s32.totalorder %s707, %s710
      %p716 = scmp.eq.s32.totalorder %s35, 0
      %p717 = por %p715, %p716
      %p718 = scmp.ne.s32.totalorder %s707, %s710
      %p719 = scmp.eq.s32.totalorder %s40, 3
      %p720 = por %p718, %p719
      %p721 = scmp.ne.s32.totalorder %s710, %s711
      %p722 = scmp.eq.s32.totalorder %s40, 0
      %p723 = por %p721, %p722
      %p724 = scmp.ne.s32.totalorder %s710, %s711
      %p725 = scmp.eq.s32.totalorder %s41, 3
      %p726 = por %p724, %p725
      %p728 = scmp.ne.s32.totalorder %s711, %s727
      %p729 = scmp.eq.s32.totalorder %s41, 0
      %p730 = por %p728, %p729
      %s731 = ssub.s32 %s42, %s54
      %p732 = scmp.eq.s32.totalorder %s731, 0
      %s734 = sadd.s32 %s733, 1
      %s735 = scalar_select %p732, %s733, %s734
      %p738 = pneg %p732
      %p739 = scmp.eq.s32.totalorder %s35, 3
      %p740 = por %p738, %p739
      %p741 = scmp.ne.s32.totalorder %s733, %s736
      %p742 = scmp.eq.s32.totalorder %s35, 0
      %p743 = por %p741, %p742
      %p744 = scmp.ne.s32.totalorder %s733, %s736
      %p745 = scmp.eq.s32.totalorder %s40, 3
      %p746 = por %p744, %p745
      %p747 = scmp.ne.s32.totalorder %s736, %s737
      %p748 = scmp.eq.s32.totalorder %s40, 0
      %p749 = por %p747, %p748
      %p750 = scmp.ne.s32.totalorder %s736, %s737
      %p751 = scmp.eq.s32.totalorder %s41, 3
      %p752 = por %p750, %p751
      %p754 = scmp.ne.s32.totalorder %s737, %s753
      %p755 = scmp.eq.s32.totalorder %s41, 0
      %p756 = por %p754, %p755
      %p757 = scmp.le.s32.totalorder 1, %s35
      %p758 = scmp.lt.s32.totalorder %s35, 5
      %p759 = pnand %p757, %p758
      %p760 = pneg %p759
      // Predicated region
      $region9: #{estiformer_encoder_forward.1} parent=5 // pred_check
        _
      $region10: #{estiformer_encoder_forward.1} parent=5 // pred_check_branch
        %762 = sbr.rel (%p759) target = $region12
      $region11: #{estiformer_encoder_forward.1} parent=5 // pred_region
        %s763 = ssub.s32 %s35, 1
      $region12: #{estiformer_encoder_forward.1} parent=5 // pred_fallthru
        _
      %p764 = scmp.lt.s32.totalorder %s35, 4
      // Predicated region
      $region13: #{estiformer_encoder_forward.1} parent=5 // pred_check
        %p765 = pneg %p764
      $region14: #{estiformer_encoder_forward.1} parent=5 // pred_check_branch
        %767 = sbr.rel (%p765) target = $region16
      $region15: #{estiformer_encoder_forward.1} parent=5 // pred_region
        // Predicated region
        $region17: #{estiformer_encoder_forward.1} parent=15 // pred_check
          %p768 = pneg %p67
        $region18: #{estiformer_encoder_forward.1} parent=15 // pred_check_branch
          %770 = sbr.rel (%p768) target = $region20
        $region19: #{estiformer_encoder_forward.1} parent=15 // pred_region
          %p771 = scmp.lt.s32.totalorder %s42, 1
          %s772 = scalar_select %p771, %s42, 1
          %s773 = smul.addr %s772, 2
          %s774 = smul.addr %s773, 8
          %s775 = scalar_lea.vmem %s0, %s774
        $region20: #{estiformer_encoder_forward.1} parent=15 // pred_fallthru
          _
        // Predicated region
        $region21: #{estiformer_encoder_forward.1} parent=15 // pred_check
          %p776 = pneg %p93
        $region22: #{estiformer_encoder_forward.1} parent=15 // pred_check_branch
          %778 = sbr.rel (%p776) target = $region24
        $region23: #{estiformer_encoder_forward.1} parent=15 // pred_region
          %p779 = scmp.lt.s32.totalorder %s43, 1
          %s780 = scalar_select %p779, %s43, 1
          %s781 = smul.addr %s780, 8
          %s782 = scalar_lea.vmem %s1, %s781
        $region24: #{estiformer_encoder_forward.1} parent=15 // pred_fallthru
          _
        // Predicated region
        $region25: #{estiformer_encoder_forward.1} parent=15 // pred_check
          %p783 = pneg %p119
        $region26: #{estiformer_encoder_forward.1} parent=15 // pred_check_branch
          %785 = sbr.rel (%p783) target = $region28
        $region27: #{estiformer_encoder_forward.1} parent=15 // pred_region
          %p786 = scmp.lt.s32.totalorder %s43, 1
          %s787 = scalar_select %p786, %s43, 1
          %s788 = scalar_lea.vmem %s2, %s787
        $region28: #{estiformer_encoder_forward.1} parent=15 // pred_fallthru
          _
        // Predicated region
        $region29: #{estiformer_encoder_forward.1} parent=15 // pred_check
          %p789 = pneg %p145
        $region30: #{estiformer_encoder_forward.1} parent=15 // pred_check_branch
          %791 = sbr.rel (%p789) target = $region32
        $region31: #{estiformer_encoder_forward.1} parent=15 // pred_region
          %p792 = scmp.lt.s32.totalorder %s43, 1
          %s793 = scalar_select %p792, %s43, 1
          %s794 = scalar_lea.vmem %s3, %s793
        $region32: #{estiformer_encoder_forward.1} parent=15 // pred_fallthru
          _
        // Predicated region
        $region33: #{estiformer_encoder_forward.1} parent=15 // pred_check
          %p795 = pneg %p171
        $region34: #{estiformer_encoder_forward.1} parent=15 // pred_check_branch
          %797 = sbr.rel (%p795) target = $region36
        $region35: #{estiformer_encoder_forward.1} parent=15 // pred_region
          %p798 = scmp.lt.s32.totalorder %s43, 1
          %s799 = scalar_select %p798, %s43, 1
          %s800 = smul.addr %s799, 16
          %s801 = smul.addr %s800, 4
          %s802 = scalar_lea.vmem %s4, %s801
        $region36: #{estiformer_encoder_forward.1} parent=15 // pred_fallthru
          _
        // Predicated region
        $region37: #{estiformer_encoder_forward.1} parent=15 // pred_check
          %p803 = pneg %p197
        $region38: #{estiformer_encoder_forward.1} parent=15 // pred_check_branch
          %805 = sbr.rel (%p803) target = $region40
        $region39: #{estiformer_encoder_forward.1} parent=15 // pred_region
          %p806 = scmp.lt.s32.totalorder %s43, 1
          %s807 = scalar_select %p806, %s43, 1
          %s808 = smul.addr %s807, 4
          %s809 = scalar_lea.vmem %s5, %s808
        $region40: #{estiformer_encoder_forward.1} parent=15 // pred_fallthru
          _
        // Predicated region
        $region41: #{estiformer_encoder_forward.1} parent=15 // pred_check
          %p810 = pneg %p223
        $region42: #{estiformer_encoder_forward.1} parent=15 // pred_check_branch
          %812 = sbr.rel (%p810) target = $region44
        $region43: #{estiformer_encoder_forward.1} parent=15 // pred_region
          %p813 = scmp.lt.s32.totalorder %s43, 1
          %s814 = scalar_select %p813, %s43, 1
          %s815 = smul.addr %s814, 16
          %s816 = smul.addr %s815, 4
          %s817 = scalar_lea.vmem %s6, %s816
        $region44: #{estiformer_encoder_forward.1} parent=15 // pred_fallthru
          _
        // Predicated region
        $region45: #{estiformer_encoder_forward.1} parent=15 // pred_check
          %p818 = pneg %p249
        $region46: #{estiformer_encoder_forward.1} parent=15 // pred_check_branch
          %820 = sbr.rel (%p818) target = $region48
        $region47: #{estiformer_encoder_forward.1} parent=15 // pred_region
          %p821 = scmp.lt.s32.totalorder %s43, 1
          %s822 = scalar_select %p821, %s43, 1
          %s823 = smul.addr %s822, 4
          %s824 = scalar_lea.vmem %s7, %s823
        $region48: #{estiformer_encoder_forward.1} parent=15 // pred_fallthru
          _
        // Predicated region
        $region49: #{estiformer_encoder_forward.1} parent=15 // pred_check
          %p825 = pneg %p275
        $region50: #{estiformer_encoder_forward.1} parent=15 // pred_check_branch
          %827 = sbr.rel (%p825) target = $region52
        $region51: #{estiformer_encoder_forward.1} parent=15 // pred_region
          %p828 = scmp.lt.s32.totalorder %s43, 1
          %s829 = scalar_select %p828, %s43, 1
          %s830 = smul.addr %s829, 16
          %s831 = smul.addr %s830, 4
          %s832 = scalar_lea.vmem %s8, %s831
        $region52: #{estiformer_encoder_forward.1} parent=15 // pred_fallthru
          _
        // Predicated region
        $region53: #{estiformer_encoder_forward.1} parent=15 // pred_check
          %p833 = pneg %p301
        $region54: #{estiformer_encoder_forward.1} parent=15 // pred_check_branch
          %835 = sbr.rel (%p833) target = $region56
        $region55: #{estiformer_encoder_forward.1} parent=15 // pred_region
          %p836 = scmp.lt.s32.totalorder %s43, 1
          %s837 = scalar_select %p836, %s43, 1
          %s838 = smul.addr %s837, 4
          %s839 = scalar_lea.vmem %s9, %s838
        $region56: #{estiformer_encoder_forward.1} parent=15 // pred_fallthru
          _
        // Predicated region
        $region57: #{estiformer_encoder_forward.1} parent=15 // pred_check
          %p840 = pneg %p327
        $region58: #{estiformer_encoder_forward.1} parent=15 // pred_check_branch
          %842 = sbr.rel (%p840) target = $region60
        $region59: #{estiformer_encoder_forward.1} parent=15 // pred_region
          %p843 = scmp.lt.s32.totalorder %s43, 1
          %s844 = scalar_select %p843, %s43, 1
          %s845 = smul.addr %s844, 4
          %s846 = smul.addr %s845, 4
          %s847 = scalar_lea.vmem %s10, %s846
        $region60: #{estiformer_encoder_forward.1} parent=15 // pred_fallthru
          _
        // Predicated region
        $region61: #{estiformer_encoder_forward.1} parent=15 // pred_check
          %p848 = pneg %p353
        $region62: #{estiformer_encoder_forward.1} parent=15 // pred_check_branch
          %850 = sbr.rel (%p848) target = $region64
        $region63: #{estiformer_encoder_forward.1} parent=15 // pred_region
          %p851 = scmp.lt.s32.totalorder %s43, 1
          %s852 = scalar_select %p851, %s43, 1
          %s853 = scalar_lea.vmem %s11, %s852
        $region64: #{estiformer_encoder_forward.1} parent=15 // pred_fallthru
          _
        // Predicated region
        $region65: #{estiformer_encoder_forward.1} parent=15 // pred_check
          %p854 = pneg %p379
        $region66: #{estiformer_encoder_forward.1} parent=15 // pred_check_branch
          %856 = sbr.rel (%p854) target = $region68
        $region67: #{estiformer_encoder_forward.1} parent=15 // pred_region
          %p857 = scmp.lt.s32.totalorder %s43, 1
          %s858 = scalar_select %p857, %s43, 1
          %s859 = smul.addr %s858, 16
          %s860 = smul.addr %s859, 4
          %s861 = scalar_lea.vmem %s12, %s860
        $region68: #{estiformer_encoder_forward.1} parent=15 // pred_fallthru
          _
        // Predicated region
        $region69: #{estiformer_encoder_forward.1} parent=15 // pred_check
          %p862 = pneg %p405
        $region70: #{estiformer_encoder_forward.1} parent=15 // pred_check_branch
          %864 = sbr.rel (%p862) target = $region72
        $region71: #{estiformer_encoder_forward.1} parent=15 // pred_region
          %p865 = scmp.lt.s32.totalorder %s43, 1
          %s866 = scalar_select %p865, %s43, 1
          %s867 = smul.addr %s866, 4
          %s868 = scalar_lea.vmem %s13, %s867
        $region72: #{estiformer_encoder_forward.1} parent=15 // pred_fallthru
          _
        // Predicated region
        $region73: #{estiformer_encoder_forward.1} parent=15 // pred_check
          %p869 = pneg %p431
        $region74: #{estiformer_encoder_forward.1} parent=15 // pred_check_branch
          %871 = sbr.rel (%p869) target = $region76
        $region75: #{estiformer_encoder_forward.1} parent=15 // pred_region
          %p872 = scmp.lt.s32.totalorder %s43, 1
          %s873 = scalar_select %p872, %s43, 1
          %s874 = smul.addr %s873, 16
          %s875 = smul.addr %s874, 4
          %s876 = scalar_lea.vmem %s14, %s875
        $region76: #{estiformer_encoder_forward.1} parent=15 // pred_fallthru
          _
        // Predicated region
        $region77: #{estiformer_encoder_forward.1} parent=15 // pred_check
          %p877 = pneg %p457
        $region78: #{estiformer_encoder_forward.1} parent=15 // pred_check_branch
          %879 = sbr.rel (%p877) target = $region80
        $region79: #{estiformer_encoder_forward.1} parent=15 // pred_region
          %p880 = scmp.lt.s32.totalorder %s43, 1
          %s881 = scalar_select %p880, %s43, 1
          %s882 = smul.addr %s881, 4
          %s883 = scalar_lea.vmem %s15, %s882
        $region80: #{estiformer_encoder_forward.1} parent=15 // pred_fallthru
          _
        // Predicated region
        $region81: #{estiformer_encoder_forward.1} parent=15 // pred_check
          %p884 = pneg %p483
        $region82: #{estiformer_encoder_forward.1} parent=15 // pred_check_branch
          %886 = sbr.rel (%p884) target = $region84
        $region83: #{estiformer_encoder_forward.1} parent=15 // pred_region
          %p887 = scmp.lt.s32.totalorder %s43, 1
          %s888 = scalar_select %p887, %s43, 1
          %s889 = smul.addr %s888, 16
          %s890 = smul.addr %s889, 4
          %s891 = scalar_lea.vmem %s16, %s890
        $region84: #{estiformer_encoder_forward.1} parent=15 // pred_fallthru
          _
        // Predicated region
        $region85: #{estiformer_encoder_forward.1} parent=15 // pred_check
          %p892 = pneg %p509
        $region86: #{estiformer_encoder_forward.1} parent=15 // pred_check_branch
          %894 = sbr.rel (%p892) target = $region88
        $region87: #{estiformer_encoder_forward.1} parent=15 // pred_region
          %p895 = scmp.lt.s32.totalorder %s43, 1
          %s896 = scalar_select %p895, %s43, 1
          %s897 = smul.addr %s896, 4
          %s898 = scalar_lea.vmem %s17, %s897
        $region88: #{estiformer_encoder_forward.1} parent=15 // pred_fallthru
          _
        // Predicated region
        $region89: #{estiformer_encoder_forward.1} parent=15 // pred_check
          %p899 = pneg %p535
        $region90: #{estiformer_encoder_forward.1} parent=15 // pred_check_branch
          %901 = sbr.rel (%p899) target = $region92
        $region91: #{estiformer_encoder_forward.1} parent=15 // pred_region
          %p902 = scmp.lt.s32.totalorder %s43, 1
          %s903 = scalar_select %p902, %s43, 1
          %s904 = smul.addr %s903, 4
          %s905 = smul.addr %s904, 4
          %s906 = scalar_lea.vmem %s18, %s905
        $region92: #{estiformer_encoder_forward.1} parent=15 // pred_fallthru
          _
        // Predicated region
        $region93: #{estiformer_encoder_forward.1} parent=15 // pred_check
          %p907 = pneg %p561
        $region94: #{estiformer_encoder_forward.1} parent=15 // pred_check_branch
          %909 = sbr.rel (%p907) target = $region96
        $region95: #{estiformer_encoder_forward.1} parent=15 // pred_region
          %p910 = scmp.lt.s32.totalorder %s43, 1
          %s911 = scalar_select %p910, %s43, 1
          %s912 = scalar_lea.vmem %s19, %s911
        $region96: #{estiformer_encoder_forward.1} parent=15 // pred_fallthru
          _
        // Predicated region
        $region97: #{estiformer_encoder_forward.1} parent=15 // pred_check
          %p913 = pneg %p587
        $region98: #{estiformer_encoder_forward.1} parent=15 // pred_check_branch
          %915 = sbr.rel (%p913) target = $region100
        $region99: #{estiformer_encoder_forward.1} parent=15 // pred_region
          %p916 = scmp.lt.s32.totalorder %s43, 1
          %s917 = scalar_select %p916, %s43, 1
          %s918 = scalar_lea.vmem %s20, %s917
        $region100: #{estiformer_encoder_forward.1} parent=15 // pred_fallthru
          _
        // Predicated region
        $region101: #{estiformer_encoder_forward.1} parent=15 // pred_check
          %p919 = pneg %p613
        $region102: #{estiformer_encoder_forward.1} parent=15 // pred_check_branch
          %921 = sbr.rel (%p919) target = $region104
        $region103: #{estiformer_encoder_forward.1} parent=15 // pred_region
          %p922 = scmp.lt.s32.totalorder %s43, 1
          %s923 = scalar_select %p922, %s43, 1
          %s924 = scalar_lea.vmem %s21, %s923
        $region104: #{estiformer_encoder_forward.1} parent=15 // pred_fallthru
          _
        // Predicated region
        $region105: #{estiformer_encoder_forward.1} parent=15 // pred_check
          %p925 = pneg %p639
        $region106: #{estiformer_encoder_forward.1} parent=15 // pred_check_branch
          %927 = sbr.rel (%p925) target = $region108
        $region107: #{estiformer_encoder_forward.1} parent=15 // pred_region
          %p928 = scmp.lt.s32.totalorder %s43, 1
          %s929 = scalar_select %p928, %s43, 1
          %s930 = smul.addr %s929, 4
          %s931 = smul.addr %s930, 4
          %s932 = scalar_lea.vmem %s22, %s931
        $region108: #{estiformer_encoder_forward.1} parent=15 // pred_fallthru
          _
        // Predicated region
        $region109: #{estiformer_encoder_forward.1} parent=15 // pred_check
          %p933 = pneg %p665
        $region110: #{estiformer_encoder_forward.1} parent=15 // pred_check_branch
          %935 = sbr.rel (%p933) target = $region112
        $region111: #{estiformer_encoder_forward.1} parent=15 // pred_region
          %p936 = scmp.lt.s32.totalorder %s43, 1
          %s937 = scalar_select %p936, %s43, 1
          %s938 = scalar_lea.vmem %s23, %s937
        $region112: #{estiformer_encoder_forward.1} parent=15 // pred_fallthru
          _
        // Predicated region
        $region113: #{estiformer_encoder_forward.1} parent=15 // pred_check
          %p939 = pneg %p691
        $region114: #{estiformer_encoder_forward.1} parent=15 // pred_check_branch
          %941 = sbr.rel (%p939) target = $region116
        $region115: #{estiformer_encoder_forward.1} parent=15 // pred_region
          %p942 = scmp.lt.s32.totalorder %s43, 1
          %s943 = scalar_select %p942, %s43, 1
          %s944 = smul.addr %s943, 8
          %s945 = smul.addr %s944, 4
          %s946 = scalar_lea.vmem %s24, %s945
        $region116: #{estiformer_encoder_forward.1} parent=15 // pred_fallthru
          _
        // Predicated region
        $region117: #{estiformer_encoder_forward.1} parent=15 // pred_check
          %p947 = pneg %p717
        $region118: #{estiformer_encoder_forward.1} parent=15 // pred_check_branch
          %949 = sbr.rel (%p947) target = $region120
        $region119: #{estiformer_encoder_forward.1} parent=15 // pred_region
          %p950 = scmp.lt.s32.totalorder %s43, 1
          %s951 = scalar_select %p950, %s43, 1
          %s952 = scalar_lea.vmem %s25, %s951
        $region120: #{estiformer_encoder_forward.1} parent=15 // pred_fallthru
          _
      $region16: #{estiformer_encoder_forward.1} parent=5 // pred_fallthru
        _
      %p953 = scmp.le.s32.totalorder 1, %s35
      %p954 = scmp.lt.s32.totalorder %s35, 5
      %p955 = pnand %p953, %p954
      %p956 = pneg %p955
      // Predicated region
      $region121: #{estiformer_encoder_forward.1} parent=5 // pred_check
        _
      $region122: #{estiformer_encoder_forward.1} parent=5 // pred_check_branch
        %958 = sbr.rel (%p955) target = $region124
      $region123: #{estiformer_encoder_forward.1} parent=5 // pred_region
        %s959 = ssub.s32 %s35, 1
        %p960 = scmp.lt.s32.totalorder %s44, 1
        %s961 = scalar_select %p960, %s44, 1
        %s962 = smul.addr %s961, 2
        %s963 = smul.addr %s962, 8
        %s964 = scalar_lea.vmem %s0, %s963
        %p965 = pneg %p73
        %p966 = pneg %p70
        %p967 = scmp.lt.s32.totalorder %s45, 1
        %s968 = scalar_select %p967, %s45, 1
        %s969 = smul.addr %s968, 8
        %s970 = scalar_lea.vmem %s1, %s969
        %p971 = pneg %p99
        %p972 = pneg %p96
        %p973 = scmp.lt.s32.totalorder %s45, 1
        %s974 = scalar_select %p973, %s45, 1
        %s975 = scalar_lea.vmem %s2, %s974
        %p976 = pneg %p125
        %p977 = pneg %p122
        %p978 = scmp.lt.s32.totalorder %s45, 1
        %s979 = scalar_select %p978, %s45, 1
        %s980 = scalar_lea.vmem %s3, %s979
        %p981 = pneg %p151
        %p982 = pneg %p148
        %p983 = scmp.lt.s32.totalorder %s45, 1
        %s984 = scalar_select %p983, %s45, 1
        %s985 = smul.addr %s984, 16
        %s986 = smul.addr %s985, 4
        %s987 = scalar_lea.vmem %s4, %s986
        %p988 = pneg %p177
        %p989 = pneg %p174
        %p990 = scmp.lt.s32.totalorder %s45, 1
        %s991 = scalar_select %p990, %s45, 1
        %s992 = smul.addr %s991, 4
        %s993 = scalar_lea.vmem %s5, %s992
        %p994 = pneg %p203
        %p995 = pneg %p200
        %p996 = scmp.lt.s32.totalorder %s45, 1
        %s997 = scalar_select %p996, %s45, 1
        %s998 = smul.addr %s997, 16
        %s999 = smul.addr %s998, 4
        %s1000 = scalar_lea.vmem %s6, %s999
        %p1001 = pneg %p229
        %p1002 = pneg %p226
        %p1003 = scmp.lt.s32.totalorder %s45, 1
        %s1004 = scalar_select %p1003, %s45, 1
        %s1005 = smul.addr %s1004, 4
        %s1006 = scalar_lea.vmem %s7, %s1005
        %p1007 = pneg %p255
        %p1008 = pneg %p252
        %p1009 = scmp.lt.s32.totalorder %s45, 1
        %s1010 = scalar_select %p1009, %s45, 1
        %s1011 = smul.addr %s1010, 16
        %s1012 = smul.addr %s1011, 4
        %s1013 = scalar_lea.vmem %s8, %s1012
        %p1014 = pneg %p281
        %p1015 = pneg %p278
        %p1016 = scmp.lt.s32.totalorder %s45, 1
        %s1017 = scalar_select %p1016, %s45, 1
        %s1018 = smul.addr %s1017, 4
        %s1019 = scalar_lea.vmem %s9, %s1018
        %p1020 = pneg %p307
        %p1021 = pneg %p304
        %p1022 = scmp.lt.s32.totalorder %s45, 1
        %s1023 = scalar_select %p1022, %s45, 1
        %s1024 = smul.addr %s1023, 4
        %s1025 = smul.addr %s1024, 4
        %s1026 = scalar_lea.vmem %s10, %s1025
        %p1027 = pneg %p333
        %p1028 = pneg %p330
        %p1029 = scmp.lt.s32.totalorder %s45, 1
        %s1030 = scalar_select %p1029, %s45, 1
        %s1031 = scalar_lea.vmem %s11, %s1030
        %p1032 = pneg %p359
        %p1033 = pneg %p356
        %p1034 = scmp.lt.s32.totalorder %s45, 1
        %s1035 = scalar_select %p1034, %s45, 1
        %s1036 = smul.addr %s1035, 16
        %s1037 = smul.addr %s1036, 4
        %s1038 = scalar_lea.vmem %s12, %s1037
        %p1039 = pneg %p385
        %p1040 = pneg %p382
        %p1041 = scmp.lt.s32.totalorder %s45, 1
        %s1042 = scalar_select %p1041, %s45, 1
        %s1043 = smul.addr %s1042, 4
        %s1044 = scalar_lea.vmem %s13, %s1043
        %p1045 = pneg %p411
        %p1046 = pneg %p408
        %p1047 = scmp.lt.s32.totalorder %s45, 1
        %s1048 = scalar_select %p1047, %s45, 1
        %s1049 = smul.addr %s1048, 16
        %s1050 = smul.addr %s1049, 4
        %s1051 = scalar_lea.vmem %s14, %s1050
        %p1052 = pneg %p437
        %p1053 = pneg %p434
        %p1054 = scmp.lt.s32.totalorder %s45, 1
        %s1055 = scalar_select %p1054, %s45, 1
        %s1056 = smul.addr %s1055, 4
        %s1057 = scalar_lea.vmem %s15, %s1056
        %p1058 = pneg %p463
        %p1059 = pneg %p460
        %p1060 = scmp.lt.s32.totalorder %s45, 1
        %s1061 = scalar_select %p1060, %s45, 1
        %s1062 = smul.addr %s1061, 16
        %s1063 = smul.addr %s1062, 4
        %s1064 = scalar_lea.vmem %s16, %s1063
        %p1065 = pneg %p489
        %p1066 = pneg %p486
        %p1067 = scmp.lt.s32.totalorder %s45, 1
        %s1068 = scalar_select %p1067, %s45, 1
        %s1069 = smul.addr %s1068, 4
        %s1070 = scalar_lea.vmem %s17, %s1069
        %p1071 = pneg %p515
        %p1072 = pneg %p512
        %p1073 = scmp.lt.s32.totalorder %s45, 1
        %s1074 = scalar_select %p1073, %s45, 1
        %s1075 = smul.addr %s1074, 4
        %s1076 = smul.addr %s1075, 4
        %s1077 = scalar_lea.vmem %s18, %s1076
        %p1078 = pneg %p541
        %p1079 = pneg %p538
        %p1080 = scmp.lt.s32.totalorder %s45, 1
        %s1081 = scalar_select %p1080, %s45, 1
        %s1082 = scalar_lea.vmem %s19, %s1081
        %p1083 = pneg %p567
        %p1084 = pneg %p564
        %p1085 = scmp.lt.s32.totalorder %s45, 1
        %s1086 = scalar_select %p1085, %s45, 1
        %s1087 = scalar_lea.vmem %s20, %s1086
        %p1088 = pneg %p593
        %p1089 = pneg %p590
        %p1090 = scmp.lt.s32.totalorder %s45, 1
        %s1091 = scalar_select %p1090, %s45, 1
        %s1092 = scalar_lea.vmem %s21, %s1091
        %p1093 = pneg %p619
        %p1094 = pneg %p616
        %p1095 = scmp.lt.s32.totalorder %s45, 1
        %s1096 = scalar_select %p1095, %s45, 1
        %s1097 = smul.addr %s1096, 4
        %s1098 = smul.addr %s1097, 4
        %s1099 = scalar_lea.vmem %s22, %s1098
        %p1100 = pneg %p645
        %p1101 = pneg %p642
        %p1102 = scmp.lt.s32.totalorder %s45, 1
        %s1103 = scalar_select %p1102, %s45, 1
        %s1104 = scalar_lea.vmem %s23, %s1103
        %p1105 = pneg %p671
        %p1106 = pneg %p668
        %p1107 = scmp.lt.s32.totalorder %s45, 1
        %s1108 = scalar_select %p1107, %s45, 1
        %s1109 = smul.addr %s1108, 8
        %s1110 = smul.addr %s1109, 4
        %s1111 = scalar_lea.vmem %s24, %s1110
        %p1112 = pneg %p697
        %p1113 = pneg %p694
        %p1114 = scmp.lt.s32.totalorder %s45, 1
        %s1115 = scalar_select %p1114, %s45, 1
        %s1116 = scalar_lea.vmem %s25, %s1115
        %p1117 = pneg %p723
        %p1118 = pneg %p720
        %p1119 = pneg %p749
        %p1120 = pneg %p746
        %s1121 = sand.u32 %s736, 1
        %s1122 = scalar_lea.sflag [#allocation4], %s1121
        %s1123 = sand.u32 %s736, 1
        %s1124 = smul.addr %s1123, 16
        %s1125 = scalar_lea.vmem [#allocation3], %s1124
        %p1126 = scmp.lt.s32.totalorder %s44, 1
        %s1127 = scalar_select %p1126, %s44, 1
        %s1128 = smul.addr %s1127, 2
        %s1129 = smul.addr %s1128, 8
        %s1130 = scalar_lea.vmem %s0, %s1129
        %p1131 = scmp.lt.s32.totalorder %s45, 1
        %s1132 = scalar_select %p1131, %s45, 1
        %s1133 = smul.addr %s1132, 8
        %s1134 = scalar_lea.vmem %s1, %s1133
        %p1135 = scmp.lt.s32.totalorder %s45, 1
        %s1136 = scalar_select %p1135, %s45, 1
        %s1137 = scalar_lea.vmem %s2, %s1136
        %p1138 = scmp.lt.s32.totalorder %s45, 1
        %s1139 = scalar_select %p1138, %s45, 1
        %s1140 = scalar_lea.vmem %s3, %s1139
        %p1141 = scmp.lt.s32.totalorder %s45, 1
        %s1142 = scalar_select %p1141, %s45, 1
        %s1143 = smul.addr %s1142, 16
        %s1144 = smul.addr %s1143, 4
        %s1145 = scalar_lea.vmem %s4, %s1144
        %p1146 = scmp.lt.s32.totalorder %s45, 1
        %s1147 = scalar_select %p1146, %s45, 1
        %s1148 = smul.addr %s1147, 4
        %s1149 = scalar_lea.vmem %s5, %s1148
        %p1150 = scmp.lt.s32.totalorder %s45, 1
        %s1151 = scalar_select %p1150, %s45, 1
        %s1152 = smul.addr %s1151, 16
        %s1153 = smul.addr %s1152, 4
        %s1154 = scalar_lea.vmem %s6, %s1153
        %p1155 = scmp.lt.s32.totalorder %s45, 1
        %s1156 = scalar_select %p1155, %s45, 1
        %s1157 = smul.addr %s1156, 4
        %s1158 = scalar_lea.vmem %s7, %s1157
        %p1159 = scmp.lt.s32.totalorder %s45, 1
        %s1160 = scalar_select %p1159, %s45, 1
        %s1161 = smul.addr %s1160, 16
        %s1162 = smul.addr %s1161, 4
        %s1163 = scalar_lea.vmem %s8, %s1162
        %p1164 = scmp.lt.s32.totalorder %s45, 1
        %s1165 = scalar_select %p1164, %s45, 1
        %s1166 = smul.addr %s1165, 4
        %s1167 = scalar_lea.vmem %s9, %s1166
        %p1168 = scmp.lt.s32.totalorder %s45, 1
        %s1169 = scalar_select %p1168, %s45, 1
        %s1170 = smul.addr %s1169, 4
        %s1171 = smul.addr %s1170, 4
        %s1172 = scalar_lea.vmem %s10, %s1171
        %p1173 = scmp.lt.s32.totalorder %s45, 1
        %s1174 = scalar_select %p1173, %s45, 1
        %s1175 = scalar_lea.vmem %s11, %s1174
        %p1176 = scmp.lt.s32.totalorder %s45, 1
        %s1177 = scalar_select %p1176, %s45, 1
        %s1178 = smul.addr %s1177, 16
        %s1179 = smul.addr %s1178, 4
        %s1180 = scalar_lea.vmem %s12, %s1179
        %p1181 = scmp.lt.s32.totalorder %s45, 1
        %s1182 = scalar_select %p1181, %s45, 1
        %s1183 = smul.addr %s1182, 4
        %s1184 = scalar_lea.vmem %s13, %s1183
        %p1185 = scmp.lt.s32.totalorder %s45, 1
        %s1186 = scalar_select %p1185, %s45, 1
        %s1187 = smul.addr %s1186, 16
        %s1188 = smul.addr %s1187, 4
        %s1189 = scalar_lea.vmem %s14, %s1188
        %p1190 = scmp.lt.s32.totalorder %s45, 1
        %s1191 = scalar_select %p1190, %s45, 1
        %s1192 = smul.addr %s1191, 4
        %s1193 = scalar_lea.vmem %s15, %s1192
        %p1194 = scmp.lt.s32.totalorder %s45, 1
        %s1195 = scalar_select %p1194, %s45, 1
        %s1196 = smul.addr %s1195, 16
        %s1197 = smul.addr %s1196, 4
        %s1198 = scalar_lea.vmem %s16, %s1197
        %p1199 = scmp.lt.s32.totalorder %s45, 1
        %s1200 = scalar_select %p1199, %s45, 1
        %s1201 = smul.addr %s1200, 4
        %s1202 = scalar_lea.vmem %s17, %s1201
        %p1203 = scmp.lt.s32.totalorder %s45, 1
        %s1204 = scalar_select %p1203, %s45, 1
        %s1205 = smul.addr %s1204, 4
        %s1206 = smul.addr %s1205, 4
        %s1207 = scalar_lea.vmem %s18, %s1206
        %p1208 = scmp.lt.s32.totalorder %s45, 1
        %s1209 = scalar_select %p1208, %s45, 1
        %s1210 = scalar_lea.vmem %s19, %s1209
        %p1211 = scmp.lt.s32.totalorder %s45, 1
        %s1212 = scalar_select %p1211, %s45, 1
        %s1213 = scalar_lea.vmem %s20, %s1212
        %p1214 = scmp.lt.s32.totalorder %s45, 1
        %s1215 = scalar_select %p1214, %s45, 1
        %s1216 = scalar_lea.vmem %s21, %s1215
        %p1217 = scmp.lt.s32.totalorder %s45, 1
        %s1218 = scalar_select %p1217, %s45, 1
        %s1219 = smul.addr %s1218, 4
        %s1220 = smul.addr %s1219, 4
        %s1221 = scalar_lea.vmem %s22, %s1220
        %p1222 = scmp.lt.s32.totalorder %s45, 1
        %s1223 = scalar_select %p1222, %s45, 1
        %s1224 = scalar_lea.vmem %s23, %s1223
        %p1225 = scmp.lt.s32.totalorder %s45, 1
        %s1226 = scalar_select %p1225, %s45, 1
        %s1227 = smul.addr %s1226, 8
        %s1228 = smul.addr %s1227, 4
        %s1229 = scalar_lea.vmem %s24, %s1228
        %p1230 = scmp.lt.s32.totalorder %s45, 1
        %s1231 = scalar_select %p1230, %s45, 1
        %s1232 = scalar_lea.vmem %s25, %s1231
        %p1234 = scmp.eq.s32.totalorder %s45, 0
        // Predicated region
        $region125: #{estiformer_encoder_forward.1} parent=123 // pred_check
          %p1235 = pneg %p1234
        $region126: #{estiformer_encoder_forward.1} parent=123 // pred_check_branch
          %1237 = sbr.rel (%p1235) target = $region128
        $region127: #{estiformer_encoder_forward.1} parent=123 // pred_region
          %v1238 = vld [vmem:[%s1130] sm:$0xff]
          %v1239 = vld [vmem:[%s1130 + $0x8] sm:$0xff]
          %vm1240 = vcmask 261120
          %1241 = vst.msk [vmem:[#allocation2] sm:$0xff] %vm1240, %v1238
          %1242 = vst.msk [vmem:[#allocation2 + $0x8] sm:$0xff] %vm1240, %v1239
        $region128: #{estiformer_encoder_forward.1} parent=123 // pred_fallthru
          _
        %v1243 = vld [vmem:[#allocation2] sm:$0xff]
        %v1244 = vld [vmem:[#allocation2 + $0x8] sm:$0xff]
        %v1245 = vld [vmem:[%s1137] sm:$0x1]
        %v1246 = vld [vmem:[%s1140] sm:$0x1]
        %vm1247 = vcmask 261120
        %v1248 = vsel %vm1247, %v1243, 0.0
        %1249 = vadd.xlane.f32.xlu0 %v1248
        %v1250 = vpop.xlane.xlu0 %1249
        %v1251 = vsel %vm1247, %v1244, 0.0
        %1252 = vadd.xlane.f32.xlu0 %v1251
        %v1253 = vpop.xlane.xlu0 %1252
        %v1254 = vrcp.pop 32.0
        %v1255 = vmul.f32 %v1250, %v1254
        %v1256 = vmul.f32 %v1253, %v1254
        %v1257 = vsub.f32 %v1243, %v1255
        %v1258 = vsub.f32 %v1244, %v1256
        %v1259 = vmul.f32 %v1257, %v1257
        %v1260 = vmul.f32 %v1258, %v1258
        %v1261 = vsel %vm1247, %v1259, 0.0
        %1262 = vadd.xlane.f32.xlu0 %v1261
        %v1263 = vpop.xlane.xlu0 %1262
        %v1264 = vsel %vm1247, %v1260, 0.0
        %1265 = vadd.xlane.f32.xlu0 %v1264
        %v1266 = vpop.xlane.xlu0 %1265
        %v1267 = vmul.f32 %v1263, %v1254
        %v1268 = vmul.f32 %v1266, %v1254
        %v1269 = vadd.f32 %v1267, 1e-05
        %v1270 = vadd.f32 %v1268, 1e-05
        %v1271 = vrsqrt.pop %v1269
        %v1272 = vrsqrt.pop %v1270
        %v1273 = vmul.f32 %v1257, %v1271
        %v1274 = vmul.f32 %v1258, %v1272
        %v1276 = vlaneseq
        %v1277 = vshrl.u32 %v1276, 7
        %v1278 = vsub.s32 0, %v1277
        %v1279 = vrot.slane %v1245, %v1278
        %v1281 = vmul.f32 %v1273, %v1279
        %v1282 = vmul.f32 %v1274, %v1279
        %v1284 = vlaneseq
        %v1285 = vshrl.u32 %v1284, 7
        %v1286 = vsub.s32 0, %v1285
        %v1287 = vrot.slane %v1246, %v1286
        %v1289 = vadd.f32 %v1281, %v1287
        %v1290 = vadd.f32 %v1282, %v1287
        %v1291 = vld [vmem:[%s1134] sm:$0xff]
        %v1292 = vld [vmem:[%s1145] sm:$0xf]
        %v1293 = vld [vmem:[%s1145 + $0x4] sm:$0xf]
        %v1294 = vld [vmem:[%s1145 + $0x8] sm:$0xf]
        %v1295 = vld [vmem:[%s1145 + $0xc] sm:$0xf]
        %v1296 = vld [vmem:[%s1154] sm:$0xf]
        %v1297 = vld [vmem:[%s1154 + $0x4] sm:$0xf]
        %v1298 = vld [vmem:[%s1154 + $0x8] sm:$0xf]
        %v1299 = vld [vmem:[%s1154 + $0xc] sm:$0xf]
        %v1300 = vld [vmem:[%s1163] sm:$0xf]
        %v1301 = vld [vmem:[%s1163 + $0x4] sm:$0xf]
        %v1302 = vld [vmem:[%s1163 + $0x8] sm:$0xf]
        %v1303 = vld [vmem:[%s1163 + $0xc] sm:$0xf]
        %v1304 = vld [vmem:[%s1172] sm:$0xf]
        %v1305 = vpack.c.bf16 %v1291, %v1291
        %v1306 = vld [vmem:[%s1149] sm:$0x1]
        %v1308 = vlaneseq
        %v1309 = vshrl.u32 %v1308, 7
        %v1310 = vsub.s32 0, %v1309
        %v1311 = vrot.slane %v1306, %v1310
        %v1317 = vunpack.c.l.b16 %v1292
        %v1318 = vunpack.c.l.b16 %v1293
        %v1319 = vunpack.c.l.b16 %v1294
        %v1320 = vunpack.c.l.b16 %v1295
        %v1321 = vpack.c.b16 %v1318, %v1317
        %v1322 = vpack.c.b16 %v1320, %v1319
        %v1326 = vsel %vm1247, %v1305, 0
        %1328 = vmatprep.subr.bf16.mxu0 0
        %1329 = vmatpush1.bf16.msra.mxu0 %v1321
        %1330 = vmatprep.subr.bf16.mxu0 0
        %1331 = vmatpush1.bf16.msra.mxu0 %v1322
        %1332 = vmatprep.subr.bf16.mxu0 0
        %1333 = vmatpush1.bf16.msra.mxu0 0
        %1334 = vmatprep.subr.bf16.mxu0 0
        %1335 = vmatpush1.bf16.msra.mxu0 0
        %1336 = vmatprep.subr.bf16.mxu0 0
        %1337 = vmatpush1.bf16.msra.mxu0 0
        %1338 = vmatprep.subr.bf16.mxu0 0
        %1339 = vmatpush1.bf16.msra.mxu0 0
        %1340 = vmatprep.subr.bf16.mxu0 0
        %1341 = vmatpush1.bf16.msra.mxu0 0
        %1342 = vmatprep.subr.bf16.mxu0 0
        %1343 = vmatpush1.bf16.msra.mxu0 0
        %1344 = vmatprep.subr.bf16.mxu0 0
        %1345 = vmatpush1.bf16.msra.mxu0 0
        %1346 = vmatprep.subr.bf16.mxu0 0
        %1347 = vmatpush1.bf16.msra.mxu0 0
        %1348 = vmatprep.subr.bf16.mxu0 0
        %1349 = vmatpush1.bf16.msra.mxu0 0
        %1350 = vmatprep.subr.bf16.mxu0 0
        %1351 = vmatpush1.bf16.msra.mxu0 0
        %1352 = vmatprep.subr.bf16.mxu0 0
        %1353 = vmatpush1.bf16.msra.mxu0 0
        %1354 = vmatprep.subr.bf16.mxu0 0
        %1355 = vmatpush1.bf16.msra.mxu0 0
        %1356 = vmatprep.subr.bf16.mxu0 0
        %1357 = vmatpush1.bf16.msra.mxu0 0
        %1358 = vmatprep.subr.bf16.mxu0 0
        %1359 = vmatpush1.bf16.msra.mxu0 0
        %1360 = vmatprep.mubr.bf16.mxu0 0
        %1361 = vmatmul.mubr.bf16.gmra.mrb[0].mxu0 %v1326
        %v1362 = vpop.f32.mrb[0].mxu0
        %v1363 = vadd.f32 %v1311, %v1362
        %v1364 = vpop.f32.mrb[0].mxu0
        %v1365 = vpop.f32.mrb[0].mxu0
        %v1366 = vpop.f32.mrb[0].mxu0
        %1367 = vdwg.mxu0
        %v1368 = vmul.f32 %v1363, 0.35355338
        %v1369 = vpack.c.bf16 %v1290, %v1289
        %v1370 = vld [vmem:[%s1158] sm:$0x1]
        %v1372 = vlaneseq
        %v1373 = vshrl.u32 %v1372, 7
        %v1374 = vsub.s32 0, %v1373
        %v1375 = vrot.slane %v1370, %v1374
        %v1381 = vunpack.c.l.b16 %v1296
        %v1382 = vunpack.c.l.b16 %v1297
        %v1383 = vunpack.c.l.b16 %v1298
        %v1384 = vunpack.c.l.b16 %v1299
        %v1385 = vpack.c.b16 %v1382, %v1381
        %v1386 = vpack.c.b16 %v1384, %v1383
        %v1390 = vsel %vm1247, %v1369, 0
        %1392 = vmatprep.subr.bf16.mxu0 0
        %1393 = vmatpush1.bf16.msra.mxu0 %v1385
        %1394 = vmatprep.subr.bf16.mxu0 0
        %1395 = vmatpush1.bf16.msra.mxu0 %v1386
        %1396 = vmatprep.subr.bf16.mxu0 0
        %1397 = vmatpush1.bf16.msra.mxu0 0
        %1398 = vmatprep.subr.bf16.mxu0 0
        %1399 = vmatpush1.bf16.msra.mxu0 0
        %1400 = vmatprep.subr.bf16.mxu0 0
        %1401 = vmatpush1.bf16.msra.mxu0 0
        %1402 = vmatprep.subr.bf16.mxu0 0
        %1403 = vmatpush1.bf16.msra.mxu0 0
        %1404 = vmatprep.subr.bf16.mxu0 0
        %1405 = vmatpush1.bf16.msra.mxu0 0
        %1406 = vmatprep.subr.bf16.mxu0 0
        %1407 = vmatpush1.bf16.msra.mxu0 0
        %1408 = vmatprep.subr.bf16.mxu0 0
        %1409 = vmatpush1.bf16.msra.mxu0 0
        %1410 = vmatprep.subr.bf16.mxu0 0
        %1411 = vmatpush1.bf16.msra.mxu0 0
        %1412 = vmatprep.subr.bf16.mxu0 0
        %1413 = vmatpush1.bf16.msra.mxu0 0
        %1414 = vmatprep.subr.bf16.mxu0 0
        %1415 = vmatpush1.bf16.msra.mxu0 0
        %1416 = vmatprep.subr.bf16.mxu0 0
        %1417 = vmatpush1.bf16.msra.mxu0 0
        %1418 = vmatprep.subr.bf16.mxu0 0
        %1419 = vmatpush1.bf16.msra.mxu0 0
        %1420 = vmatprep.subr.bf16.mxu0 0
        %1421 = vmatpush1.bf16.msra.mxu0 0
        %1422 = vmatprep.subr.bf16.mxu0 0
        %1423 = vmatpush1.bf16.msra.mxu0 0
        %1424 = vmatprep.mubr.bf16.mxu0 0
        %1425 = vmatmul.mubr.bf16.gmra.mrb[0].mxu0 %v1390
        %v1426 = vpop.f32.mrb[0].mxu0
        %v1427 = vadd.f32 %v1375, %v1426
        %v1428 = vpop.f32.mrb[0].mxu0
        %v1429 = vpop.f32.mrb[0].mxu0
        %v1430 = vadd.f32 %v1375, %v1429
        %v1431 = vpop.f32.mrb[0].mxu0
        %1432 = vdwg.mxu0
        %v1433 = vld [vmem:[%s1167] sm:$0x1]
        %v1435 = vlaneseq
        %v1436 = vshrl.u32 %v1435, 7
        %v1437 = vsub.s32 0, %v1436
        %v1438 = vrot.slane %v1433, %v1437
        %v1444 = vunpack.c.l.b16 %v1300
        %v1445 = vunpack.c.l.b16 %v1301
        %v1446 = vunpack.c.l.b16 %v1302
        %v1447 = vunpack.c.l.b16 %v1303
        %v1448 = vpack.c.b16 %v1445, %v1444
        %v1449 = vpack.c.b16 %v1447, %v1446
        %1452 = vmatprep.subr.bf16.mxu0 0
        %1453 = vmatpush1.bf16.msra.mxu0 %v1448
        %1454 = vmatprep.subr.bf16.mxu0 0
        %1455 = vmatpush1.bf16.msra.mxu0 %v1449
        %1456 = vmatprep.subr.bf16.mxu0 0
        %1457 = vmatpush1.bf16.msra.mxu0 0
        %1458 = vmatprep.subr.bf16.mxu0 0
        %1459 = vmatpush1.bf16.msra.mxu0 0
        %1460 = vmatprep.subr.bf16.mxu0 0
        %1461 = vmatpush1.bf16.msra.mxu0 0
        %1462 = vmatprep.subr.bf16.mxu0 0
        %1463 = vmatpush1.bf16.msra.mxu0 0
        %1464 = vmatprep.subr.bf16.mxu0 0
        %1465 = vmatpush1.bf16.msra.mxu0 0
        %1466 = vmatprep.subr.bf16.mxu0 0
        %1467 = vmatpush1.bf16.msra.mxu0 0
        %1468 = vmatprep.subr.bf16.mxu0 0
        %1469 = vmatpush1.bf16.msra.mxu0 0
        %1470 = vmatprep.subr.bf16.mxu0 0
        %1471 = vmatpush1.bf16.msra.mxu0 0
        %1472 = vmatprep.subr.bf16.mxu0 0
        %1473 = vmatpush1.bf16.msra.mxu0 0
        %1474 = vmatprep.subr.bf16.mxu0 0
        %1475 = vmatpush1.bf16.msra.mxu0 0
        %1476 = vmatprep.subr.bf16.mxu0 0
        %1477 = vmatpush1.bf16.msra.mxu0 0
        %1478 = vmatprep.subr.bf16.mxu0 0
        %1479 = vmatpush1.bf16.msra.mxu0 0
        %1480 = vmatprep.subr.bf16.mxu0 0
        %1481 = vmatpush1.bf16.msra.mxu0 0
        %1482 = vmatprep.subr.bf16.mxu0 0
        %1483 = vmatpush1.bf16.msra.mxu0 0
        %1484 = vmatprep.mubr.bf16.mxu0 0
        %1485 = vmatmul.mubr.bf16.gmra.mrb[0].mxu0 %v1390
        %v1486 = vpop.f32.mrb[0].mxu0
        %v1487 = vadd.f32 %v1438, %v1486
        %v1488 = vpop.f32.mrb[0].mxu0
        %v1489 = vpop.f32.mrb[0].mxu0
        %v1490 = vadd.f32 %v1438, %v1489
        %v1491 = vpop.f32.mrb[0].mxu0
        %1492 = vdwg.mxu0
        %v1493 = vpack.c.bf16 %v1368, %v1368
        %v1494 = vpack.c.bf16 %v1430, %v1427
        %vm1495 = vcmask 64512
        %v1497 = vsel %vm1495, %v1493, 0
        %v1500 = vsel %vm1495, %v1494, 0
        %1502 = vmatprep.subr.bf16.mxu0 0
        %1503 = vmatpush1.bf16.xpose.msra.mxu0 %v1500
        %1504 = vmatprep.subr.bf16.mxu0 0
        %1505 = vmatpush1.bf16.xpose.msra.mxu0 0
        %1506 = vmatprep.subr.bf16.mxu0 0
        %1507 = vmatpush1.bf16.xpose.msra.mxu0 0
        %1508 = vmatprep.subr.bf16.mxu0 0
        %1509 = vmatpush1.bf16.xpose.msra.mxu0 0
        %1510 = vmatprep.subr.bf16.mxu0 0
        %1511 = vmatpush1.bf16.xpose.msra.mxu0 0
        %1512 = vmatprep.subr.bf16.mxu0 0
        %1513 = vmatpush1.bf16.xpose.msra.mxu0 0
        %1514 = vmatprep.subr.bf16.mxu0 0
        %1515 = vmatpush1.bf16.xpose.msra.mxu0 0
        %1516 = vmatprep.subr.bf16.mxu0 0
        %1517 = vmatpush1.bf16.xpose.msra.mxu0 0
        %1518 = vmatprep.subr.bf16.mxu0 0
        %1519 = vmatpush1.bf16.xpose.msra.mxu0 0
        %1520 = vmatprep.subr.bf16.mxu0 0
        %1521 = vmatpush1.bf16.xpose.msra.mxu0 0
        %1522 = vmatprep.subr.bf16.mxu0 0
        %1523 = vmatpush1.bf16.xpose.msra.mxu0 0
        %1524 = vmatprep.subr.bf16.mxu0 0
        %1525 = vmatpush1.bf16.xpose.msra.mxu0 0
        %1526 = vmatprep.subr.bf16.mxu0 0
        %1527 = vmatpush1.bf16.xpose.msra.mxu0 0
        %1528 = vmatprep.subr.bf16.mxu0 0
        %1529 = vmatpush1.bf16.xpose.msra.mxu0 0
        %1530 = vmatprep.subr.bf16.mxu0 0
        %1531 = vmatpush1.bf16.xpose.msra.mxu0 0
        %1532 = vmatprep.subr.bf16.mxu0 0
        %1533 = vmatpush1.bf16.xpose.msra.mxu0 0
        %1534 = vmatprep.mubr.bf16.mxu0 0
        %1535 = vmatmul.mubr.bf16.gmra.mrb[0].mxu0 %v1497
        %v1536 = vpop.f32.mrb[0].mxu0
        %v1537 = vadd.f32 0.0, %v1536
        %v1538 = vpop.f32.mrb[0].mxu0
        %v1539 = vpop.f32.mrb[0].mxu0
        %v1540 = vpop.f32.mrb[0].mxu0
        %1541 = vdwg.mxu0
        %vm1542 = vcmask 130048
        %v1543 = vsel %vm1542, %v1537, -inf
        %1544 = vmax.xlane.f32.xlu0 %v1543
        %v1545 = vpop.xlane.xlu0 %1544
        %v1546 = vsub.f32 %v1537, %v1545
        %v1547 = vmul.f32 %v1546, 1.442695
        %v1548 = vpow.pop %v1547
        %v1549 = vsel %vm1542, %v1548, 0.0
        %1550 = vadd.xlane.f32.xlu0 %v1549
        %v1551 = vpop.xlane.xlu0 %1550
        %v1552 = vrcp.pop %v1551
        %v1553 = vmul.f32 %v1548, %v1552
        %v1554 = vpack.c.bf16 %v1553, %v1553
        %v1555 = vpack.c.bf16 %v1490, %v1487
        %v1557 = vsel %vm1542, %v1554, 0
        %1559 = vmatprep.subr.bf16.mxu0 0
        %1560 = vmatpush1.bf16.msra.mxu0 %v1555
        %1561 = vmatprep.subr.bf16.mxu0 0
        %1562 = vmatpush1.bf16.msra.mxu0 0
        %1563 = vmatprep.subr.bf16.mxu0 0
        %1564 = vmatpush1.bf16.msra.mxu0 0
        %1565 = vmatprep.subr.bf16.mxu0 0
        %1566 = vmatpush1.bf16.msra.mxu0 0
        %1567 = vmatprep.subr.bf16.mxu0 0
        %1568 = vmatpush1.bf16.msra.mxu0 0
        %1569 = vmatprep.subr.bf16.mxu0 0
        %1570 = vmatpush1.bf16.msra.mxu0 0
        %1571 = vmatprep.subr.bf16.mxu0 0
        %1572 = vmatpush1.bf16.msra.mxu0 0
        %1573 = vmatprep.subr.bf16.mxu0 0
        %1574 = vmatpush1.bf16.msra.mxu0 0
        %1575 = vmatprep.subr.bf16.mxu0 0
        %1576 = vmatpush1.bf16.msra.mxu0 0
        %1577 = vmatprep.subr.bf16.mxu0 0
        %1578 = vmatpush1.bf16.msra.mxu0 0
        %1579 = vmatprep.subr.bf16.mxu0 0
        %1580 = vmatpush1.bf16.msra.mxu0 0
        %1581 = vmatprep.subr.bf16.mxu0 0
        %1582 = vmatpush1.bf16.msra.mxu0 0
        %1583 = vmatprep.subr.bf16.mxu0 0
        %1584 = vmatpush1.bf16.msra.mxu0 0
        %1585 = vmatprep.subr.bf16.mxu0 0
        %1586 = vmatpush1.bf16.msra.mxu0 0
        %1587 = vmatprep.subr.bf16.mxu0 0
        %1588 = vmatpush1.bf16.msra.mxu0 0
        %1589 = vmatprep.subr.bf16.mxu0 0
        %1590 = vmatpush1.bf16.msra.mxu0 0
        %1591 = vmatprep.mubr.bf16.mxu0 0
        %1592 = vmatmul.mubr.bf16.gmra.mrb[0].mxu0 %v1557
        %v1593 = vpop.f32.mrb[0].mxu0
        %v1594 = vadd.f32 0.0, %v1593
        %v1595 = vpop.f32.mrb[0].mxu0
        %v1596 = vpop.f32.mrb[0].mxu0
        %v1597 = vpop.f32.mrb[0].mxu0
        %1598 = vdwg.mxu0
        %v1599 = vpack.c.bf16 %v1594, %v1594
        %s1600 = scalar_lea.vmem %s1145, 16
        %v1601 = vld [vmem:[%s1600] sm:$0xf]
        %v1602 = vld [vmem:[%s1600 + $0x4] sm:$0xf]
        %v1603 = vld [vmem:[%s1600 + $0x8] sm:$0xf]
        %v1604 = vld [vmem:[%s1600 + $0xc] sm:$0xf]
        %s1605 = scalar_lea.vmem %s1154, 16
        %v1606 = vld [vmem:[%s1605] sm:$0xf]
        %v1607 = vld [vmem:[%s1605 + $0x4] sm:$0xf]
        %v1608 = vld [vmem:[%s1605 + $0x8] sm:$0xf]
        %v1609 = vld [vmem:[%s1605 + $0xc] sm:$0xf]
        %s1610 = scalar_lea.vmem %s1163, 16
        %v1611 = vld [vmem:[%s1610] sm:$0xf]
        %v1612 = vld [vmem:[%s1610 + $0x4] sm:$0xf]
        %v1613 = vld [vmem:[%s1610 + $0x8] sm:$0xf]
        %v1614 = vld [vmem:[%s1610 + $0xc] sm:$0xf]
        %s1615 = scalar_lea.vmem %s1172, 4
        %v1616 = vld [vmem:[%s1615] sm:$0xf]
        %s1617 = scalar_lea.vmem %s1149, 1
        %v1618 = vld [vmem:[%s1617] sm:$0x1]
        %v1620 = vlaneseq
        %v1621 = vshrl.u32 %v1620, 7
        %v1622 = vsub.s32 0, %v1621
        %v1623 = vrot.slane %v1618, %v1622
        %v1629 = vunpack.c.l.b16 %v1601
        %v1630 = vunpack.c.l.b16 %v1602
        %v1631 = vunpack.c.l.b16 %v1603
        %v1632 = vunpack.c.l.b16 %v1604
        %v1633 = vpack.c.b16 %v1630, %v1629
        %v1634 = vpack.c.b16 %v1632, %v1631
        %1637 = vmatprep.subr.bf16.mxu0 0
        %1638 = vmatpush1.bf16.msra.mxu0 %v1633
        %1639 = vmatprep.subr.bf16.mxu0 0
        %1640 = vmatpush1.bf16.msra.mxu0 %v1634
        %1641 = vmatprep.subr.bf16.mxu0 0
        %1642 = vmatpush1.bf16.msra.mxu0 0
        %1643 = vmatprep.subr.bf16.mxu0 0
        %1644 = vmatpush1.bf16.msra.mxu0 0
        %1645 = vmatprep.subr.bf16.mxu0 0
        %1646 = vmatpush1.bf16.msra.mxu0 0
        %1647 = vmatprep.subr.bf16.mxu0 0
        %1648 = vmatpush1.bf16.msra.mxu0 0
        %1649 = vmatprep.subr.bf16.mxu0 0
        %1650 = vmatpush1.bf16.msra.mxu0 0
        %1651 = vmatprep.subr.bf16.mxu0 0
        %1652 = vmatpush1.bf16.msra.mxu0 0
        %1653 = vmatprep.subr.bf16.mxu0 0
        %1654 = vmatpush1.bf16.msra.mxu0 0
        %1655 = vmatprep.subr.bf16.mxu0 0
        %1656 = vmatpush1.bf16.msra.mxu0 0
        %1657 = vmatprep.subr.bf16.mxu0 0
        %1658 = vmatpush1.bf16.msra.mxu0 0
        %1659 = vmatprep.subr.bf16.mxu0 0
        %1660 = vmatpush1.bf16.msra.mxu0 0
        %1661 = vmatprep.subr.bf16.mxu0 0
        %1662 = vmatpush1.bf16.msra.mxu0 0
        %1663 = vmatprep.subr.bf16.mxu0 0
        %1664 = vmatpush1.bf16.msra.mxu0 0
        %1665 = vmatprep.subr.bf16.mxu0 0
        %1666 = vmatpush1.bf16.msra.mxu0 0
        %1667 = vmatprep.subr.bf16.mxu0 0
        %1668 = vmatpush1.bf16.msra.mxu0 0
        %1669 = vmatprep.mubr.bf16.mxu0 0
        %1670 = vmatmul.mubr.bf16.gmra.mrb[0].mxu0 %v1326
        %v1671 = vpop.f32.mrb[0].mxu0
        %v1672 = vadd.f32 %v1623, %v1671
        %v1673 = vpop.f32.mrb[0].mxu0
        %v1674 = vpop.f32.mrb[0].mxu0
        %v1675 = vpop.f32.mrb[0].mxu0
        %1676 = vdwg.mxu0
        %v1677 = vmul.f32 %v1672, 0.35355338
        %s1678 = scalar_lea.vmem %s1158, 1
        %v1679 = vld [vmem:[%s1678] sm:$0x1]
        %v1681 = vlaneseq
        %v1682 = vshrl.u32 %v1681, 7
        %v1683 = vsub.s32 0, %v1682
        %v1684 = vrot.slane %v1679, %v1683
        %v1690 = vunpack.c.l.b16 %v1606
        %v1691 = vunpack.c.l.b16 %v1607
        %v1692 = vunpack.c.l.b16 %v1608
        %v1693 = vunpack.c.l.b16 %v1609
        %v1694 = vpack.c.b16 %v1691, %v1690
        %v1695 = vpack.c.b16 %v1693, %v1692
        %1698 = vmatprep.subr.bf16.mxu0 0
        %1699 = vmatpush1.bf16.msra.mxu0 %v1694
        %1700 = vmatprep.subr.bf16.mxu0 0
        %1701 = vmatpush1.bf16.msra.mxu0 %v1695
        %1702 = vmatprep.subr.bf16.mxu0 0
        %1703 = vmatpush1.bf16.msra.mxu0 0
        %1704 = vmatprep.subr.bf16.mxu0 0
        %1705 = vmatpush1.bf16.msra.mxu0 0
        %1706 = vmatprep.subr.bf16.mxu0 0
        %1707 = vmatpush1.bf16.msra.mxu0 0
        %1708 = vmatprep.subr.bf16.mxu0 0
        %1709 = vmatpush1.bf16.msra.mxu0 0
        %1710 = vmatprep.subr.bf16.mxu0 0
        %1711 = vmatpush1.bf16.msra.mxu0 0
        %1712 = vmatprep.subr.bf16.mxu0 0
        %1713 = vmatpush1.bf16.msra.mxu0 0
        %1714 = vmatprep.subr.bf16.mxu0 0
        %1715 = vmatpush1.bf16.msra.mxu0 0
        %1716 = vmatprep.subr.bf16.mxu0 0
        %1717 = vmatpush1.bf16.msra.mxu0 0
        %1718 = vmatprep.subr.bf16.mxu0 0
        %1719 = vmatpush1.bf16.msra.mxu0 0
        %1720 = vmatprep.subr.bf16.mxu0 0
        %1721 = vmatpush1.bf16.msra.mxu0 0
        %1722 = vmatprep.subr.bf16.mxu0 0
        %1723 = vmatpush1.bf16.msra.mxu0 0
        %1724 = vmatprep.subr.bf16.mxu0 0
        %1725 = vmatpush1.bf16.msra.mxu0 0
        %1726 = vmatprep.subr.bf16.mxu0 0
        %1727 = vmatpush1.bf16.msra.mxu0 0
        %1728 = vmatprep.subr.bf16.mxu0 0
        %1729 = vmatpush1.bf16.msra.mxu0 0
        %1730 = vmatprep.mubr.bf16.mxu0 0
        %1731 = vmatmul.mubr.bf16.gmra.mrb[0].mxu0 %v1390
        %v1732 = vpop.f32.mrb[0].mxu0
        %v1733 = vadd.f32 %v1684, %v1732
        %v1734 = vpop.f32.mrb[0].mxu0
        %v1735 = vpop.f32.mrb[0].mxu0
        %v1736 = vadd.f32 %v1684, %v1735
        %v1737 = vpop.f32.mrb[0].mxu0
        %1738 = vdwg.mxu0
        %s1739 = scalar_lea.vmem %s1167, 1
        %v1740 = vld [vmem:[%s1739] sm:$0x1]
        %v1742 = vlaneseq
        %v1743 = vshrl.u32 %v1742, 7
        %v1744 = vsub.s32 0, %v1743
        %v1745 = vrot.slane %v1740, %v1744
        %v1751 = vunpack.c.l.b16 %v1611
        %v1752 = vunpack.c.l.b16 %v1612
        %v1753 = vunpack.c.l.b16 %v1613
        %v1754 = vunpack.c.l.b16 %v1614
        %v1755 = vpack.c.b16 %v1752, %v1751
        %v1756 = vpack.c.b16 %v1754, %v1753
        %1759 = vmatprep.subr.bf16.mxu0 0
        %1760 = vmatpush1.bf16.msra.mxu0 %v1755
        %1761 = vmatprep.subr.bf16.mxu0 0
        %1762 = vmatpush1.bf16.msra.mxu0 %v1756
        %1763 = vmatprep.subr.bf16.mxu0 0
        %1764 = vmatpush1.bf16.msra.mxu0 0
        %1765 = vmatprep.subr.bf16.mxu0 0
        %1766 = vmatpush1.bf16.msra.mxu0 0
        %1767 = vmatprep.subr.bf16.mxu0 0
        %1768 = vmatpush1.bf16.msra.mxu0 0
        %1769 = vmatprep.subr.bf16.mxu0 0
        %1770 = vmatpush1.bf16.msra.mxu0 0
        %1771 = vmatprep.subr.bf16.mxu0 0
        %1772 = vmatpush1.bf16.msra.mxu0 0
        %1773 = vmatprep.subr.bf16.mxu0 0
        %1774 = vmatpush1.bf16.msra.mxu0 0
        %1775 = vmatprep.subr.bf16.mxu0 0
        %1776 = vmatpush1.bf16.msra.mxu0 0
        %1777 = vmatprep.subr.bf16.mxu0 0
        %1778 = vmatpush1.bf16.msra.mxu0 0
        %1779 = vmatprep.subr.bf16.mxu0 0
        %1780 = vmatpush1.bf16.msra.mxu0 0
        %1781 = vmatprep.subr.bf16.mxu0 0
        %1782 = vmatpush1.bf16.msra.mxu0 0
        %1783 = vmatprep.subr.bf16.mxu0 0
        %1784 = vmatpush1.bf16.msra.mxu0 0
        %1785 = vmatprep.subr.bf16.mxu0 0
        %1786 = vmatpush1.bf16.msra.mxu0 0
        %1787 = vmatprep.subr.bf16.mxu0 0
        %1788 = vmatpush1.bf16.msra.mxu0 0
        %1789 = vmatprep.subr.bf16.mxu0 0
        %1790 = vmatpush1.bf16.msra.mxu0 0
        %1791 = vmatprep.mubr.bf16.mxu0 0
        %1792 = vmatmul.mubr.bf16.gmra.mrb[0].mxu0 %v1390
        %v1793 = vpop.f32.mrb[0].mxu0
        %v1794 = vadd.f32 %v1745, %v1793
        %v1795 = vpop.f32.mrb[0].mxu0
        %v1796 = vpop.f32.mrb[0].mxu0
        %v1797 = vadd.f32 %v1745, %v1796
        %v1798 = vpop.f32.mrb[0].mxu0
        %1799 = vdwg.mxu0
        %v1800 = vpack.c.bf16 %v1677, %v1677
        %v1801 = vpack.c.bf16 %v1736, %v1733
        %v1803 = vsel %vm1495, %v1800, 0
        %v1806 = vsel %vm1495, %v1801, 0
        %1808 = vmatprep.subr.bf16.mxu0 0
        %1809 = vmatpush1.bf16.xpose.msra.mxu0 %v1806
        %1810 = vmatprep.subr.bf16.mxu0 0
        %1811 = vmatpush1.bf16.xpose.msra.mxu0 0
        %1812 = vmatprep.subr.bf16.mxu0 0
        %1813 = vmatpush1.bf16.xpose.msra.mxu0 0
        %1814 = vmatprep.subr.bf16.mxu0 0
        %1815 = vmatpush1.bf16.xpose.msra.mxu0 0
        %1816 = vmatprep.subr.bf16.mxu0 0
        %1817 = vmatpush1.bf16.xpose.msra.mxu0 0
        %1818 = vmatprep.subr.bf16.mxu0 0
        %1819 = vmatpush1.bf16.xpose.msra.mxu0 0
        %1820 = vmatprep.subr.bf16.mxu0 0
        %1821 = vmatpush1.bf16.xpose.msra.mxu0 0
        %1822 = vmatprep.subr.bf16.mxu0 0
        %1823 = vmatpush1.bf16.xpose.msra.mxu0 0
        %1824 = vmatprep.subr.bf16.mxu0 0
        %1825 = vmatpush1.bf16.xpose.msra.mxu0 0
        %1826 = vmatprep.subr.bf16.mxu0 0
        %1827 = vmatpush1.bf16.xpose.msra.mxu0 0
        %1828 = vmatprep.subr.bf16.mxu0 0
        %1829 = vmatpush1.bf16.xpose.msra.mxu0 0
        %1830 = vmatprep.subr.bf16.mxu0 0
        %1831 = vmatpush1.bf16.xpose.msra.mxu0 0
        %1832 = vmatprep.subr.bf16.mxu0 0
        %1833 = vmatpush1.bf16.xpose.msra.mxu0 0
        %1834 = vmatprep.subr.bf16.mxu0 0
        %1835 = vmatpush1.bf16.xpose.msra.mxu0 0
        %1836 = vmatprep.subr.bf16.mxu0 0
        %1837 = vmatpush1.bf16.xpose.msra.mxu0 0
        %1838 = vmatprep.subr.bf16.mxu0 0
        %1839 = vmatpush1.bf16.xpose.msra.mxu0 0
        %1840 = vmatprep.mubr.bf16.mxu0 0
        %1841 = vmatmul.mubr.bf16.gmra.mrb[0].mxu0 %v1803
        %v1842 = vpop.f32.mrb[0].mxu0
        %v1843 = vadd.f32 0.0, %v1842
        %v1844 = vpop.f32.mrb[0].mxu0
        %v1845 = vpop.f32.mrb[0].mxu0
        %v1846 = vpop.f32.mrb[0].mxu0
        %1847 = vdwg.mxu0
        %v1848 = vsel %vm1542, %v1843, -inf
        %1849 = vmax.xlane.f32.xlu0 %v1848
        %v1850 = vpop.xlane.xlu0 %1849
        %v1851 = vsub.f32 %v1843, %v1850
        %v1852 = vmul.f32 %v1851, 1.442695
        %v1853 = vpow.pop %v1852
        %v1854 = vsel %vm1542, %v1853, 0.0
        %1855 = vadd.xlane.f32.xlu0 %v1854
        %v1856 = vpop.xlane.xlu0 %1855
        %v1857 = vrcp.pop %v1856
        %v1858 = vmul.f32 %v1853, %v1857
        %v1859 = vpack.c.bf16 %v1858, %v1858
        %v1860 = vpack.c.bf16 %v1797, %v1794
        %v1862 = vsel %vm1542, %v1859, 0
        %1864 = vmatprep.subr.bf16.mxu0 0
        %1865 = vmatpush1.bf16.msra.mxu0 %v1860
        %1866 = vmatprep.subr.bf16.mxu0 0
        %1867 = vmatpush1.bf16.msra.mxu0 0
        %1868 = vmatprep.subr.bf16.mxu0 0
        %1869 = vmatpush1.bf16.msra.mxu0 0
        %1870 = vmatprep.subr.bf16.mxu0 0
        %1871 = vmatpush1.bf16.msra.mxu0 0
        %1872 = vmatprep.subr.bf16.mxu0 0
        %1873 = vmatpush1.bf16.msra.mxu0 0
        %1874 = vmatprep.subr.bf16.mxu0 0
        %1875 = vmatpush1.bf16.msra.mxu0 0
        %1876 = vmatprep.subr.bf16.mxu0 0
        %1877 = vmatpush1.bf16.msra.mxu0 0
        %1878 = vmatprep.subr.bf16.mxu0 0
        %1879 = vmatpush1.bf16.msra.mxu0 0
        %1880 = vmatprep.subr.bf16.mxu0 0
        %1881 = vmatpush1.bf16.msra.mxu0 0
        %1882 = vmatprep.subr.bf16.mxu0 0
        %1883 = vmatpush1.bf16.msra.mxu0 0
        %1884 = vmatprep.subr.bf16.mxu0 0
        %1885 = vmatpush1.bf16.msra.mxu0 0
        %1886 = vmatprep.subr.bf16.mxu0 0
        %1887 = vmatpush1.bf16.msra.mxu0 0
        %1888 = vmatprep.subr.bf16.mxu0 0
        %1889 = vmatpush1.bf16.msra.mxu0 0
        %1890 = vmatprep.subr.bf16.mxu0 0
        %1891 = vmatpush1.bf16.msra.mxu0 0
        %1892 = vmatprep.subr.bf16.mxu0 0
        %1893 = vmatpush1.bf16.msra.mxu0 0
        %1894 = vmatprep.subr.bf16.mxu0 0
        %1895 = vmatpush1.bf16.msra.mxu0 0
        %1896 = vmatprep.mubr.bf16.mxu0 0
        %1897 = vmatmul.mubr.bf16.gmra.mrb[0].mxu0 %v1862
        %v1898 = vpop.f32.mrb[0].mxu0
        %v1899 = vadd.f32 0.0, %v1898
        %v1900 = vpop.f32.mrb[0].mxu0
        %v1901 = vpop.f32.mrb[0].mxu0
        %v1902 = vpop.f32.mrb[0].mxu0
        %1903 = vdwg.mxu0
        %v1904 = vpack.c.bf16 %v1899, %v1899
        %v1906 = vsel %vm1495, %v1904, 0
        %vm1908 = vcmask 1043456
        %v1910 = vsel %vm1908, %v1616, 0
        %1912 = vmatprep.subr.bf16.mxu0 0
        %1913 = vmatpush1.bf16.msra.mxu0 %v1910
        %1914 = vmatprep.subr.bf16.mxu0 0
        %1915 = vmatpush1.bf16.msra.mxu0 0
        %1916 = vmatprep.subr.bf16.mxu0 0
        %1917 = vmatpush1.bf16.msra.mxu0 0
        %1918 = vmatprep.subr.bf16.mxu0 0
        %1919 = vmatpush1.bf16.msra.mxu0 0
        %1920 = vmatprep.subr.bf16.mxu0 0
        %1921 = vmatpush1.bf16.msra.mxu0 0
        %1922 = vmatprep.subr.bf16.mxu0 0
        %1923 = vmatpush1.bf16.msra.mxu0 0
        %1924 = vmatprep.subr.bf16.mxu0 0
        %1925 = vmatpush1.bf16.msra.mxu0 0
        %1926 = vmatprep.subr.bf16.mxu0 0
        %1927 = vmatpush1.bf16.msra.mxu0 0
        %1928 = vmatprep.subr.bf16.mxu0 0
        %1929 = vmatpush1.bf16.msra.mxu0 0
        %1930 = vmatprep.subr.bf16.mxu0 0
        %1931 = vmatpush1.bf16.msra.mxu0 0
        %1932 = vmatprep.subr.bf16.mxu0 0
        %1933 = vmatpush1.bf16.msra.mxu0 0
        %1934 = vmatprep.subr.bf16.mxu0 0
        %1935 = vmatpush1.bf16.msra.mxu0 0
        %1936 = vmatprep.subr.bf16.mxu0 0
        %1937 = vmatpush1.bf16.msra.mxu0 0
        %1938 = vmatprep.subr.bf16.mxu0 0
        %1939 = vmatpush1.bf16.msra.mxu0 0
        %1940 = vmatprep.subr.bf16.mxu0 0
        %1941 = vmatpush1.bf16.msra.mxu0 0
        %1942 = vmatprep.subr.bf16.mxu0 0
        %1943 = vmatpush1.bf16.msra.mxu0 0
        %1944 = vmatprep.mubr.bf16.mxu0 0
        %1945 = vmatmul.mubr.bf16.gmra.mrb[0].mxu0 %v1906
        %v1946 = vpop.f32.mrb[0].mxu0
        %v1947 = vadd.f32 0.0, %v1946
        %v1948 = vpop.f32.mrb[0].mxu0
        %v1949 = vpop.f32.mrb[0].mxu0
        %v1950 = vpop.f32.mrb[0].mxu0
        %1951 = vdwg.mxu0
        %v1953 = vsel %vm1495, %v1599, 0
        %v1956 = vsel %vm1908, %v1304, 0
        %1958 = vmatprep.subr.bf16.mxu0 0
        %1959 = vmatpush1.bf16.msra.mxu0 %v1956
        %1960 = vmatprep.subr.bf16.mxu0 0
        %1961 = vmatpush1.bf16.msra.mxu0 0
        %1962 = vmatprep.subr.bf16.mxu0 0
        %1963 = vmatpush1.bf16.msra.mxu0 0
        %1964 = vmatprep.subr.bf16.mxu0 0
        %1965 = vmatpush1.bf16.msra.mxu0 0
        %1966 = vmatprep.subr.bf16.mxu0 0
        %1967 = vmatpush1.bf16.msra.mxu0 0
        %1968 = vmatprep.subr.bf16.mxu0 0
        %1969 = vmatpush1.bf16.msra.mxu0 0
        %1970 = vmatprep.subr.bf16.mxu0 0
        %1971 = vmatpush1.bf16.msra.mxu0 0
        %1972 = vmatprep.subr.bf16.mxu0 0
        %1973 = vmatpush1.bf16.msra.mxu0 0
        %1974 = vmatprep.subr.bf16.mxu0 0
        %1975 = vmatpush1.bf16.msra.mxu0 0
        %1976 = vmatprep.subr.bf16.mxu0 0
        %1977 = vmatpush1.bf16.msra.mxu0 0
        %1978 = vmatprep.subr.bf16.mxu0 0
        %1979 = vmatpush1.bf16.msra.mxu0 0
        %1980 = vmatprep.subr.bf16.mxu0 0
        %1981 = vmatpush1.bf16.msra.mxu0 0
        %1982 = vmatprep.subr.bf16.mxu0 0
        %1983 = vmatpush1.bf16.msra.mxu0 0
        %1984 = vmatprep.subr.bf16.mxu0 0
        %1985 = vmatpush1.bf16.msra.mxu0 0
        %1986 = vmatprep.subr.bf16.mxu0 0
        %1987 = vmatpush1.bf16.msra.mxu0 0
        %1988 = vmatprep.subr.bf16.mxu0 0
        %1989 = vmatpush1.bf16.msra.mxu0 0
        %1990 = vmatprep.mubr.bf16.mxu0 0
        %1991 = vmatmul.mubr.bf16.gmra.mrb[0].mxu0 %v1953
        %v1992 = vpop.f32.mrb[0].mxu0
        %v1993 = vadd.f32 %v1947, %v1992
        %v1994 = vpop.f32.mrb[0].mxu0
        %v1995 = vpop.f32.mrb[0].mxu0
        %v1996 = vpop.f32.mrb[0].mxu0
        %1997 = vdwg.mxu0
        %s1998 = scalar_lea.vmem %s1145, 32
        %v1999 = vld [vmem:[%s1998] sm:$0xf]
        %v2000 = vld [vmem:[%s1998 + $0x4] sm:$0xf]
        %v2001 = vld [vmem:[%s1998 + $0x8] sm:$0xf]
        %v2002 = vld [vmem:[%s1998 + $0xc] sm:$0xf]
        %s2003 = scalar_lea.vmem %s1154, 32
        %v2004 = vld [vmem:[%s2003] sm:$0xf]
        %v2005 = vld [vmem:[%s2003 + $0x4] sm:$0xf]
        %v2006 = vld [vmem:[%s2003 + $0x8] sm:$0xf]
        %v2007 = vld [vmem:[%s2003 + $0xc] sm:$0xf]
        %s2008 = scalar_lea.vmem %s1163, 32
        %v2009 = vld [vmem:[%s2008] sm:$0xf]
        %v2010 = vld [vmem:[%s2008 + $0x4] sm:$0xf]
        %v2011 = vld [vmem:[%s2008 + $0x8] sm:$0xf]
        %v2012 = vld [vmem:[%s2008 + $0xc] sm:$0xf]
        %s2013 = scalar_lea.vmem %s1172, 8
        %v2014 = vld [vmem:[%s2013] sm:$0xf]
        %s2015 = scalar_lea.vmem %s1149, 2
        %v2016 = vld [vmem:[%s2015] sm:$0x1]
        %v2018 = vlaneseq
        %v2019 = vshrl.u32 %v2018, 7
        %v2020 = vsub.s32 0, %v2019
        %v2021 = vrot.slane %v2016, %v2020
        %v2027 = vunpack.c.l.b16 %v1999
        %v2028 = vunpack.c.l.b16 %v2000
        %v2029 = vunpack.c.l.b16 %v2001
        %v2030 = vunpack.c.l.b16 %v2002
        %v2031 = vpack.c.b16 %v2028, %v2027
        %v2032 = vpack.c.b16 %v2030, %v2029
        %2035 = vmatprep.subr.bf16.mxu0 0
        %2036 = vmatpush1.bf16.msra.mxu0 %v2031
        %2037 = vmatprep.subr.bf16.mxu0 0
        %2038 = vmatpush1.bf16.msra.mxu0 %v2032
        %2039 = vmatprep.subr.bf16.mxu0 0
        %2040 = vmatpush1.bf16.msra.mxu0 0
        %2041 = vmatprep.subr.bf16.mxu0 0
        %2042 = vmatpush1.bf16.msra.mxu0 0
        %2043 = vmatprep.subr.bf16.mxu0 0
        %2044 = vmatpush1.bf16.msra.mxu0 0
        %2045 = vmatprep.subr.bf16.mxu0 0
        %2046 = vmatpush1.bf16.msra.mxu0 0
        %2047 = vmatprep.subr.bf16.mxu0 0
        %2048 = vmatpush1.bf16.msra.mxu0 0
        %2049 = vmatprep.subr.bf16.mxu0 0
        %2050 = vmatpush1.bf16.msra.mxu0 0
        %2051 = vmatprep.subr.bf16.mxu0 0
        %2052 = vmatpush1.bf16.msra.mxu0 0
        %2053 = vmatprep.subr.bf16.mxu0 0
        %2054 = vmatpush1.bf16.msra.mxu0 0
        %2055 = vmatprep.subr.bf16.mxu0 0
        %2056 = vmatpush1.bf16.msra.mxu0 0
        %2057 = vmatprep.subr.bf16.mxu0 0
        %2058 = vmatpush1.bf16.msra.mxu0 0
        %2059 = vmatprep.subr.bf16.mxu0 0
        %2060 = vmatpush1.bf16.msra.mxu0 0
        %2061 = vmatprep.subr.bf16.mxu0 0
        %2062 = vmatpush1.bf16.msra.mxu0 0
        %2063 = vmatprep.subr.bf16.mxu0 0
        %2064 = vmatpush1.bf16.msra.mxu0 0
        %2065 = vmatprep.subr.bf16.mxu0 0
        %2066 = vmatpush1.bf16.msra.mxu0 0
        %2067 = vmatprep.mubr.bf16.mxu0 0
        %2068 = vmatmul.mubr.bf16.gmra.mrb[0].mxu0 %v1326
        %v2069 = vpop.f32.mrb[0].mxu0
        %v2070 = vadd.f32 %v2021, %v2069
        %v2071 = vpop.f32.mrb[0].mxu0
        %v2072 = vpop.f32.mrb[0].mxu0
        %v2073 = vpop.f32.mrb[0].mxu0
        %2074 = vdwg.mxu0
        %v2075 = vmul.f32 %v2070, 0.35355338
        %s2076 = scalar_lea.vmem %s1158, 2
        %v2077 = vld [vmem:[%s2076] sm:$0x1]
        %v2079 = vlaneseq
        %v2080 = vshrl.u32 %v2079, 7
        %v2081 = vsub.s32 0, %v2080
        %v2082 = vrot.slane %v2077, %v2081
        %v2088 = vunpack.c.l.b16 %v2004
        %v2089 = vunpack.c.l.b16 %v2005
        %v2090 = vunpack.c.l.b16 %v2006
        %v2091 = vunpack.c.l.b16 %v2007
        %v2092 = vpack.c.b16 %v2089, %v2088
        %v2093 = vpack.c.b16 %v2091, %v2090
        %2096 = vmatprep.subr.bf16.mxu0 0
        %2097 = vmatpush1.bf16.msra.mxu0 %v2092
        %2098 = vmatprep.subr.bf16.mxu0 0
        %2099 = vmatpush1.bf16.msra.mxu0 %v2093
        %2100 = vmatprep.subr.bf16.mxu0 0
        %2101 = vmatpush1.bf16.msra.mxu0 0
        %2102 = vmatprep.subr.bf16.mxu0 0
        %2103 = vmatpush1.bf16.msra.mxu0 0
        %2104 = vmatprep.subr.bf16.mxu0 0
        %2105 = vmatpush1.bf16.msra.mxu0 0
        %2106 = vmatprep.subr.bf16.mxu0 0
        %2107 = vmatpush1.bf16.msra.mxu0 0
        %2108 = vmatprep.subr.bf16.mxu0 0
        %2109 = vmatpush1.bf16.msra.mxu0 0
        %2110 = vmatprep.subr.bf16.mxu0 0
        %2111 = vmatpush1.bf16.msra.mxu0 0
        %2112 = vmatprep.subr.bf16.mxu0 0
        %2113 = vmatpush1.bf16.msra.mxu0 0
        %2114 = vmatprep.subr.bf16.mxu0 0
        %2115 = vmatpush1.bf16.msra.mxu0 0
        %2116 = vmatprep.subr.bf16.mxu0 0
        %2117 = vmatpush1.bf16.msra.mxu0 0
        %2118 = vmatprep.subr.bf16.mxu0 0
        %2119 = vmatpush1.bf16.msra.mxu0 0
        %2120 = vmatprep.subr.bf16.mxu0 0
        %2121 = vmatpush1.bf16.msra.mxu0 0
        %2122 = vmatprep.subr.bf16.mxu0 0
        %2123 = vmatpush1.bf16.msra.mxu0 0
        %2124 = vmatprep.subr.bf16.mxu0 0
        %2125 = vmatpush1.bf16.msra.mxu0 0
        %2126 = vmatprep.subr.bf16.mxu0 0
        %2127 = vmatpush1.bf16.msra.mxu0 0
        %2128 = vmatprep.mubr.bf16.mxu0 0
        %2129 = vmatmul.mubr.bf16.gmra.mrb[0].mxu0 %v1390
        %v2130 = vpop.f32.mrb[0].mxu0
        %v2131 = vadd.f32 %v2082, %v2130
        %v2132 = vpop.f32.mrb[0].mxu0
        %v2133 = vpop.f32.mrb[0].mxu0
        %v2134 = vadd.f32 %v2082, %v2133
        %v2135 = vpop.f32.mrb[0].mxu0
        %2136 = vdwg.mxu0
        %s2137 = scalar_lea.vmem %s1167, 2
        %v2138 = vld [vmem:[%s2137] sm:$0x1]
        %v2140 = vlaneseq
        %v2141 = vshrl.u32 %v2140, 7
        %v2142 = vsub.s32 0, %v2141
        %v2143 = vrot.slane %v2138, %v2142
        %v2149 = vunpack.c.l.b16 %v2009
        %v2150 = vunpack.c.l.b16 %v2010
        %v2151 = vunpack.c.l.b16 %v2011
        %v2152 = vunpack.c.l.b16 %v2012
        %v2153 = vpack.c.b16 %v2150, %v2149
        %v2154 = vpack.c.b16 %v2152, %v2151
        %2157 = vmatprep.subr.bf16.mxu0 0
        %2158 = vmatpush1.bf16.msra.mxu0 %v2153
        %2159 = vmatprep.subr.bf16.mxu0 0
        %2160 = vmatpush1.bf16.msra.mxu0 %v2154
        %2161 = vmatprep.subr.bf16.mxu0 0
        %2162 = vmatpush1.bf16.msra.mxu0 0
        %2163 = vmatprep.subr.bf16.mxu0 0
        %2164 = vmatpush1.bf16.msra.mxu0 0
        %2165 = vmatprep.subr.bf16.mxu0 0
        %2166 = vmatpush1.bf16.msra.mxu0 0
        %2167 = vmatprep.subr.bf16.mxu0 0
        %2168 = vmatpush1.bf16.msra.mxu0 0
        %2169 = vmatprep.subr.bf16.mxu0 0
        %2170 = vmatpush1.bf16.msra.mxu0 0
        %2171 = vmatprep.subr.bf16.mxu0 0
        %2172 = vmatpush1.bf16.msra.mxu0 0
        %2173 = vmatprep.subr.bf16.mxu0 0
        %2174 = vmatpush1.bf16.msra.mxu0 0
        %2175 = vmatprep.subr.bf16.mxu0 0
        %2176 = vmatpush1.bf16.msra.mxu0 0
        %2177 = vmatprep.subr.bf16.mxu0 0
        %2178 = vmatpush1.bf16.msra.mxu0 0
        %2179 = vmatprep.subr.bf16.mxu0 0
        %2180 = vmatpush1.bf16.msra.mxu0 0
        %2181 = vmatprep.subr.bf16.mxu0 0
        %2182 = vmatpush1.bf16.msra.mxu0 0
        %2183 = vmatprep.subr.bf16.mxu0 0
        %2184 = vmatpush1.bf16.msra.mxu0 0
        %2185 = vmatprep.subr.bf16.mxu0 0
        %2186 = vmatpush1.bf16.msra.mxu0 0
        %2187 = vmatprep.subr.bf16.mxu0 0
        %2188 = vmatpush1.bf16.msra.mxu0 0
        %2189 = vmatprep.mubr.bf16.mxu0 0
        %2190 = vmatmul.mubr.bf16.gmra.mrb[0].mxu0 %v1390
        %v2191 = vpop.f32.mrb[0].mxu0
        %v2192 = vadd.f32 %v2143, %v2191
        %v2193 = vpop.f32.mrb[0].mxu0
        %v2194 = vpop.f32.mrb[0].mxu0
        %v2195 = vadd.f32 %v2143, %v2194
        %v2196 = vpop.f32.mrb[0].mxu0
        %2197 = vdwg.mxu0
        %v2198 = vpack.c.bf16 %v2075, %v2075
        %v2199 = vpack.c.bf16 %v2134, %v2131
        %v2201 = vsel %vm1495, %v2198, 0
        %v2204 = vsel %vm1495, %v2199, 0
        %2206 = vmatprep.subr.bf16.mxu0 0
        %2207 = vmatpush1.bf16.xpose.msra.mxu0 %v2204
        %2208 = vmatprep.subr.bf16.mxu0 0
        %2209 = vmatpush1.bf16.xpose.msra.mxu0 0
        %2210 = vmatprep.subr.bf16.mxu0 0
        %2211 = vmatpush1.bf16.xpose.msra.mxu0 0
        %2212 = vmatprep.subr.bf16.mxu0 0
        %2213 = vmatpush1.bf16.xpose.msra.mxu0 0
        %2214 = vmatprep.subr.bf16.mxu0 0
        %2215 = vmatpush1.bf16.xpose.msra.mxu0 0
        %2216 = vmatprep.subr.bf16.mxu0 0
        %2217 = vmatpush1.bf16.xpose.msra.mxu0 0
        %2218 = vmatprep.subr.bf16.mxu0 0
        %2219 = vmatpush1.bf16.xpose.msra.mxu0 0
        %2220 = vmatprep.subr.bf16.mxu0 0
        %2221 = vmatpush1.bf16.xpose.msra.mxu0 0
        %2222 = vmatprep.subr.bf16.mxu0 0
        %2223 = vmatpush1.bf16.xpose.msra.mxu0 0
        %2224 = vmatprep.subr.bf16.mxu0 0
        %2225 = vmatpush1.bf16.xpose.msra.mxu0 0
        %2226 = vmatprep.subr.bf16.mxu0 0
        %2227 = vmatpush1.bf16.xpose.msra.mxu0 0
        %2228 = vmatprep.subr.bf16.mxu0 0
        %2229 = vmatpush1.bf16.xpose.msra.mxu0 0
        %2230 = vmatprep.subr.bf16.mxu0 0
        %2231 = vmatpush1.bf16.xpose.msra.mxu0 0
        %2232 = vmatprep.subr.bf16.mxu0 0
        %2233 = vmatpush1.bf16.xpose.msra.mxu0 0
        %2234 = vmatprep.subr.bf16.mxu0 0
        %2235 = vmatpush1.bf16.xpose.msra.mxu0 0
        %2236 = vmatprep.subr.bf16.mxu0 0
        %2237 = vmatpush1.bf16.xpose.msra.mxu0 0
        %2238 = vmatprep.mubr.bf16.mxu0 0
        %2239 = vmatmul.mubr.bf16.gmra.mrb[0].mxu0 %v2201
        %v2240 = vpop.f32.mrb[0].mxu0
        %v2241 = vadd.f32 0.0, %v2240
        %v2242 = vpop.f32.mrb[0].mxu0
        %v2243 = vpop.f32.mrb[0].mxu0
        %v2244 = vpop.f32.mrb[0].mxu0
        %2245 = vdwg.mxu0
        %v2246 = vsel %vm1542, %v2241, -inf
        %2247 = vmax.xlane.f32.xlu0 %v2246
        %v2248 = vpop.xlane.xlu0 %2247
        %v2249 = vsub.f32 %v2241, %v2248
        %v2250 = vmul.f32 %v2249, 1.442695
        %v2251 = vpow.pop %v2250
        %v2252 = vsel %vm1542, %v2251, 0.0
        %2253 = vadd.xlane.f32.xlu0 %v2252
        %v2254 = vpop.xlane.xlu0 %2253
        %v2255 = vrcp.pop %v2254
        %v2256 = vmul.f32 %v2251, %v2255
        %v2257 = vpack.c.bf16 %v2256, %v2256
        %v2258 = vpack.c.bf16 %v2195, %v2192
        %v2260 = vsel %vm1542, %v2257, 0
        %2262 = vmatprep.subr.bf16.mxu0 0
        %2263 = vmatpush1.bf16.msra.mxu0 %v2258
        %2264 = vmatprep.subr.bf16.mxu0 0
        %2265 = vmatpush1.bf16.msra.mxu0 0
        %2266 = vmatprep.subr.bf16.mxu0 0
        %2267 = vmatpush1.bf16.msra.mxu0 0
        %2268 = vmatprep.subr.bf16.mxu0 0
        %2269 = vmatpush1.bf16.msra.mxu0 0
        %2270 = vmatprep.subr.bf16.mxu0 0
        %2271 = vmatpush1.bf16.msra.mxu0 0
        %2272 = vmatprep.subr.bf16.mxu0 0
        %2273 = vmatpush1.bf16.msra.mxu0 0
        %2274 = vmatprep.subr.bf16.mxu0 0
        %2275 = vmatpush1.bf16.msra.mxu0 0
        %2276 = vmatprep.subr.bf16.mxu0 0
        %2277 = vmatpush1.bf16.msra.mxu0 0
        %2278 = vmatprep.subr.bf16.mxu0 0
        %2279 = vmatpush1.bf16.msra.mxu0 0
        %2280 = vmatprep.subr.bf16.mxu0 0
        %2281 = vmatpush1.bf16.msra.mxu0 0
        %2282 = vmatprep.subr.bf16.mxu0 0
        %2283 = vmatpush1.bf16.msra.mxu0 0
        %2284 = vmatprep.subr.bf16.mxu0 0
        %2285 = vmatpush1.bf16.msra.mxu0 0
        %2286 = vmatprep.subr.bf16.mxu0 0
        %2287 = vmatpush1.bf16.msra.mxu0 0
        %2288 = vmatprep.subr.bf16.mxu0 0
        %2289 = vmatpush1.bf16.msra.mxu0 0
        %2290 = vmatprep.subr.bf16.mxu0 0
        %2291 = vmatpush1.bf16.msra.mxu0 0
        %2292 = vmatprep.subr.bf16.mxu0 0
        %2293 = vmatpush1.bf16.msra.mxu0 0
        %2294 = vmatprep.mubr.bf16.mxu0 0
        %2295 = vmatmul.mubr.bf16.gmra.mrb[0].mxu0 %v2260
        %v2296 = vpop.f32.mrb[0].mxu0
        %v2297 = vadd.f32 0.0, %v2296
        %v2298 = vpop.f32.mrb[0].mxu0
        %v2299 = vpop.f32.mrb[0].mxu0
        %v2300 = vpop.f32.mrb[0].mxu0
        %2301 = vdwg.mxu0
        %v2302 = vpack.c.bf16 %v2297, %v2297
        %v2304 = vsel %vm1495, %v2302, 0
        %v2307 = vsel %vm1908, %v2014, 0
        %2309 = vmatprep.subr.bf16.mxu0 0
        %2310 = vmatpush1.bf16.msra.mxu0 %v2307
        %2311 = vmatprep.subr.bf16.mxu0 0
        %2312 = vmatpush1.bf16.msra.mxu0 0
        %2313 = vmatprep.subr.bf16.mxu0 0
        %2314 = vmatpush1.bf16.msra.mxu0 0
        %2315 = vmatprep.subr.bf16.mxu0 0
        %2316 = vmatpush1.bf16.msra.mxu0 0
        %2317 = vmatprep.subr.bf16.mxu0 0
        %2318 = vmatpush1.bf16.msra.mxu0 0
        %2319 = vmatprep.subr.bf16.mxu0 0
        %2320 = vmatpush1.bf16.msra.mxu0 0
        %2321 = vmatprep.subr.bf16.mxu0 0
        %2322 = vmatpush1.bf16.msra.mxu0 0
        %2323 = vmatprep.subr.bf16.mxu0 0
        %2324 = vmatpush1.bf16.msra.mxu0 0
        %2325 = vmatprep.subr.bf16.mxu0 0
        %2326 = vmatpush1.bf16.msra.mxu0 0
        %2327 = vmatprep.subr.bf16.mxu0 0
        %2328 = vmatpush1.bf16.msra.mxu0 0
        %2329 = vmatprep.subr.bf16.mxu0 0
        %2330 = vmatpush1.bf16.msra.mxu0 0
        %2331 = vmatprep.subr.bf16.mxu0 0
        %2332 = vmatpush1.bf16.msra.mxu0 0
        %2333 = vmatprep.subr.bf16.mxu0 0
        %2334 = vmatpush1.bf16.msra.mxu0 0
        %2335 = vmatprep.subr.bf16.mxu0 0
        %2336 = vmatpush1.bf16.msra.mxu0 0
        %2337 = vmatprep.subr.bf16.mxu0 0
        %2338 = vmatpush1.bf16.msra.mxu0 0
        %2339 = vmatprep.subr.bf16.mxu0 0
        %2340 = vmatpush1.bf16.msra.mxu0 0
        %2341 = vmatprep.mubr.bf16.mxu0 0
        %2342 = vmatmul.mubr.bf16.gmra.mrb[0].mxu0 %v2304
        %v2343 = vpop.f32.mrb[0].mxu0
        %v2344 = vadd.f32 0.0, %v2343
        %v2345 = vpop.f32.mrb[0].mxu0
        %v2346 = vpop.f32.mrb[0].mxu0
        %v2347 = vpop.f32.mrb[0].mxu0
        %2348 = vdwg.mxu0
        %v2349 = vadd.f32 %v1993, %v2344
        %s2350 = scalar_lea.vmem %s1145, 48
        %v2351 = vld [vmem:[%s2350] sm:$0xf]
        %v2352 = vld [vmem:[%s2350 + $0x4] sm:$0xf]
        %v2353 = vld [vmem:[%s2350 + $0x8] sm:$0xf]
        %v2354 = vld [vmem:[%s2350 + $0xc] sm:$0xf]
        %s2355 = scalar_lea.vmem %s1154, 48
        %v2356 = vld [vmem:[%s2355] sm:$0xf]
        %v2357 = vld [vmem:[%s2355 + $0x4] sm:$0xf]
        %v2358 = vld [vmem:[%s2355 + $0x8] sm:$0xf]
        %v2359 = vld [vmem:[%s2355 + $0xc] sm:$0xf]
        %s2360 = scalar_lea.vmem %s1163, 48
        %v2361 = vld [vmem:[%s2360] sm:$0xf]
        %v2362 = vld [vmem:[%s2360 + $0x4] sm:$0xf]
        %v2363 = vld [vmem:[%s2360 + $0x8] sm:$0xf]
        %v2364 = vld [vmem:[%s2360 + $0xc] sm:$0xf]
        %s2365 = scalar_lea.vmem %s1172, 12
        %v2366 = vld [vmem:[%s2365] sm:$0xf]
        %s2367 = scalar_lea.vmem %s1149, 3
        %v2368 = vld [vmem:[%s2367] sm:$0x1]
        %v2370 = vlaneseq
        %v2371 = vshrl.u32 %v2370, 7
        %v2372 = vsub.s32 0, %v2371
        %v2373 = vrot.slane %v2368, %v2372
        %v2379 = vunpack.c.l.b16 %v2351
        %v2380 = vunpack.c.l.b16 %v2352
        %v2381 = vunpack.c.l.b16 %v2353
        %v2382 = vunpack.c.l.b16 %v2354
        %v2383 = vpack.c.b16 %v2380, %v2379
        %v2384 = vpack.c.b16 %v2382, %v2381
        %2387 = vmatprep.subr.bf16.mxu0 0
        %2388 = vmatpush1.bf16.msra.mxu0 %v2383
        %2389 = vmatprep.subr.bf16.mxu0 0
        %2390 = vmatpush1.bf16.msra.mxu0 %v2384
        %2391 = vmatprep.subr.bf16.mxu0 0
        %2392 = vmatpush1.bf16.msra.mxu0 0
        %2393 = vmatprep.subr.bf16.mxu0 0
        %2394 = vmatpush1.bf16.msra.mxu0 0
        %2395 = vmatprep.subr.bf16.mxu0 0
        %2396 = vmatpush1.bf16.msra.mxu0 0
        %2397 = vmatprep.subr.bf16.mxu0 0
        %2398 = vmatpush1.bf16.msra.mxu0 0
        %2399 = vmatprep.subr.bf16.mxu0 0
        %2400 = vmatpush1.bf16.msra.mxu0 0
        %2401 = vmatprep.subr.bf16.mxu0 0
        %2402 = vmatpush1.bf16.msra.mxu0 0
        %2403 = vmatprep.subr.bf16.mxu0 0
        %2404 = vmatpush1.bf16.msra.mxu0 0
        %2405 = vmatprep.subr.bf16.mxu0 0
        %2406 = vmatpush1.bf16.msra.mxu0 0
        %2407 = vmatprep.subr.bf16.mxu0 0
        %2408 = vmatpush1.bf16.msra.mxu0 0
        %2409 = vmatprep.subr.bf16.mxu0 0
        %2410 = vmatpush1.bf16.msra.mxu0 0
        %2411 = vmatprep.subr.bf16.mxu0 0
        %2412 = vmatpush1.bf16.msra.mxu0 0
        %2413 = vmatprep.subr.bf16.mxu0 0
        %2414 = vmatpush1.bf16.msra.mxu0 0
        %2415 = vmatprep.subr.bf16.mxu0 0
        %2416 = vmatpush1.bf16.msra.mxu0 0
        %2417 = vmatprep.subr.bf16.mxu0 0
        %2418 = vmatpush1.bf16.msra.mxu0 0
        %2419 = vmatprep.mubr.bf16.mxu0 0
        %2420 = vmatmul.mubr.bf16.gmra.mrb[0].mxu0 %v1326
        %v2421 = vpop.f32.mrb[0].mxu0
        %v2422 = vadd.f32 %v2373, %v2421
        %v2423 = vpop.f32.mrb[0].mxu0
        %v2424 = vpop.f32.mrb[0].mxu0
        %v2425 = vpop.f32.mrb[0].mxu0
        %2426 = vdwg.mxu0
        %v2427 = vmul.f32 %v2422, 0.35355338
        %s2428 = scalar_lea.vmem %s1158, 3
        %v2429 = vld [vmem:[%s2428] sm:$0x1]
        %v2431 = vlaneseq
        %v2432 = vshrl.u32 %v2431, 7
        %v2433 = vsub.s32 0, %v2432
        %v2434 = vrot.slane %v2429, %v2433
        %v2440 = vunpack.c.l.b16 %v2356
        %v2441 = vunpack.c.l.b16 %v2357
        %v2442 = vunpack.c.l.b16 %v2358
        %v2443 = vunpack.c.l.b16 %v2359
        %v2444 = vpack.c.b16 %v2441, %v2440
        %v2445 = vpack.c.b16 %v2443, %v2442
        %2448 = vmatprep.subr.bf16.mxu0 0
        %2449 = vmatpush1.bf16.msra.mxu0 %v2444
        %2450 = vmatprep.subr.bf16.mxu0 0
        %2451 = vmatpush1.bf16.msra.mxu0 %v2445
        %2452 = vmatprep.subr.bf16.mxu0 0
        %2453 = vmatpush1.bf16.msra.mxu0 0
        %2454 = vmatprep.subr.bf16.mxu0 0
        %2455 = vmatpush1.bf16.msra.mxu0 0
        %2456 = vmatprep.subr.bf16.mxu0 0
        %2457 = vmatpush1.bf16.msra.mxu0 0
        %2458 = vmatprep.subr.bf16.mxu0 0
        %2459 = vmatpush1.bf16.msra.mxu0 0
        %2460 = vmatprep.subr.bf16.mxu0 0
        %2461 = vmatpush1.bf16.msra.mxu0 0
        %2462 = vmatprep.subr.bf16.mxu0 0
        %2463 = vmatpush1.bf16.msra.mxu0 0
        %2464 = vmatprep.subr.bf16.mxu0 0
        %2465 = vmatpush1.bf16.msra.mxu0 0
        %2466 = vmatprep.subr.bf16.mxu0 0
        %2467 = vmatpush1.bf16.msra.mxu0 0
        %2468 = vmatprep.subr.bf16.mxu0 0
        %2469 = vmatpush1.bf16.msra.mxu0 0
        %2470 = vmatprep.subr.bf16.mxu0 0
        %2471 = vmatpush1.bf16.msra.mxu0 0
        %2472 = vmatprep.subr.bf16.mxu0 0
        %2473 = vmatpush1.bf16.msra.mxu0 0
        %2474 = vmatprep.subr.bf16.mxu0 0
        %2475 = vmatpush1.bf16.msra.mxu0 0
        %2476 = vmatprep.subr.bf16.mxu0 0
        %2477 = vmatpush1.bf16.msra.mxu0 0
        %2478 = vmatprep.subr.bf16.mxu0 0
        %2479 = vmatpush1.bf16.msra.mxu0 0
        %2480 = vmatprep.mubr.bf16.mxu0 0
        %2481 = vmatmul.mubr.bf16.gmra.mrb[0].mxu0 %v1390
        %v2482 = vpop.f32.mrb[0].mxu0
        %v2483 = vadd.f32 %v2434, %v2482
        %v2484 = vpop.f32.mrb[0].mxu0
        %v2485 = vpop.f32.mrb[0].mxu0
        %v2486 = vadd.f32 %v2434, %v2485
        %v2487 = vpop.f32.mrb[0].mxu0
        %2488 = vdwg.mxu0
        %s2489 = scalar_lea.vmem %s1167, 3
        %v2490 = vld [vmem:[%s2489] sm:$0x1]
        %v2492 = vlaneseq
        %v2493 = vshrl.u32 %v2492, 7
        %v2494 = vsub.s32 0, %v2493
        %v2495 = vrot.slane %v2490, %v2494
        %v2501 = vunpack.c.l.b16 %v2361
        %v2502 = vunpack.c.l.b16 %v2362
        %v2503 = vunpack.c.l.b16 %v2363
        %v2504 = vunpack.c.l.b16 %v2364
        %v2505 = vpack.c.b16 %v2502, %v2501
        %v2506 = vpack.c.b16 %v2504, %v2503
        %2509 = vmatprep.subr.bf16.mxu0 0
        %2510 = vmatpush1.bf16.msra.mxu0 %v2505
        %2511 = vmatprep.subr.bf16.mxu0 0
        %2512 = vmatpush1.bf16.msra.mxu0 %v2506
        %2513 = vmatprep.subr.bf16.mxu0 0
        %2514 = vmatpush1.bf16.msra.mxu0 0
        %2515 = vmatprep.subr.bf16.mxu0 0
        %2516 = vmatpush1.bf16.msra.mxu0 0
        %2517 = vmatprep.subr.bf16.mxu0 0
        %2518 = vmatpush1.bf16.msra.mxu0 0
        %2519 = vmatprep.subr.bf16.mxu0 0
        %2520 = vmatpush1.bf16.msra.mxu0 0
        %2521 = vmatprep.subr.bf16.mxu0 0
        %2522 = vmatpush1.bf16.msra.mxu0 0
        %2523 = vmatprep.subr.bf16.mxu0 0
        %2524 = vmatpush1.bf16.msra.mxu0 0
        %2525 = vmatprep.subr.bf16.mxu0 0
        %2526 = vmatpush1.bf16.msra.mxu0 0
        %2527 = vmatprep.subr.bf16.mxu0 0
        %2528 = vmatpush1.bf16.msra.mxu0 0
        %2529 = vmatprep.subr.bf16.mxu0 0
        %2530 = vmatpush1.bf16.msra.mxu0 0
        %2531 = vmatprep.subr.bf16.mxu0 0
        %2532 = vmatpush1.bf16.msra.mxu0 0
        %2533 = vmatprep.subr.bf16.mxu0 0
        %2534 = vmatpush1.bf16.msra.mxu0 0
        %2535 = vmatprep.subr.bf16.mxu0 0
        %2536 = vmatpush1.bf16.msra.mxu0 0
        %2537 = vmatprep.subr.bf16.mxu0 0
        %2538 = vmatpush1.bf16.msra.mxu0 0
        %2539 = vmatprep.subr.bf16.mxu0 0
        %2540 = vmatpush1.bf16.msra.mxu0 0
        %2541 = vmatprep.mubr.bf16.mxu0 0
        %2542 = vmatmul.mubr.bf16.gmra.mrb[0].mxu0 %v1390
        %v2543 = vpop.f32.mrb[0].mxu0
        %v2544 = vadd.f32 %v2495, %v2543
        %v2545 = vpop.f32.mrb[0].mxu0
        %v2546 = vpop.f32.mrb[0].mxu0
        %v2547 = vadd.f32 %v2495, %v2546
        %v2548 = vpop.f32.mrb[0].mxu0
        %2549 = vdwg.mxu0
        %v2550 = vpack.c.bf16 %v2427, %v2427
        %v2551 = vpack.c.bf16 %v2486, %v2483
        %v2553 = vsel %vm1495, %v2550, 0
        %v2556 = vsel %vm1495, %v2551, 0
        %2558 = vmatprep.subr.bf16.mxu0 0
        %2559 = vmatpush1.bf16.xpose.msra.mxu0 %v2556
        %2560 = vmatprep.subr.bf16.mxu0 0
        %2561 = vmatpush1.bf16.xpose.msra.mxu0 0
        %2562 = vmatprep.subr.bf16.mxu0 0
        %2563 = vmatpush1.bf16.xpose.msra.mxu0 0
        %2564 = vmatprep.subr.bf16.mxu0 0
        %2565 = vmatpush1.bf16.xpose.msra.mxu0 0
        %2566 = vmatprep.subr.bf16.mxu0 0
        %2567 = vmatpush1.bf16.xpose.msra.mxu0 0
        %2568 = vmatprep.subr.bf16.mxu0 0
        %2569 = vmatpush1.bf16.xpose.msra.mxu0 0
        %2570 = vmatprep.subr.bf16.mxu0 0
        %2571 = vmatpush1.bf16.xpose.msra.mxu0 0
        %2572 = vmatprep.subr.bf16.mxu0 0
        %2573 = vmatpush1.bf16.xpose.msra.mxu0 0
        %2574 = vmatprep.subr.bf16.mxu0 0
        %2575 = vmatpush1.bf16.xpose.msra.mxu0 0
        %2576 = vmatprep.subr.bf16.mxu0 0
        %2577 = vmatpush1.bf16.xpose.msra.mxu0 0
        %2578 = vmatprep.subr.bf16.mxu0 0
        %2579 = vmatpush1.bf16.xpose.msra.mxu0 0
        %2580 = vmatprep.subr.bf16.mxu0 0
        %2581 = vmatpush1.bf16.xpose.msra.mxu0 0
        %2582 = vmatprep.subr.bf16.mxu0 0
        %2583 = vmatpush1.bf16.xpose.msra.mxu0 0
        %2584 = vmatprep.subr.bf16.mxu0 0
        %2585 = vmatpush1.bf16.xpose.msra.mxu0 0
        %2586 = vmatprep.subr.bf16.mxu0 0
        %2587 = vmatpush1.bf16.xpose.msra.mxu0 0
        %2588 = vmatprep.subr.bf16.mxu0 0
        %2589 = vmatpush1.bf16.xpose.msra.mxu0 0
        %2590 = vmatprep.mubr.bf16.mxu0 0
        %2591 = vmatmul.mubr.bf16.gmra.mrb[0].mxu0 %v2553
        %v2592 = vpop.f32.mrb[0].mxu0
        %v2593 = vadd.f32 0.0, %v2592
        %v2594 = vpop.f32.mrb[0].mxu0
        %v2595 = vpop.f32.mrb[0].mxu0
        %v2596 = vpop.f32.mrb[0].mxu0
        %2597 = vdwg.mxu0
        %v2598 = vsel %vm1542, %v2593, -inf
        %2599 = vmax.xlane.f32.xlu0 %v2598
        %v2600 = vpop.xlane.xlu0 %2599
        %v2601 = vsub.f32 %v2593, %v2600
        %v2602 = vmul.f32 %v2601, 1.442695
        %v2603 = vpow.pop %v2602
        %v2604 = vsel %vm1542, %v2603, 0.0
        %2605 = vadd.xlane.f32.xlu0 %v2604
        %v2606 = vpop.xlane.xlu0 %2605
        %v2607 = vrcp.pop %v2606
        %v2608 = vmul.f32 %v2603, %v2607
        %v2609 = vpack.c.bf16 %v2608, %v2608
        %v2610 = vpack.c.bf16 %v2547, %v2544
        %v2612 = vsel %vm1542, %v2609, 0
        %2614 = vmatprep.subr.bf16.mxu0 0
        %2615 = vmatpush1.bf16.msra.mxu0 %v2610
        %2616 = vmatprep.subr.bf16.mxu0 0
        %2617 = vmatpush1.bf16.msra.mxu0 0
        %2618 = vmatprep.subr.bf16.mxu0 0
        %2619 = vmatpush1.bf16.msra.mxu0 0
        %2620 = vmatprep.subr.bf16.mxu0 0
        %2621 = vmatpush1.bf16.msra.mxu0 0
        %2622 = vmatprep.subr.bf16.mxu0 0
        %2623 = vmatpush1.bf16.msra.mxu0 0
        %2624 = vmatprep.subr.bf16.mxu0 0
        %2625 = vmatpush1.bf16.msra.mxu0 0
        %2626 = vmatprep.subr.bf16.mxu0 0
        %2627 = vmatpush1.bf16.msra.mxu0 0
        %2628 = vmatprep.subr.bf16.mxu0 0
        %2629 = vmatpush1.bf16.msra.mxu0 0
        %2630 = vmatprep.subr.bf16.mxu0 0
        %2631 = vmatpush1.bf16.msra.mxu0 0
        %2632 = vmatprep.subr.bf16.mxu0 0
        %2633 = vmatpush1.bf16.msra.mxu0 0
        %2634 = vmatprep.subr.bf16.mxu0 0
        %2635 = vmatpush1.bf16.msra.mxu0 0
        %2636 = vmatprep.subr.bf16.mxu0 0
        %2637 = vmatpush1.bf16.msra.mxu0 0
        %2638 = vmatprep.subr.bf16.mxu0 0
        %2639 = vmatpush1.bf16.msra.mxu0 0
        %2640 = vmatprep.subr.bf16.mxu0 0
        %2641 = vmatpush1.bf16.msra.mxu0 0
        %2642 = vmatprep.subr.bf16.mxu0 0
        %2643 = vmatpush1.bf16.msra.mxu0 0
        %2644 = vmatprep.subr.bf16.mxu0 0
        %2645 = vmatpush1.bf16.msra.mxu0 0
        %2646 = vmatprep.mubr.bf16.mxu0 0
        %2647 = vmatmul.mubr.bf16.gmra.mrb[0].mxu0 %v2612
        %v2648 = vpop.f32.mrb[0].mxu0
        %v2649 = vadd.f32 0.0, %v2648
        %v2650 = vpop.f32.mrb[0].mxu0
        %v2651 = vpop.f32.mrb[0].mxu0
        %v2652 = vpop.f32.mrb[0].mxu0
        %2653 = vdwg.mxu0
        %v2654 = vpack.c.bf16 %v2649, %v2649
        %v2656 = vsel %vm1495, %v2654, 0
        %v2659 = vsel %vm1908, %v2366, 0
        %2661 = vmatprep.subr.bf16.mxu0 0
        %2662 = vmatpush1.bf16.msra.mxu0 %v2659
        %2663 = vmatprep.subr.bf16.mxu0 0
        %2664 = vmatpush1.bf16.msra.mxu0 0
        %2665 = vmatprep.subr.bf16.mxu0 0
        %2666 = vmatpush1.bf16.msra.mxu0 0
        %2667 = vmatprep.subr.bf16.mxu0 0
        %2668 = vmatpush1.bf16.msra.mxu0 0
        %2669 = vmatprep.subr.bf16.mxu0 0
        %2670 = vmatpush1.bf16.msra.mxu0 0
        %2671 = vmatprep.subr.bf16.mxu0 0
        %2672 = vmatpush1.bf16.msra.mxu0 0
        %2673 = vmatprep.subr.bf16.mxu0 0
        %2674 = vmatpush1.bf16.msra.mxu0 0
        %2675 = vmatprep.subr.bf16.mxu0 0
        %2676 = vmatpush1.bf16.msra.mxu0 0
        %2677 = vmatprep.subr.bf16.mxu0 0
        %2678 = vmatpush1.bf16.msra.mxu0 0
        %2679 = vmatprep.subr.bf16.mxu0 0
        %2680 = vmatpush1.bf16.msra.mxu0 0
        %2681 = vmatprep.subr.bf16.mxu0 0
        %2682 = vmatpush1.bf16.msra.mxu0 0
        %2683 = vmatprep.subr.bf16.mxu0 0
        %2684 = vmatpush1.bf16.msra.mxu0 0
        %2685 = vmatprep.subr.bf16.mxu0 0
        %2686 = vmatpush1.bf16.msra.mxu0 0
        %2687 = vmatprep.subr.bf16.mxu0 0
        %2688 = vmatpush1.bf16.msra.mxu0 0
        %2689 = vmatprep.subr.bf16.mxu0 0
        %2690 = vmatpush1.bf16.msra.mxu0 0
        %2691 = vmatprep.subr.bf16.mxu0 0
        %2692 = vmatpush1.bf16.msra.mxu0 0
        %2693 = vmatprep.mubr.bf16.mxu0 0
        %2694 = vmatmul.mubr.bf16.gmra.mrb[0].mxu0 %v2656
        %v2695 = vpop.f32.mrb[0].mxu0
        %v2696 = vadd.f32 0.0, %v2695
        %v2697 = vpop.f32.mrb[0].mxu0
        %v2698 = vpop.f32.mrb[0].mxu0
        %v2699 = vpop.f32.mrb[0].mxu0
        %2700 = vdwg.mxu0
        %v2701 = vadd.f32 %v2349, %v2696
        %v2702 = vld [vmem:[%s1175] sm:$0x1]
        %v2704 = vlaneseq
        %v2705 = vshrl.u32 %v2704, 7
        %v2706 = vsub.s32 0, %v2705
        %v2707 = vrot.slane %v2702, %v2706
        %v2709 = vadd.f32 %v2701, %v2707
        %v2710 = vld [vmem:[%s1180] sm:$0xf]
        %v2711 = vld [vmem:[%s1180 + $0x4] sm:$0xf]
        %v2712 = vld [vmem:[%s1180 + $0x8] sm:$0xf]
        %v2713 = vld [vmem:[%s1180 + $0xc] sm:$0xf]
        %v2714 = vld [vmem:[%s1189] sm:$0xf]
        %v2715 = vld [vmem:[%s1189 + $0x4] sm:$0xf]
        %v2716 = vld [vmem:[%s1189 + $0x8] sm:$0xf]
        %v2717 = vld [vmem:[%s1189 + $0xc] sm:$0xf]
        %v2718 = vld [vmem:[%s1198] sm:$0xf]
        %v2719 = vld [vmem:[%s1198 + $0x4] sm:$0xf]
        %v2720 = vld [vmem:[%s1198 + $0x8] sm:$0xf]
        %v2721 = vld [vmem:[%s1198 + $0xc] sm:$0xf]
        %v2722 = vld [vmem:[%s1207] sm:$0xf]
        %v2723 = vld [vmem:[%s1184] sm:$0x1]
        %v2725 = vlaneseq
        %v2726 = vshrl.u32 %v2725, 7
        %v2727 = vsub.s32 0, %v2726
        %v2728 = vrot.slane %v2723, %v2727
        %v2734 = vunpack.c.l.b16 %v2710
        %v2735 = vunpack.c.l.b16 %v2711
        %v2736 = vunpack.c.l.b16 %v2712
        %v2737 = vunpack.c.l.b16 %v2713
        %v2738 = vpack.c.b16 %v2735, %v2734
        %v2739 = vpack.c.b16 %v2737, %v2736
        %2742 = vmatprep.subr.bf16.mxu0 0
        %2743 = vmatpush1.bf16.msra.mxu0 %v2738
        %2744 = vmatprep.subr.bf16.mxu0 0
        %2745 = vmatpush1.bf16.msra.mxu0 %v2739
        %2746 = vmatprep.subr.bf16.mxu0 0
        %2747 = vmatpush1.bf16.msra.mxu0 0
        %2748 = vmatprep.subr.bf16.mxu0 0
        %2749 = vmatpush1.bf16.msra.mxu0 0
        %2750 = vmatprep.subr.bf16.mxu0 0
        %2751 = vmatpush1.bf16.msra.mxu0 0
        %2752 = vmatprep.subr.bf16.mxu0 0
        %2753 = vmatpush1.bf16.msra.mxu0 0
        %2754 = vmatprep.subr.bf16.mxu0 0
        %2755 = vmatpush1.bf16.msra.mxu0 0
        %2756 = vmatprep.subr.bf16.mxu0 0
        %2757 = vmatpush1.bf16.msra.mxu0 0
        %2758 = vmatprep.subr.bf16.mxu0 0
        %2759 = vmatpush1.bf16.msra.mxu0 0
        %2760 = vmatprep.subr.bf16.mxu0 0
        %2761 = vmatpush1.bf16.msra.mxu0 0
        %2762 = vmatprep.subr.bf16.mxu0 0
        %2763 = vmatpush1.bf16.msra.mxu0 0
        %2764 = vmatprep.subr.bf16.mxu0 0
        %2765 = vmatpush1.bf16.msra.mxu0 0
        %2766 = vmatprep.subr.bf16.mxu0 0
        %2767 = vmatpush1.bf16.msra.mxu0 0
        %2768 = vmatprep.subr.bf16.mxu0 0
        %2769 = vmatpush1.bf16.msra.mxu0 0
        %2770 = vmatprep.subr.bf16.mxu0 0
        %2771 = vmatpush1.bf16.msra.mxu0 0
        %2772 = vmatprep.subr.bf16.mxu0 0
        %2773 = vmatpush1.bf16.msra.mxu0 0
        %2774 = vmatprep.mubr.bf16.mxu0 0
        %2775 = vmatmul.mubr.bf16.gmra.mrb[0].mxu0 %v1390
        %v2776 = vpop.f32.mrb[0].mxu0
        %v2777 = vadd.f32 %v2728, %v2776
        %v2778 = vpop.f32.mrb[0].mxu0
        %v2779 = vpop.f32.mrb[0].mxu0
        %v2780 = vadd.f32 %v2728, %v2779
        %v2781 = vpop.f32.mrb[0].mxu0
        %2782 = vdwg.mxu0
        %v2783 = vmul.f32 %v2777, 0.35355338
        %v2784 = vmul.f32 %v2780, 0.35355338
        %v2785 = vpack.c.bf16 %v2709, %v2709
        %v2786 = vld [vmem:[%s1193] sm:$0x1]
        %v2788 = vlaneseq
        %v2789 = vshrl.u32 %v2788, 7
        %v2790 = vsub.s32 0, %v2789
        %v2791 = vrot.slane %v2786, %v2790
        %v2797 = vunpack.c.l.b16 %v2714
        %v2798 = vunpack.c.l.b16 %v2715
        %v2799 = vunpack.c.l.b16 %v2716
        %v2800 = vunpack.c.l.b16 %v2717
        %v2801 = vpack.c.b16 %v2798, %v2797
        %v2802 = vpack.c.b16 %v2800, %v2799
        %v2806 = vsel %vm1247, %v2785, 0
        %2808 = vmatprep.subr.bf16.mxu0 0
        %2809 = vmatpush1.bf16.msra.mxu0 %v2801
        %2810 = vmatprep.subr.bf16.mxu0 0
        %2811 = vmatpush1.bf16.msra.mxu0 %v2802
        %2812 = vmatprep.subr.bf16.mxu0 0
        %2813 = vmatpush1.bf16.msra.mxu0 0
        %2814 = vmatprep.subr.bf16.mxu0 0
        %2815 = vmatpush1.bf16.msra.mxu0 0
        %2816 = vmatprep.subr.bf16.mxu0 0
        %2817 = vmatpush1.bf16.msra.mxu0 0
        %2818 = vmatprep.subr.bf16.mxu0 0
        %2819 = vmatpush1.bf16.msra.mxu0 0
        %2820 = vmatprep.subr.bf16.mxu0 0
        %2821 = vmatpush1.bf16.msra.mxu0 0
        %2822 = vmatprep.subr.bf16.mxu0 0
        %2823 = vmatpush1.bf16.msra.mxu0 0
        %2824 = vmatprep.subr.bf16.mxu0 0
        %2825 = vmatpush1.bf16.msra.mxu0 0
        %2826 = vmatprep.subr.bf16.mxu0 0
        %2827 = vmatpush1.bf16.msra.mxu0 0
        %2828 = vmatprep.subr.bf16.mxu0 0
        %2829 = vmatpush1.bf16.msra.mxu0 0
        %2830 = vmatprep.subr.bf16.mxu0 0
        %2831 = vmatpush1.bf16.msra.mxu0 0
        %2832 = vmatprep.subr.bf16.mxu0 0
        %2833 = vmatpush1.bf16.msra.mxu0 0
        %2834 = vmatprep.subr.bf16.mxu0 0
        %2835 = vmatpush1.bf16.msra.mxu0 0
        %2836 = vmatprep.subr.bf16.mxu0 0
        %2837 = vmatpush1.bf16.msra.mxu0 0
        %2838 = vmatprep.subr.bf16.mxu0 0
        %2839 = vmatpush1.bf16.msra.mxu0 0
        %2840 = vmatprep.mubr.bf16.mxu0 0
        %2841 = vmatmul.mubr.bf16.gmra.mrb[0].mxu0 %v2806
        %v2842 = vpop.f32.mrb[0].mxu0
        %v2843 = vadd.f32 %v2791, %v2842
        %v2844 = vpop.f32.mrb[0].mxu0
        %v2845 = vpop.f32.mrb[0].mxu0
        %v2846 = vpop.f32.mrb[0].mxu0
        %2847 = vdwg.mxu0
        %v2848 = vld [vmem:[%s1202] sm:$0x1]
        %v2850 = vlaneseq
        %v2851 = vshrl.u32 %v2850, 7
        %v2852 = vsub.s32 0, %v2851
        %v2853 = vrot.slane %v2848, %v2852
        %v2859 = vunpack.c.l.b16 %v2718
        %v2860 = vunpack.c.l.b16 %v2719
        %v2861 = vunpack.c.l.b16 %v2720
        %v2862 = vunpack.c.l.b16 %v2721
        %v2863 = vpack.c.b16 %v2860, %v2859
        %v2864 = vpack.c.b16 %v2862, %v2861
        %2867 = vmatprep.subr.bf16.mxu0 0
        %2868 = vmatpush1.bf16.msra.mxu0 %v2863
        %2869 = vmatprep.subr.bf16.mxu0 0
        %2870 = vmatpush1.bf16.msra.mxu0 %v2864
        %2871 = vmatprep.subr.bf16.mxu0 0
        %2872 = vmatpush1.bf16.msra.mxu0 0
        %2873 = vmatprep.subr.bf16.mxu0 0
        %2874 = vmatpush1.bf16.msra.mxu0 0
        %2875 = vmatprep.subr.bf16.mxu0 0
        %2876 = vmatpush1.bf16.msra.mxu0 0
        %2877 = vmatprep.subr.bf16.mxu0 0
        %2878 = vmatpush1.bf16.msra.mxu0 0
        %2879 = vmatprep.subr.bf16.mxu0 0
        %2880 = vmatpush1.bf16.msra.mxu0 0
        %2881 = vmatprep.subr.bf16.mxu0 0
        %2882 = vmatpush1.bf16.msra.mxu0 0
        %2883 = vmatprep.subr.bf16.mxu0 0
        %2884 = vmatpush1.bf16.msra.mxu0 0
        %2885 = vmatprep.subr.bf16.mxu0 0
        %2886 = vmatpush1.bf16.msra.mxu0 0
        %2887 = vmatprep.subr.bf16.mxu0 0
        %2888 = vmatpush1.bf16.msra.mxu0 0
        %2889 = vmatprep.subr.bf16.mxu0 0
        %2890 = vmatpush1.bf16.msra.mxu0 0
        %2891 = vmatprep.subr.bf16.mxu0 0
        %2892 = vmatpush1.bf16.msra.mxu0 0
        %2893 = vmatprep.subr.bf16.mxu0 0
        %2894 = vmatpush1.bf16.msra.mxu0 0
        %2895 = vmatprep.subr.bf16.mxu0 0
        %2896 = vmatpush1.bf16.msra.mxu0 0
        %2897 = vmatprep.subr.bf16.mxu0 0
        %2898 = vmatpush1.bf16.msra.mxu0 0
        %2899 = vmatprep.mubr.bf16.mxu0 0
        %2900 = vmatmul.mubr.bf16.gmra.mrb[0].mxu0 %v2806
        %v2901 = vpop.f32.mrb[0].mxu0
        %v2902 = vadd.f32 %v2853, %v2901
        %v2903 = vpop.f32.mrb[0].mxu0
        %v2904 = vpop.f32.mrb[0].mxu0
        %v2905 = vpop.f32.mrb[0].mxu0
        %2906 = vdwg.mxu0
        %v2907 = vpack.c.bf16 %v2784, %v2783
        %v2908 = vpack.c.bf16 %v2843, %v2843
        %v2910 = vsel %vm1495, %v2907, 0
        %v2913 = vsel %vm1495, %v2908, 0
        %2915 = vmatprep.subr.bf16.mxu0 0
        %2916 = vmatpush1.bf16.xpose.msra.mxu0 %v2913
        %2917 = vmatprep.subr.bf16.mxu0 0
        %2918 = vmatpush1.bf16.xpose.msra.mxu0 0
        %2919 = vmatprep.subr.bf16.mxu0 0
        %2920 = vmatpush1.bf16.xpose.msra.mxu0 0
        %2921 = vmatprep.subr.bf16.mxu0 0
        %2922 = vmatpush1.bf16.xpose.msra.mxu0 0
        %2923 = vmatprep.subr.bf16.mxu0 0
        %2924 = vmatpush1.bf16.xpose.msra.mxu0 0
        %2925 = vmatprep.subr.bf16.mxu0 0
        %2926 = vmatpush1.bf16.xpose.msra.mxu0 0
        %2927 = vmatprep.subr.bf16.mxu0 0
        %2928 = vmatpush1.bf16.xpose.msra.mxu0 0
        %2929 = vmatprep.subr.bf16.mxu0 0
        %2930 = vmatpush1.bf16.xpose.msra.mxu0 0
        %2931 = vmatprep.subr.bf16.mxu0 0
        %2932 = vmatpush1.bf16.xpose.msra.mxu0 0
        %2933 = vmatprep.subr.bf16.mxu0 0
        %2934 = vmatpush1.bf16.xpose.msra.mxu0 0
        %2935 = vmatprep.subr.bf16.mxu0 0
        %2936 = vmatpush1.bf16.xpose.msra.mxu0 0
        %2937 = vmatprep.subr.bf16.mxu0 0
        %2938 = vmatpush1.bf16.xpose.msra.mxu0 0
        %2939 = vmatprep.subr.bf16.mxu0 0
        %2940 = vmatpush1.bf16.xpose.msra.mxu0 0
        %2941 = vmatprep.subr.bf16.mxu0 0
        %2942 = vmatpush1.bf16.xpose.msra.mxu0 0
        %2943 = vmatprep.subr.bf16.mxu0 0
        %2944 = vmatpush1.bf16.xpose.msra.mxu0 0
        %2945 = vmatprep.subr.bf16.mxu0 0
        %2946 = vmatpush1.bf16.xpose.msra.mxu0 0
        %2947 = vmatprep.mubr.bf16.mxu0 0
        %2948 = vmatmul.mubr.bf16.gmra.mrb[0].mxu0 %v2910
        %v2949 = vpop.f32.mrb[0].mxu0
        %v2950 = vadd.f32 0.0, %v2949
        %v2951 = vpop.f32.mrb[0].mxu0
        %v2952 = vpop.f32.mrb[0].mxu0
        %v2953 = vadd.f32 0.0, %v2952
        %v2954 = vpop.f32.mrb[0].mxu0
        %2955 = vdwg.mxu0
        %v2956 = vsel %vm1495, %v2950, -inf
        %2957 = vmax.xlane.f32.xlu0 %v2956
        %v2958 = vpop.xlane.xlu0 %2957
        %v2959 = vsel %vm1495, %v2953, -inf
        %2960 = vmax.xlane.f32.xlu0 %v2959
        %v2961 = vpop.xlane.xlu0 %2960
        %v2962 = vsub.f32 %v2950, %v2958
        %v2963 = vsub.f32 %v2953, %v2961
        %v2964 = vmul.f32 %v2962, 1.442695
        %v2965 = vpow.pop %v2964
        %v2966 = vmul.f32 %v2963, 1.442695
        %v2967 = vpow.pop %v2966
        %v2968 = vsel %vm1495, %v2965, 0.0
        %2969 = vadd.xlane.f32.xlu0 %v2968
        %v2970 = vpop.xlane.xlu0 %2969
        %v2971 = vsel %vm1495, %v2967, 0.0
        %2972 = vadd.xlane.f32.xlu0 %v2971
        %v2973 = vpop.xlane.xlu0 %2972
        %v2974 = vrcp.pop %v2970
        %v2975 = vrcp.pop %v2973
        %v2976 = vmul.f32 %v2965, %v2974
        %v2977 = vmul.f32 %v2967, %v2975
        %v2978 = vpack.c.bf16 %v2977, %v2976
        %v2979 = vpack.c.bf16 %v2902, %v2902
        %v2981 = vsel %vm1495, %v2978, 0
        %v2984 = vsel %vm1908, %v2979, 0
        %2986 = vmatprep.subr.bf16.mxu0 0
        %2987 = vmatpush1.bf16.msra.mxu0 %v2984
        %2988 = vmatprep.subr.bf16.mxu0 0
        %2989 = vmatpush1.bf16.msra.mxu0 0
        %2990 = vmatprep.subr.bf16.mxu0 0
        %2991 = vmatpush1.bf16.msra.mxu0 0
        %2992 = vmatprep.subr.bf16.mxu0 0
        %2993 = vmatpush1.bf16.msra.mxu0 0
        %2994 = vmatprep.subr.bf16.mxu0 0
        %2995 = vmatpush1.bf16.msra.mxu0 0
        %2996 = vmatprep.subr.bf16.mxu0 0
        %2997 = vmatpush1.bf16.msra.mxu0 0
        %2998 = vmatprep.subr.bf16.mxu0 0
        %2999 = vmatpush1.bf16.msra.mxu0 0
        %3000 = vmatprep.subr.bf16.mxu0 0
        %3001 = vmatpush1.bf16.msra.mxu0 0
        %3002 = vmatprep.subr.bf16.mxu0 0
        %3003 = vmatpush1.bf16.msra.mxu0 0
        %3004 = vmatprep.subr.bf16.mxu0 0
        %3005 = vmatpush1.bf16.msra.mxu0 0
        %3006 = vmatprep.subr.bf16.mxu0 0
        %3007 = vmatpush1.bf16.msra.mxu0 0
        %3008 = vmatprep.subr.bf16.mxu0 0
        %3009 = vmatpush1.bf16.msra.mxu0 0
        %3010 = vmatprep.subr.bf16.mxu0 0
        %3011 = vmatpush1.bf16.msra.mxu0 0
        %3012 = vmatprep.subr.bf16.mxu0 0
        %3013 = vmatpush1.bf16.msra.mxu0 0
        %3014 = vmatprep.subr.bf16.mxu0 0
        %3015 = vmatpush1.bf16.msra.mxu0 0
        %3016 = vmatprep.subr.bf16.mxu0 0
        %3017 = vmatpush1.bf16.msra.mxu0 0
        %3018 = vmatprep.mubr.bf16.mxu0 0
        %3019 = vmatmul.mubr.bf16.gmra.mrb[0].mxu0 %v2981
        %v3020 = vpop.f32.mrb[0].mxu0
        %v3021 = vadd.f32 0.0, %v3020
        %v3022 = vpop.f32.mrb[0].mxu0
        %v3023 = vpop.f32.mrb[0].mxu0
        %v3024 = vadd.f32 0.0, %v3023
        %v3025 = vpop.f32.mrb[0].mxu0
        %3026 = vdwg.mxu0
        %v3027 = vpack.c.bf16 %v3024, %v3021
        %s3028 = scalar_lea.vmem %s1180, 16
        %v3029 = vld [vmem:[%s3028] sm:$0xf]
        %v3030 = vld [vmem:[%s3028 + $0x4] sm:$0xf]
        %v3031 = vld [vmem:[%s3028 + $0x8] sm:$0xf]
        %v3032 = vld [vmem:[%s3028 + $0xc] sm:$0xf]
        %s3033 = scalar_lea.vmem %s1189, 16
        %v3034 = vld [vmem:[%s3033] sm:$0xf]
        %v3035 = vld [vmem:[%s3033 + $0x4] sm:$0xf]
        %v3036 = vld [vmem:[%s3033 + $0x8] sm:$0xf]
        %v3037 = vld [vmem:[%s3033 + $0xc] sm:$0xf]
        %s3038 = scalar_lea.vmem %s1198, 16
        %v3039 = vld [vmem:[%s3038] sm:$0xf]
        %v3040 = vld [vmem:[%s3038 + $0x4] sm:$0xf]
        %v3041 = vld [vmem:[%s3038 + $0x8] sm:$0xf]
        %v3042 = vld [vmem:[%s3038 + $0xc] sm:$0xf]
        %s3043 = scalar_lea.vmem %s1207, 4
        %v3044 = vld [vmem:[%s3043] sm:$0xf]
        %s3045 = scalar_lea.vmem %s1184, 1
        %v3046 = vld [vmem:[%s3045] sm:$0x1]
        %v3048 = vlaneseq
        %v3049 = vshrl.u32 %v3048, 7
        %v3050 = vsub.s32 0, %v3049
        %v3051 = vrot.slane %v3046, %v3050
        %v3057 = vunpack.c.l.b16 %v3029
        %v3058 = vunpack.c.l.b16 %v3030
        %v3059 = vunpack.c.l.b16 %v3031
        %v3060 = vunpack.c.l.b16 %v3032
        %v3061 = vpack.c.b16 %v3058, %v3057
        %v3062 = vpack.c.b16 %v3060, %v3059
        %3065 = vmatprep.subr.bf16.mxu0 0
        %3066 = vmatpush1.bf16.msra.mxu0 %v3061
        %3067 = vmatprep.subr.bf16.mxu0 0
        %3068 = vmatpush1.bf16.msra.mxu0 %v3062
        %3069 = vmatprep.subr.bf16.mxu0 0
        %3070 = vmatpush1.bf16.msra.mxu0 0
        %3071 = vmatprep.subr.bf16.mxu0 0
        %3072 = vmatpush1.bf16.msra.mxu0 0
        %3073 = vmatprep.subr.bf16.mxu0 0
        %3074 = vmatpush1.bf16.msra.mxu0 0
        %3075 = vmatprep.subr.bf16.mxu0 0
        %3076 = vmatpush1.bf16.msra.mxu0 0
        %3077 = vmatprep.subr.bf16.mxu0 0
        %3078 = vmatpush1.bf16.msra.mxu0 0
        %3079 = vmatprep.subr.bf16.mxu0 0
        %3080 = vmatpush1.bf16.msra.mxu0 0
        %3081 = vmatprep.subr.bf16.mxu0 0
        %3082 = vmatpush1.bf16.msra.mxu0 0
        %3083 = vmatprep.subr.bf16.mxu0 0
        %3084 = vmatpush1.bf16.msra.mxu0 0
        %3085 = vmatprep.subr.bf16.mxu0 0
        %3086 = vmatpush1.bf16.msra.mxu0 0
        %3087 = vmatprep.subr.bf16.mxu0 0
        %3088 = vmatpush1.bf16.msra.mxu0 0
        %3089 = vmatprep.subr.bf16.mxu0 0
        %3090 = vmatpush1.bf16.msra.mxu0 0
        %3091 = vmatprep.subr.bf16.mxu0 0
        %3092 = vmatpush1.bf16.msra.mxu0 0
        %3093 = vmatprep.subr.bf16.mxu0 0
        %3094 = vmatpush1.bf16.msra.mxu0 0
        %3095 = vmatprep.subr.bf16.mxu0 0
        %3096 = vmatpush1.bf16.msra.mxu0 0
        %3097 = vmatprep.mubr.bf16.mxu0 0
        %3098 = vmatmul.mubr.bf16.gmra.mrb[0].mxu0 %v1390
        %v3099 = vpop.f32.mrb[0].mxu0
        %v3100 = vadd.f32 %v3051, %v3099
        %v3101 = vpop.f32.mrb[0].mxu0
        %v3102 = vpop.f32.mrb[0].mxu0
        %v3103 = vadd.f32 %v3051, %v3102
        %v3104 = vpop.f32.mrb[0].mxu0
        %3105 = vdwg.mxu0
        %v3106 = vmul.f32 %v3100, 0.35355338
        %v3107 = vmul.f32 %v3103, 0.35355338
        %s3108 = scalar_lea.vmem %s1193, 1
        %v3109 = vld [vmem:[%s3108] sm:$0x1]
        %v3111 = vlaneseq
        %v3112 = vshrl.u32 %v3111, 7
        %v3113 = vsub.s32 0, %v3112
        %v3114 = vrot.slane %v3109, %v3113
        %v3120 = vunpack.c.l.b16 %v3034
        %v3121 = vunpack.c.l.b16 %v3035
        %v3122 = vunpack.c.l.b16 %v3036
        %v3123 = vunpack.c.l.b16 %v3037
        %v3124 = vpack.c.b16 %v3121, %v3120
        %v3125 = vpack.c.b16 %v3123, %v3122
        %3128 = vmatprep.subr.bf16.mxu0 0
        %3129 = vmatpush1.bf16.msra.mxu0 %v3124
        %3130 = vmatprep.subr.bf16.mxu0 0
        %3131 = vmatpush1.bf16.msra.mxu0 %v3125
        %3132 = vmatprep.subr.bf16.mxu0 0
        %3133 = vmatpush1.bf16.msra.mxu0 0
        %3134 = vmatprep.subr.bf16.mxu0 0
        %3135 = vmatpush1.bf16.msra.mxu0 0
        %3136 = vmatprep.subr.bf16.mxu0 0
        %3137 = vmatpush1.bf16.msra.mxu0 0
        %3138 = vmatprep.subr.bf16.mxu0 0
        %3139 = vmatpush1.bf16.msra.mxu0 0
        %3140 = vmatprep.subr.bf16.mxu0 0
        %3141 = vmatpush1.bf16.msra.mxu0 0
        %3142 = vmatprep.subr.bf16.mxu0 0
        %3143 = vmatpush1.bf16.msra.mxu0 0
        %3144 = vmatprep.subr.bf16.mxu0 0
        %3145 = vmatpush1.bf16.msra.mxu0 0
        %3146 = vmatprep.subr.bf16.mxu0 0
        %3147 = vmatpush1.bf16.msra.mxu0 0
        %3148 = vmatprep.subr.bf16.mxu0 0
        %3149 = vmatpush1.bf16.msra.mxu0 0
        %3150 = vmatprep.subr.bf16.mxu0 0
        %3151 = vmatpush1.bf16.msra.mxu0 0
        %3152 = vmatprep.subr.bf16.mxu0 0
        %3153 = vmatpush1.bf16.msra.mxu0 0
        %3154 = vmatprep.subr.bf16.mxu0 0
        %3155 = vmatpush1.bf16.msra.mxu0 0
        %3156 = vmatprep.subr.bf16.mxu0 0
        %3157 = vmatpush1.bf16.msra.mxu0 0
        %3158 = vmatprep.subr.bf16.mxu0 0
        %3159 = vmatpush1.bf16.msra.mxu0 0
        %3160 = vmatprep.mubr.bf16.mxu0 0
        %3161 = vmatmul.mubr.bf16.gmra.mrb[0].mxu0 %v2806
        %v3162 = vpop.f32.mrb[0].mxu0
        %v3163 = vadd.f32 %v3114, %v3162
        %v3164 = vpop.f32.mrb[0].mxu0
        %v3165 = vpop.f32.mrb[0].mxu0
        %v3166 = vpop.f32.mrb[0].mxu0
        %3167 = vdwg.mxu0
        %s3168 = scalar_lea.vmem %s1202, 1
        %v3169 = vld [vmem:[%s3168] sm:$0x1]
        %v3171 = vlaneseq
        %v3172 = vshrl.u32 %v3171, 7
        %v3173 = vsub.s32 0, %v3172
        %v3174 = vrot.slane %v3169, %v3173
        %v3180 = vunpack.c.l.b16 %v3039
        %v3181 = vunpack.c.l.b16 %v3040
        %v3182 = vunpack.c.l.b16 %v3041
        %v3183 = vunpack.c.l.b16 %v3042
        %v3184 = vpack.c.b16 %v3181, %v3180
        %v3185 = vpack.c.b16 %v3183, %v3182
        %3188 = vmatprep.subr.bf16.mxu0 0
        %3189 = vmatpush1.bf16.msra.mxu0 %v3184
        %3190 = vmatprep.subr.bf16.mxu0 0
        %3191 = vmatpush1.bf16.msra.mxu0 %v3185
        %3192 = vmatprep.subr.bf16.mxu0 0
        %3193 = vmatpush1.bf16.msra.mxu0 0
        %3194 = vmatprep.subr.bf16.mxu0 0
        %3195 = vmatpush1.bf16.msra.mxu0 0
        %3196 = vmatprep.subr.bf16.mxu0 0
        %3197 = vmatpush1.bf16.msra.mxu0 0
        %3198 = vmatprep.subr.bf16.mxu0 0
        %3199 = vmatpush1.bf16.msra.mxu0 0
        %3200 = vmatprep.subr.bf16.mxu0 0
        %3201 = vmatpush1.bf16.msra.mxu0 0
        %3202 = vmatprep.subr.bf16.mxu0 0
        %3203 = vmatpush1.bf16.msra.mxu0 0
        %3204 = vmatprep.subr.bf16.mxu0 0
        %3205 = vmatpush1.bf16.msra.mxu0 0
        %3206 = vmatprep.subr.bf16.mxu0 0
        %3207 = vmatpush1.bf16.msra.mxu0 0
        %3208 = vmatprep.subr.bf16.mxu0 0
        %3209 = vmatpush1.bf16.msra.mxu0 0
        %3210 = vmatprep.subr.bf16.mxu0 0
        %3211 = vmatpush1.bf16.msra.mxu0 0
        %3212 = vmatprep.subr.bf16.mxu0 0
        %3213 = vmatpush1.bf16.msra.mxu0 0
        %3214 = vmatprep.subr.bf16.mxu0 0
        %3215 = vmatpush1.bf16.msra.mxu0 0
        %3216 = vmatprep.subr.bf16.mxu0 0
        %3217 = vmatpush1.bf16.msra.mxu0 0
        %3218 = vmatprep.subr.bf16.mxu0 0
        %3219 = vmatpush1.bf16.msra.mxu0 0
        %3220 = vmatprep.mubr.bf16.mxu0 0
        %3221 = vmatmul.mubr.bf16.gmra.mrb[0].mxu0 %v2806
        %v3222 = vpop.f32.mrb[0].mxu0
        %v3223 = vadd.f32 %v3174, %v3222
        %v3224 = vpop.f32.mrb[0].mxu0
        %v3225 = vpop.f32.mrb[0].mxu0
        %v3226 = vpop.f32.mrb[0].mxu0
        %3227 = vdwg.mxu0
        %v3228 = vpack.c.bf16 %v3107, %v3106
        %v3229 = vpack.c.bf16 %v3163, %v3163
        %v3231 = vsel %vm1495, %v3228, 0
        %v3234 = vsel %vm1495, %v3229, 0
        %3236 = vmatprep.subr.bf16.mxu0 0
        %3237 = vmatpush1.bf16.xpose.msra.mxu0 %v3234
        %3238 = vmatprep.subr.bf16.mxu0 0
        %3239 = vmatpush1.bf16.xpose.msra.mxu0 0
        %3240 = vmatprep.subr.bf16.mxu0 0
        %3241 = vmatpush1.bf16.xpose.msra.mxu0 0
        %3242 = vmatprep.subr.bf16.mxu0 0
        %3243 = vmatpush1.bf16.xpose.msra.mxu0 0
        %3244 = vmatprep.subr.bf16.mxu0 0
        %3245 = vmatpush1.bf16.xpose.msra.mxu0 0
        %3246 = vmatprep.subr.bf16.mxu0 0
        %3247 = vmatpush1.bf16.xpose.msra.mxu0 0
        %3248 = vmatprep.subr.bf16.mxu0 0
        %3249 = vmatpush1.bf16.xpose.msra.mxu0 0
        %3250 = vmatprep.subr.bf16.mxu0 0
        %3251 = vmatpush1.bf16.xpose.msra.mxu0 0
        %3252 = vmatprep.subr.bf16.mxu0 0
        %3253 = vmatpush1.bf16.xpose.msra.mxu0 0
        %3254 = vmatprep.subr.bf16.mxu0 0
        %3255 = vmatpush1.bf16.xpose.msra.mxu0 0
        %3256 = vmatprep.subr.bf16.mxu0 0
        %3257 = vmatpush1.bf16.xpose.msra.mxu0 0
        %3258 = vmatprep.subr.bf16.mxu0 0
        %3259 = vmatpush1.bf16.xpose.msra.mxu0 0
        %3260 = vmatprep.subr.bf16.mxu0 0
        %3261 = vmatpush1.bf16.xpose.msra.mxu0 0
        %3262 = vmatprep.subr.bf16.mxu0 0
        %3263 = vmatpush1.bf16.xpose.msra.mxu0 0
        %3264 = vmatprep.subr.bf16.mxu0 0
        %3265 = vmatpush1.bf16.xpose.msra.mxu0 0
        %3266 = vmatprep.subr.bf16.mxu0 0
        %3267 = vmatpush1.bf16.xpose.msra.mxu0 0
        %3268 = vmatprep.mubr.bf16.mxu0 0
        %3269 = vmatmul.mubr.bf16.gmra.mrb[0].mxu0 %v3231
        %v3270 = vpop.f32.mrb[0].mxu0
        %v3271 = vadd.f32 0.0, %v3270
        %v3272 = vpop.f32.mrb[0].mxu0
        %v3273 = vpop.f32.mrb[0].mxu0
        %v3274 = vadd.f32 0.0, %v3273
        %v3275 = vpop.f32.mrb[0].mxu0
        %3276 = vdwg.mxu0
        %v3277 = vsel %vm1495, %v3271, -inf
        %3278 = vmax.xlane.f32.xlu0 %v3277
        %v3279 = vpop.xlane.xlu0 %3278
        %v3280 = vsel %vm1495, %v3274, -inf
        %3281 = vmax.xlane.f32.xlu0 %v3280
        %v3282 = vpop.xlane.xlu0 %3281
        %v3283 = vsub.f32 %v3271, %v3279
        %v3284 = vsub.f32 %v3274, %v3282
        %v3285 = vmul.f32 %v3283, 1.442695
        %v3286 = vpow.pop %v3285
        %v3287 = vmul.f32 %v3284, 1.442695
        %v3288 = vpow.pop %v3287
        %v3289 = vsel %vm1495, %v3286, 0.0
        %3290 = vadd.xlane.f32.xlu0 %v3289
        %v3291 = vpop.xlane.xlu0 %3290
        %v3292 = vsel %vm1495, %v3288, 0.0
        %3293 = vadd.xlane.f32.xlu0 %v3292
        %v3294 = vpop.xlane.xlu0 %3293
        %v3295 = vrcp.pop %v3291
        %v3296 = vrcp.pop %v3294
        %v3297 = vmul.f32 %v3286, %v3295
        %v3298 = vmul.f32 %v3288, %v3296
        %v3299 = vpack.c.bf16 %v3298, %v3297
        %v3300 = vpack.c.bf16 %v3223, %v3223
        %v3302 = vsel %vm1495, %v3299, 0
        %v3305 = vsel %vm1908, %v3300, 0
        %3307 = vmatprep.subr.bf16.mxu0 0
        %3308 = vmatpush1.bf16.msra.mxu0 %v3305
        %3309 = vmatprep.subr.bf16.mxu0 0
        %3310 = vmatpush1.bf16.msra.mxu0 0
        %3311 = vmatprep.subr.bf16.mxu0 0
        %3312 = vmatpush1.bf16.msra.mxu0 0
        %3313 = vmatprep.subr.bf16.mxu0 0
        %3314 = vmatpush1.bf16.msra.mxu0 0
        %3315 = vmatprep.subr.bf16.mxu0 0
        %3316 = vmatpush1.bf16.msra.mxu0 0
        %3317 = vmatprep.subr.bf16.mxu0 0
        %3318 = vmatpush1.bf16.msra.mxu0 0
        %3319 = vmatprep.subr.bf16.mxu0 0
        %3320 = vmatpush1.bf16.msra.mxu0 0
        %3321 = vmatprep.subr.bf16.mxu0 0
        %3322 = vmatpush1.bf16.msra.mxu0 0
        %3323 = vmatprep.subr.bf16.mxu0 0
        %3324 = vmatpush1.bf16.msra.mxu0 0
        %3325 = vmatprep.subr.bf16.mxu0 0
        %3326 = vmatpush1.bf16.msra.mxu0 0
        %3327 = vmatprep.subr.bf16.mxu0 0
        %3328 = vmatpush1.bf16.msra.mxu0 0
        %3329 = vmatprep.subr.bf16.mxu0 0
        %3330 = vmatpush1.bf16.msra.mxu0 0
        %3331 = vmatprep.subr.bf16.mxu0 0
        %3332 = vmatpush1.bf16.msra.mxu0 0
        %3333 = vmatprep.subr.bf16.mxu0 0
        %3334 = vmatpush1.bf16.msra.mxu0 0
        %3335 = vmatprep.subr.bf16.mxu0 0
        %3336 = vmatpush1.bf16.msra.mxu0 0
        %3337 = vmatprep.subr.bf16.mxu0 0
        %3338 = vmatpush1.bf16.msra.mxu0 0
        %3339 = vmatprep.mubr.bf16.mxu0 0
        %3340 = vmatmul.mubr.bf16.gmra.mrb[0].mxu0 %v3302
        %v3341 = vpop.f32.mrb[0].mxu0
        %v3342 = vadd.f32 0.0, %v3341
        %v3343 = vpop.f32.mrb[0].mxu0
        %v3344 = vpop.f32.mrb[0].mxu0
        %v3345 = vadd.f32 0.0, %v3344
        %v3346 = vpop.f32.mrb[0].mxu0
        %3347 = vdwg.mxu0
        %v3348 = vpack.c.bf16 %v3345, %v3342
        %v3350 = vsel %vm1495, %v3348, 0
        %v3353 = vsel %vm1908, %v3044, 0
        %3355 = vmatprep.subr.bf16.mxu0 0
        %3356 = vmatpush1.bf16.msra.mxu0 %v3353
        %3357 = vmatprep.subr.bf16.mxu0 0
        %3358 = vmatpush1.bf16.msra.mxu0 0
        %3359 = vmatprep.subr.bf16.mxu0 0
        %3360 = vmatpush1.bf16.msra.mxu0 0
        %3361 = vmatprep.subr.bf16.mxu0 0
        %3362 = vmatpush1.bf16.msra.mxu0 0
        %3363 = vmatprep.subr.bf16.mxu0 0
        %3364 = vmatpush1.bf16.msra.mxu0 0
        %3365 = vmatprep.subr.bf16.mxu0 0
        %3366 = vmatpush1.bf16.msra.mxu0 0
        %3367 = vmatprep.subr.bf16.mxu0 0
        %3368 = vmatpush1.bf16.msra.mxu0 0
        %3369 = vmatprep.subr.bf16.mxu0 0
        %3370 = vmatpush1.bf16.msra.mxu0 0
        %3371 = vmatprep.subr.bf16.mxu0 0
        %3372 = vmatpush1.bf16.msra.mxu0 0
        %3373 = vmatprep.subr.bf16.mxu0 0
        %3374 = vmatpush1.bf16.msra.mxu0 0
        %3375 = vmatprep.subr.bf16.mxu0 0
        %3376 = vmatpush1.bf16.msra.mxu0 0
        %3377 = vmatprep.subr.bf16.mxu0 0
        %3378 = vmatpush1.bf16.msra.mxu0 0
        %3379 = vmatprep.subr.bf16.mxu0 0
        %3380 = vmatpush1.bf16.msra.mxu0 0
        %3381 = vmatprep.subr.bf16.mxu0 0
        %3382 = vmatpush1.bf16.msra.mxu0 0
        %3383 = vmatprep.subr.bf16.mxu0 0
        %3384 = vmatpush1.bf16.msra.mxu0 0
        %3385 = vmatprep.subr.bf16.mxu0 0
        %3386 = vmatpush1.bf16.msra.mxu0 0
        %3387 = vmatprep.mubr.bf16.mxu0 0
        %3388 = vmatmul.mubr.bf16.gmra.mrb[0].mxu0 %v3350
        %v3389 = vpop.f32.mrb[0].mxu0
        %v3390 = vadd.f32 0.0, %v3389
        %v3391 = vpop.f32.mrb[0].mxu0
        %v3392 = vpop.f32.mrb[0].mxu0
        %v3393 = vadd.f32 0.0, %v3392
        %v3394 = vpop.f32.mrb[0].mxu0
        %3395 = vdwg.mxu0
        %v3397 = vsel %vm1495, %v3027, 0
        %v3400 = vsel %vm1908, %v2722, 0
        %3402 = vmatprep.subr.bf16.mxu0 0
        %3403 = vmatpush1.bf16.msra.mxu0 %v3400
        %3404 = vmatprep.subr.bf16.mxu0 0
        %3405 = vmatpush1.bf16.msra.mxu0 0
        %3406 = vmatprep.subr.bf16.mxu0 0
        %3407 = vmatpush1.bf16.msra.mxu0 0
        %3408 = vmatprep.subr.bf16.mxu0 0
        %3409 = vmatpush1.bf16.msra.mxu0 0
        %3410 = vmatprep.subr.bf16.mxu0 0
        %3411 = vmatpush1.bf16.msra.mxu0 0
        %3412 = vmatprep.subr.bf16.mxu0 0
        %3413 = vmatpush1.bf16.msra.mxu0 0
        %3414 = vmatprep.subr.bf16.mxu0 0
        %3415 = vmatpush1.bf16.msra.mxu0 0
        %3416 = vmatprep.subr.bf16.mxu0 0
        %3417 = vmatpush1.bf16.msra.mxu0 0
        %3418 = vmatprep.subr.bf16.mxu0 0
        %3419 = vmatpush1.bf16.msra.mxu0 0
        %3420 = vmatprep.subr.bf16.mxu0 0
        %3421 = vmatpush1.bf16.msra.mxu0 0
        %3422 = vmatprep.subr.bf16.mxu0 0
        %3423 = vmatpush1.bf16.msra.mxu0 0
        %3424 = vmatprep.subr.bf16.mxu0 0
        %3425 = vmatpush1.bf16.msra.mxu0 0
        %3426 = vmatprep.subr.bf16.mxu0 0
        %3427 = vmatpush1.bf16.msra.mxu0 0
        %3428 = vmatprep.subr.bf16.mxu0 0
        %3429 = vmatpush1.bf16.msra.mxu0 0
        %3430 = vmatprep.subr.bf16.mxu0 0
        %3431 = vmatpush1.bf16.msra.mxu0 0
        %3432 = vmatprep.subr.bf16.mxu0 0
        %3433 = vmatpush1.bf16.msra.mxu0 0
        %3434 = vmatprep.mubr.bf16.mxu0 0
        %3435 = vmatmul.mubr.bf16.gmra.mrb[0].mxu0 %v3397
        %v3436 = vpop.f32.mrb[0].mxu0
        %v3437 = vadd.f32 %v3390, %v3436
        %v3438 = vpop.f32.mrb[0].mxu0
        %v3439 = vpop.f32.mrb[0].mxu0
        %v3440 = vadd.f32 %v3393, %v3439
        %v3441 = vpop.f32.mrb[0].mxu0
        %3442 = vdwg.mxu0
        %s3443 = scalar_lea.vmem %s1180, 32
        %v3444 = vld [vmem:[%s3443] sm:$0xf]
        %v3445 = vld [vmem:[%s3443 + $0x4] sm:$0xf]
        %v3446 = vld [vmem:[%s3443 + $0x8] sm:$0xf]
        %v3447 = vld [vmem:[%s3443 + $0xc] sm:$0xf]
        %s3448 = scalar_lea.vmem %s1189, 32
        %v3449 = vld [vmem:[%s3448] sm:$0xf]
        %v3450 = vld [vmem:[%s3448 + $0x4] sm:$0xf]
        %v3451 = vld [vmem:[%s3448 + $0x8] sm:$0xf]
        %v3452 = vld [vmem:[%s3448 + $0xc] sm:$0xf]
        %s3453 = scalar_lea.vmem %s1198, 32
        %v3454 = vld [vmem:[%s3453] sm:$0xf]
        %v3455 = vld [vmem:[%s3453 + $0x4] sm:$0xf]
        %v3456 = vld [vmem:[%s3453 + $0x8] sm:$0xf]
        %v3457 = vld [vmem:[%s3453 + $0xc] sm:$0xf]
        %s3458 = scalar_lea.vmem %s1207, 8
        %v3459 = vld [vmem:[%s3458] sm:$0xf]
        %s3460 = scalar_lea.vmem %s1184, 2
        %v3461 = vld [vmem:[%s3460] sm:$0x1]
        %v3463 = vlaneseq
        %v3464 = vshrl.u32 %v3463, 7
        %v3465 = vsub.s32 0, %v3464
        %v3466 = vrot.slane %v3461, %v3465
        %v3472 = vunpack.c.l.b16 %v3444
        %v3473 = vunpack.c.l.b16 %v3445
        %v3474 = vunpack.c.l.b16 %v3446
        %v3475 = vunpack.c.l.b16 %v3447
        %v3476 = vpack.c.b16 %v3473, %v3472
        %v3477 = vpack.c.b16 %v3475, %v3474
        %3480 = vmatprep.subr.bf16.mxu0 0
        %3481 = vmatpush1.bf16.msra.mxu0 %v3476
        %3482 = vmatprep.subr.bf16.mxu0 0
        %3483 = vmatpush1.bf16.msra.mxu0 %v3477
        %3484 = vmatprep.subr.bf16.mxu0 0
        %3485 = vmatpush1.bf16.msra.mxu0 0
        %3486 = vmatprep.subr.bf16.mxu0 0
        %3487 = vmatpush1.bf16.msra.mxu0 0
        %3488 = vmatprep.subr.bf16.mxu0 0
        %3489 = vmatpush1.bf16.msra.mxu0 0
        %3490 = vmatprep.subr.bf16.mxu0 0
        %3491 = vmatpush1.bf16.msra.mxu0 0
        %3492 = vmatprep.subr.bf16.mxu0 0
        %3493 = vmatpush1.bf16.msra.mxu0 0
        %3494 = vmatprep.subr.bf16.mxu0 0
        %3495 = vmatpush1.bf16.msra.mxu0 0
        %3496 = vmatprep.subr.bf16.mxu0 0
        %3497 = vmatpush1.bf16.msra.mxu0 0
        %3498 = vmatprep.subr.bf16.mxu0 0
        %3499 = vmatpush1.bf16.msra.mxu0 0
        %3500 = vmatprep.subr.bf16.mxu0 0
        %3501 = vmatpush1.bf16.msra.mxu0 0
        %3502 = vmatprep.subr.bf16.mxu0 0
        %3503 = vmatpush1.bf16.msra.mxu0 0
        %3504 = vmatprep.subr.bf16.mxu0 0
        %3505 = vmatpush1.bf16.msra.mxu0 0
        %3506 = vmatprep.subr.bf16.mxu0 0
        %3507 = vmatpush1.bf16.msra.mxu0 0
        %3508 = vmatprep.subr.bf16.mxu0 0
        %3509 = vmatpush1.bf16.msra.mxu0 0
        %3510 = vmatprep.subr.bf16.mxu0 0
        %3511 = vmatpush1.bf16.msra.mxu0 0
        %3512 = vmatprep.mubr.bf16.mxu0 0
        %3513 = vmatmul.mubr.bf16.gmra.mrb[0].mxu0 %v1390
        %v3514 = vpop.f32.mrb[0].mxu0
        %v3515 = vadd.f32 %v3466, %v3514
        %v3516 = vpop.f32.mrb[0].mxu0
        %v3517 = vpop.f32.mrb[0].mxu0
        %v3518 = vadd.f32 %v3466, %v3517
        %v3519 = vpop.f32.mrb[0].mxu0
        %3520 = vdwg.mxu0
        %v3521 = vmul.f32 %v3515, 0.35355338
        %v3522 = vmul.f32 %v3518, 0.35355338
        %s3523 = scalar_lea.vmem %s1193, 2
        %v3524 = vld [vmem:[%s3523] sm:$0x1]
        %v3526 = vlaneseq
        %v3527 = vshrl.u32 %v3526, 7
        %v3528 = vsub.s32 0, %v3527
        %v3529 = vrot.slane %v3524, %v3528
        %v3535 = vunpack.c.l.b16 %v3449
        %v3536 = vunpack.c.l.b16 %v3450
        %v3537 = vunpack.c.l.b16 %v3451
        %v3538 = vunpack.c.l.b16 %v3452
        %v3539 = vpack.c.b16 %v3536, %v3535
        %v3540 = vpack.c.b16 %v3538, %v3537
        %3543 = vmatprep.subr.bf16.mxu0 0
        %3544 = vmatpush1.bf16.msra.mxu0 %v3539
        %3545 = vmatprep.subr.bf16.mxu0 0
        %3546 = vmatpush1.bf16.msra.mxu0 %v3540
        %3547 = vmatprep.subr.bf16.mxu0 0
        %3548 = vmatpush1.bf16.msra.mxu0 0
        %3549 = vmatprep.subr.bf16.mxu0 0
        %3550 = vmatpush1.bf16.msra.mxu0 0
        %3551 = vmatprep.subr.bf16.mxu0 0
        %3552 = vmatpush1.bf16.msra.mxu0 0
        %3553 = vmatprep.subr.bf16.mxu0 0
        %3554 = vmatpush1.bf16.msra.mxu0 0
        %3555 = vmatprep.subr.bf16.mxu0 0
        %3556 = vmatpush1.bf16.msra.mxu0 0
        %3557 = vmatprep.subr.bf16.mxu0 0
        %3558 = vmatpush1.bf16.msra.mxu0 0
        %3559 = vmatprep.subr.bf16.mxu0 0
        %3560 = vmatpush1.bf16.msra.mxu0 0
        %3561 = vmatprep.subr.bf16.mxu0 0
        %3562 = vmatpush1.bf16.msra.mxu0 0
        %3563 = vmatprep.subr.bf16.mxu0 0
        %3564 = vmatpush1.bf16.msra.mxu0 0
        %3565 = vmatprep.subr.bf16.mxu0 0
        %3566 = vmatpush1.bf16.msra.mxu0 0
        %3567 = vmatprep.subr.bf16.mxu0 0
        %3568 = vmatpush1.bf16.msra.mxu0 0
        %3569 = vmatprep.subr.bf16.mxu0 0
        %3570 = vmatpush1.bf16.msra.mxu0 0
        %3571 = vmatprep.subr.bf16.mxu0 0
        %3572 = vmatpush1.bf16.msra.mxu0 0
        %3573 = vmatprep.subr.bf16.mxu0 0
        %3574 = vmatpush1.bf16.msra.mxu0 0
        %3575 = vmatprep.mubr.bf16.mxu0 0
        %3576 = vmatmul.mubr.bf16.gmra.mrb[0].mxu0 %v2806
        %v3577 = vpop.f32.mrb[0].mxu0
        %v3578 = vadd.f32 %v3529, %v3577
        %v3579 = vpop.f32.mrb[0].mxu0
        %v3580 = vpop.f32.mrb[0].mxu0
        %v3581 = vpop.f32.mrb[0].mxu0
        %3582 = vdwg.mxu0
        %s3583 = scalar_lea.vmem %s1202, 2
        %v3584 = vld [vmem:[%s3583] sm:$0x1]
        %v3586 = vlaneseq
        %v3587 = vshrl.u32 %v3586, 7
        %v3588 = vsub.s32 0, %v3587
        %v3589 = vrot.slane %v3584, %v3588
        %v3595 = vunpack.c.l.b16 %v3454
        %v3596 = vunpack.c.l.b16 %v3455
        %v3597 = vunpack.c.l.b16 %v3456
        %v3598 = vunpack.c.l.b16 %v3457
        %v3599 = vpack.c.b16 %v3596, %v3595
        %v3600 = vpack.c.b16 %v3598, %v3597
        %3603 = vmatprep.subr.bf16.mxu0 0
        %3604 = vmatpush1.bf16.msra.mxu0 %v3599
        %3605 = vmatprep.subr.bf16.mxu0 0
        %3606 = vmatpush1.bf16.msra.mxu0 %v3600
        %3607 = vmatprep.subr.bf16.mxu0 0
        %3608 = vmatpush1.bf16.msra.mxu0 0
        %3609 = vmatprep.subr.bf16.mxu0 0
        %3610 = vmatpush1.bf16.msra.mxu0 0
        %3611 = vmatprep.subr.bf16.mxu0 0
        %3612 = vmatpush1.bf16.msra.mxu0 0
        %3613 = vmatprep.subr.bf16.mxu0 0
        %3614 = vmatpush1.bf16.msra.mxu0 0
        %3615 = vmatprep.subr.bf16.mxu0 0
        %3616 = vmatpush1.bf16.msra.mxu0 0
        %3617 = vmatprep.subr.bf16.mxu0 0
        %3618 = vmatpush1.bf16.msra.mxu0 0
        %3619 = vmatprep.subr.bf16.mxu0 0
        %3620 = vmatpush1.bf16.msra.mxu0 0
        %3621 = vmatprep.subr.bf16.mxu0 0
        %3622 = vmatpush1.bf16.msra.mxu0 0
        %3623 = vmatprep.subr.bf16.mxu0 0
        %3624 = vmatpush1.bf16.msra.mxu0 0
        %3625 = vmatprep.subr.bf16.mxu0 0
        %3626 = vmatpush1.bf16.msra.mxu0 0
        %3627 = vmatprep.subr.bf16.mxu0 0
        %3628 = vmatpush1.bf16.msra.mxu0 0
        %3629 = vmatprep.subr.bf16.mxu0 0
        %3630 = vmatpush1.bf16.msra.mxu0 0
        %3631 = vmatprep.subr.bf16.mxu0 0
        %3632 = vmatpush1.bf16.msra.mxu0 0
        %3633 = vmatprep.subr.bf16.mxu0 0
        %3634 = vmatpush1.bf16.msra.mxu0 0
        %3635 = vmatprep.mubr.bf16.mxu0 0
        %3636 = vmatmul.mubr.bf16.gmra.mrb[0].mxu0 %v2806
        %v3637 = vpop.f32.mrb[0].mxu0
        %v3638 = vadd.f32 %v3589, %v3637
        %v3639 = vpop.f32.mrb[0].mxu0
        %v3640 = vpop.f32.mrb[0].mxu0
        %v3641 = vpop.f32.mrb[0].mxu0
        %3642 = vdwg.mxu0
        %v3643 = vpack.c.bf16 %v3522, %v3521
        %v3644 = vpack.c.bf16 %v3578, %v3578
        %v3646 = vsel %vm1495, %v3643, 0
        %v3649 = vsel %vm1495, %v3644, 0
        %3651 = vmatprep.subr.bf16.mxu0 0
        %3652 = vmatpush1.bf16.xpose.msra.mxu0 %v3649
        %3653 = vmatprep.subr.bf16.mxu0 0
        %3654 = vmatpush1.bf16.xpose.msra.mxu0 0
        %3655 = vmatprep.subr.bf16.mxu0 0
        %3656 = vmatpush1.bf16.xpose.msra.mxu0 0
        %3657 = vmatprep.subr.bf16.mxu0 0
        %3658 = vmatpush1.bf16.xpose.msra.mxu0 0
        %3659 = vmatprep.subr.bf16.mxu0 0
        %3660 = vmatpush1.bf16.xpose.msra.mxu0 0
        %3661 = vmatprep.subr.bf16.mxu0 0
        %3662 = vmatpush1.bf16.xpose.msra.mxu0 0
        %3663 = vmatprep.subr.bf16.mxu0 0
        %3664 = vmatpush1.bf16.xpose.msra.mxu0 0
        %3665 = vmatprep.subr.bf16.mxu0 0
        %3666 = vmatpush1.bf16.xpose.msra.mxu0 0
        %3667 = vmatprep.subr.bf16.mxu0 0
        %3668 = vmatpush1.bf16.xpose.msra.mxu0 0
        %3669 = vmatprep.subr.bf16.mxu0 0
        %3670 = vmatpush1.bf16.xpose.msra.mxu0 0
        %3671 = vmatprep.subr.bf16.mxu0 0
        %3672 = vmatpush1.bf16.xpose.msra.mxu0 0
        %3673 = vmatprep.subr.bf16.mxu0 0
        %3674 = vmatpush1.bf16.xpose.msra.mxu0 0
        %3675 = vmatprep.subr.bf16.mxu0 0
        %3676 = vmatpush1.bf16.xpose.msra.mxu0 0
        %3677 = vmatprep.subr.bf16.mxu0 0
        %3678 = vmatpush1.bf16.xpose.msra.mxu0 0
        %3679 = vmatprep.subr.bf16.mxu0 0
        %3680 = vmatpush1.bf16.xpose.msra.mxu0 0
        %3681 = vmatprep.subr.bf16.mxu0 0
        %3682 = vmatpush1.bf16.xpose.msra.mxu0 0
        %3683 = vmatprep.mubr.bf16.mxu0 0
        %3684 = vmatmul.mubr.bf16.gmra.mrb[0].mxu0 %v3646
        %v3685 = vpop.f32.mrb[0].mxu0
        %v3686 = vadd.f32 0.0, %v3685
        %v3687 = vpop.f32.mrb[0].mxu0
        %v3688 = vpop.f32.mrb[0].mxu0
        %v3689 = vadd.f32 0.0, %v3688
        %v3690 = vpop.f32.mrb[0].mxu0
        %3691 = vdwg.mxu0
        %v3692 = vsel %vm1495, %v3686, -inf
        %3693 = vmax.xlane.f32.xlu0 %v3692
        %v3694 = vpop.xlane.xlu0 %3693
        %v3695 = vsel %vm1495, %v3689, -inf
        %3696 = vmax.xlane.f32.xlu0 %v3695
        %v3697 = vpop.xlane.xlu0 %3696
        %v3698 = vsub.f32 %v3686, %v3694
        %v3699 = vsub.f32 %v3689, %v3697
        %v3700 = vmul.f32 %v3698, 1.442695
        %v3701 = vpow.pop %v3700
        %v3702 = vmul.f32 %v3699, 1.442695
        %v3703 = vpow.pop %v3702
        %v3704 = vsel %vm1495, %v3701, 0.0
        %3705 = vadd.xlane.f32.xlu0 %v3704
        %v3706 = vpop.xlane.xlu0 %3705
        %v3707 = vsel %vm1495, %v3703, 0.0
        %3708 = vadd.xlane.f32.xlu0 %v3707
        %v3709 = vpop.xlane.xlu0 %3708
        %v3710 = vrcp.pop %v3706
        %v3711 = vrcp.pop %v3709
        %v3712 = vmul.f32 %v3701, %v3710
        %v3713 = vmul.f32 %v3703, %v3711
        %v3714 = vpack.c.bf16 %v3713, %v3712
        %v3715 = vpack.c.bf16 %v3638, %v3638
        %v3717 = vsel %vm1495, %v3714, 0
        %v3720 = vsel %vm1908, %v3715, 0
        %3722 = vmatprep.subr.bf16.mxu0 0
        %3723 = vmatpush1.bf16.msra.mxu0 %v3720
        %3724 = vmatprep.subr.bf16.mxu0 0
        %3725 = vmatpush1.bf16.msra.mxu0 0
        %3726 = vmatprep.subr.bf16.mxu0 0
        %3727 = vmatpush1.bf16.msra.mxu0 0
        %3728 = vmatprep.subr.bf16.mxu0 0
        %3729 = vmatpush1.bf16.msra.mxu0 0
        %3730 = vmatprep.subr.bf16.mxu0 0
        %3731 = vmatpush1.bf16.msra.mxu0 0
        %3732 = vmatprep.subr.bf16.mxu0 0
        %3733 = vmatpush1.bf16.msra.mxu0 0
        %3734 = vmatprep.subr.bf16.mxu0 0
        %3735 = vmatpush1.bf16.msra.mxu0 0
        %3736 = vmatprep.subr.bf16.mxu0 0
        %3737 = vmatpush1.bf16.msra.mxu0 0
        %3738 = vmatprep.subr.bf16.mxu0 0
        %3739 = vmatpush1.bf16.msra.mxu0 0
        %3740 = vmatprep.subr.bf16.mxu0 0
        %3741 = vmatpush1.bf16.msra.mxu0 0
        %3742 = vmatprep.subr.bf16.mxu0 0
        %3743 = vmatpush1.bf16.msra.mxu0 0
        %3744 = vmatprep.subr.bf16.mxu0 0
        %3745 = vmatpush1.bf16.msra.mxu0 0
        %3746 = vmatprep.subr.bf16.mxu0 0
        %3747 = vmatpush1.bf16.msra.mxu0 0
        %3748 = vmatprep.subr.bf16.mxu0 0
        %3749 = vmatpush1.bf16.msra.mxu0 0
        %3750 = vmatprep.subr.bf16.mxu0 0
        %3751 = vmatpush1.bf16.msra.mxu0 0
        %3752 = vmatprep.subr.bf16.mxu0 0
        %3753 = vmatpush1.bf16.msra.mxu0 0
        %3754 = vmatprep.mubr.bf16.mxu0 0
        %3755 = vmatmul.mubr.bf16.gmra.mrb[0].mxu0 %v3717
        %v3756 = vpop.f32.mrb[0].mxu0
        %v3757 = vadd.f32 0.0, %v3756
        %v3758 = vpop.f32.mrb[0].mxu0
        %v3759 = vpop.f32.mrb[0].mxu0
        %v3760 = vadd.f32 0.0, %v3759
        %v3761 = vpop.f32.mrb[0].mxu0
        %3762 = vdwg.mxu0
        %v3763 = vpack.c.bf16 %v3760, %v3757
        %v3765 = vsel %vm1495, %v3763, 0
        %v3768 = vsel %vm1908, %v3459, 0
        %3770 = vmatprep.subr.bf16.mxu0 0
        %3771 = vmatpush1.bf16.msra.mxu0 %v3768
        %3772 = vmatprep.subr.bf16.mxu0 0
        %3773 = vmatpush1.bf16.msra.mxu0 0
        %3774 = vmatprep.subr.bf16.mxu0 0
        %3775 = vmatpush1.bf16.msra.mxu0 0
        %3776 = vmatprep.subr.bf16.mxu0 0
        %3777 = vmatpush1.bf16.msra.mxu0 0
        %3778 = vmatprep.subr.bf16.mxu0 0
        %3779 = vmatpush1.bf16.msra.mxu0 0
        %3780 = vmatprep.subr.bf16.mxu0 0
        %3781 = vmatpush1.bf16.msra.mxu0 0
        %3782 = vmatprep.subr.bf16.mxu0 0
        %3783 = vmatpush1.bf16.msra.mxu0 0
        %3784 = vmatprep.subr.bf16.mxu0 0
        %3785 = vmatpush1.bf16.msra.mxu0 0
        %3786 = vmatprep.subr.bf16.mxu0 0
        %3787 = vmatpush1.bf16.msra.mxu0 0
        %3788 = vmatprep.subr.bf16.mxu0 0
        %3789 = vmatpush1.bf16.msra.mxu0 0
        %3790 = vmatprep.subr.bf16.mxu0 0
        %3791 = vmatpush1.bf16.msra.mxu0 0
        %3792 = vmatprep.subr.bf16.mxu0 0
        %3793 = vmatpush1.bf16.msra.mxu0 0
        %3794 = vmatprep.subr.bf16.mxu0 0
        %3795 = vmatpush1.bf16.msra.mxu0 0
        %3796 = vmatprep.subr.bf16.mxu0 0
        %3797 = vmatpush1.bf16.msra.mxu0 0
        %3798 = vmatprep.subr.bf16.mxu0 0
        %3799 = vmatpush1.bf16.msra.mxu0 0
        %3800 = vmatprep.subr.bf16.mxu0 0
        %3801 = vmatpush1.bf16.msra.mxu0 0
        %3802 = vmatprep.mubr.bf16.mxu0 0
        %3803 = vmatmul.mubr.bf16.gmra.mrb[0].mxu0 %v3765
        %v3804 = vpop.f32.mrb[0].mxu0
        %v3805 = vadd.f32 0.0, %v3804
        %v3806 = vpop.f32.mrb[0].mxu0
        %v3807 = vpop.f32.mrb[0].mxu0
        %v3808 = vadd.f32 0.0, %v3807
        %v3809 = vpop.f32.mrb[0].mxu0
        %3810 = vdwg.mxu0
        %v3811 = vadd.f32 %v3437, %v3805
        %v3812 = vadd.f32 %v3440, %v3808
        %s3813 = scalar_lea.vmem %s1180, 48
        %v3814 = vld [vmem:[%s3813] sm:$0xf]
        %v3815 = vld [vmem:[%s3813 + $0x4] sm:$0xf]
        %v3816 = vld [vmem:[%s3813 + $0x8] sm:$0xf]
        %v3817 = vld [vmem:[%s3813 + $0xc] sm:$0xf]
        %s3818 = scalar_lea.vmem %s1189, 48
        %v3819 = vld [vmem:[%s3818] sm:$0xf]
        %v3820 = vld [vmem:[%s3818 + $0x4] sm:$0xf]
        %v3821 = vld [vmem:[%s3818 + $0x8] sm:$0xf]
        %v3822 = vld [vmem:[%s3818 + $0xc] sm:$0xf]
        %s3823 = scalar_lea.vmem %s1198, 48
        %v3824 = vld [vmem:[%s3823] sm:$0xf]
        %v3825 = vld [vmem:[%s3823 + $0x4] sm:$0xf]
        %v3826 = vld [vmem:[%s3823 + $0x8] sm:$0xf]
        %v3827 = vld [vmem:[%s3823 + $0xc] sm:$0xf]
        %s3828 = scalar_lea.vmem %s1207, 12
        %v3829 = vld [vmem:[%s3828] sm:$0xf]
        %s3830 = scalar_lea.vmem %s1184, 3
        %v3831 = vld [vmem:[%s3830] sm:$0x1]
        %v3833 = vlaneseq
        %v3834 = vshrl.u32 %v3833, 7
        %v3835 = vsub.s32 0, %v3834
        %v3836 = vrot.slane %v3831, %v3835
        %v3842 = vunpack.c.l.b16 %v3814
        %v3843 = vunpack.c.l.b16 %v3815
        %v3844 = vunpack.c.l.b16 %v3816
        %v3845 = vunpack.c.l.b16 %v3817
        %v3846 = vpack.c.b16 %v3843, %v3842
        %v3847 = vpack.c.b16 %v3845, %v3844
        %3850 = vmatprep.subr.bf16.mxu0 0
        %3851 = vmatpush1.bf16.msra.mxu0 %v3846
        %3852 = vmatprep.subr.bf16.mxu0 0
        %3853 = vmatpush1.bf16.msra.mxu0 %v3847
        %3854 = vmatprep.subr.bf16.mxu0 0
        %3855 = vmatpush1.bf16.msra.mxu0 0
        %3856 = vmatprep.subr.bf16.mxu0 0
        %3857 = vmatpush1.bf16.msra.mxu0 0
        %3858 = vmatprep.subr.bf16.mxu0 0
        %3859 = vmatpush1.bf16.msra.mxu0 0
        %3860 = vmatprep.subr.bf16.mxu0 0
        %3861 = vmatpush1.bf16.msra.mxu0 0
        %3862 = vmatprep.subr.bf16.mxu0 0
        %3863 = vmatpush1.bf16.msra.mxu0 0
        %3864 = vmatprep.subr.bf16.mxu0 0
        %3865 = vmatpush1.bf16.msra.mxu0 0
        %3866 = vmatprep.subr.bf16.mxu0 0
        %3867 = vmatpush1.bf16.msra.mxu0 0
        %3868 = vmatprep.subr.bf16.mxu0 0
        %3869 = vmatpush1.bf16.msra.mxu0 0
        %3870 = vmatprep.subr.bf16.mxu0 0
        %3871 = vmatpush1.bf16.msra.mxu0 0
        %3872 = vmatprep.subr.bf16.mxu0 0
        %3873 = vmatpush1.bf16.msra.mxu0 0
        %3874 = vmatprep.subr.bf16.mxu0 0
        %3875 = vmatpush1.bf16.msra.mxu0 0
        %3876 = vmatprep.subr.bf16.mxu0 0
        %3877 = vmatpush1.bf16.msra.mxu0 0
        %3878 = vmatprep.subr.bf16.mxu0 0
        %3879 = vmatpush1.bf16.msra.mxu0 0
        %3880 = vmatprep.subr.bf16.mxu0 0
        %3881 = vmatpush1.bf16.msra.mxu0 0
        %3882 = vmatprep.mubr.bf16.mxu0 0
        %3883 = vmatmul.mubr.bf16.gmra.mrb[0].mxu0 %v1390
        %v3884 = vpop.f32.mrb[0].mxu0
        %v3885 = vadd.f32 %v3836, %v3884
        %v3886 = vpop.f32.mrb[0].mxu0
        %v3887 = vpop.f32.mrb[0].mxu0
        %v3888 = vadd.f32 %v3836, %v3887
        %v3889 = vpop.f32.mrb[0].mxu0
        %3890 = vdwg.mxu0
        %v3891 = vmul.f32 %v3885, 0.35355338
        %v3892 = vmul.f32 %v3888, 0.35355338
        %s3893 = scalar_lea.vmem %s1193, 3
        %v3894 = vld [vmem:[%s3893] sm:$0x1]
        %v3896 = vlaneseq
        %v3897 = vshrl.u32 %v3896, 7
        %v3898 = vsub.s32 0, %v3897
        %v3899 = vrot.slane %v3894, %v3898
        %v3905 = vunpack.c.l.b16 %v3819
        %v3906 = vunpack.c.l.b16 %v3820
        %v3907 = vunpack.c.l.b16 %v3821
        %v3908 = vunpack.c.l.b16 %v3822
        %v3909 = vpack.c.b16 %v3906, %v3905
        %v3910 = vpack.c.b16 %v3908, %v3907
        %3913 = vmatprep.subr.bf16.mxu0 0
        %3914 = vmatpush1.bf16.msra.mxu0 %v3909
        %3915 = vmatprep.subr.bf16.mxu0 0
        %3916 = vmatpush1.bf16.msra.mxu0 %v3910
        %3917 = vmatprep.subr.bf16.mxu0 0
        %3918 = vmatpush1.bf16.msra.mxu0 0
        %3919 = vmatprep.subr.bf16.mxu0 0
        %3920 = vmatpush1.bf16.msra.mxu0 0
        %3921 = vmatprep.subr.bf16.mxu0 0
        %3922 = vmatpush1.bf16.msra.mxu0 0
        %3923 = vmatprep.subr.bf16.mxu0 0
        %3924 = vmatpush1.bf16.msra.mxu0 0
        %3925 = vmatprep.subr.bf16.mxu0 0
        %3926 = vmatpush1.bf16.msra.mxu0 0
        %3927 = vmatprep.subr.bf16.mxu0 0
        %3928 = vmatpush1.bf16.msra.mxu0 0
        %3929 = vmatprep.subr.bf16.mxu0 0
        %3930 = vmatpush1.bf16.msra.mxu0 0
        %3931 = vmatprep.subr.bf16.mxu0 0
        %3932 = vmatpush1.bf16.msra.mxu0 0
        %3933 = vmatprep.subr.bf16.mxu0 0
        %3934 = vmatpush1.bf16.msra.mxu0 0
        %3935 = vmatprep.subr.bf16.mxu0 0
        %3936 = vmatpush1.bf16.msra.mxu0 0
        %3937 = vmatprep.subr.bf16.mxu0 0
        %3938 = vmatpush1.bf16.msra.mxu0 0
        %3939 = vmatprep.subr.bf16.mxu0 0
        %3940 = vmatpush1.bf16.msra.mxu0 0
        %3941 = vmatprep.subr.bf16.mxu0 0
        %3942 = vmatpush1.bf16.msra.mxu0 0
        %3943 = vmatprep.subr.bf16.mxu0 0
        %3944 = vmatpush1.bf16.msra.mxu0 0
        %3945 = vmatprep.mubr.bf16.mxu0 0
        %3946 = vmatmul.mubr.bf16.gmra.mrb[0].mxu0 %v2806
        %v3947 = vpop.f32.mrb[0].mxu0
        %v3948 = vadd.f32 %v3899, %v3947
        %v3949 = vpop.f32.mrb[0].mxu0
        %v3950 = vpop.f32.mrb[0].mxu0
        %v3951 = vpop.f32.mrb[0].mxu0
        %3952 = vdwg.mxu0
        %s3953 = scalar_lea.vmem %s1202, 3
        %v3954 = vld [vmem:[%s3953] sm:$0x1]
        %v3956 = vlaneseq
        %v3957 = vshrl.u32 %v3956, 7
        %v3958 = vsub.s32 0, %v3957
        %v3959 = vrot.slane %v3954, %v3958
        %v3965 = vunpack.c.l.b16 %v3824
        %v3966 = vunpack.c.l.b16 %v3825
        %v3967 = vunpack.c.l.b16 %v3826
        %v3968 = vunpack.c.l.b16 %v3827
        %v3969 = vpack.c.b16 %v3966, %v3965
        %v3970 = vpack.c.b16 %v3968, %v3967
        %3973 = vmatprep.subr.bf16.mxu0 0
        %3974 = vmatpush1.bf16.msra.mxu0 %v3969
        %3975 = vmatprep.subr.bf16.mxu0 0
        %3976 = vmatpush1.bf16.msra.mxu0 %v3970
        %3977 = vmatprep.subr.bf16.mxu0 0
        %3978 = vmatpush1.bf16.msra.mxu0 0
        %3979 = vmatprep.subr.bf16.mxu0 0
        %3980 = vmatpush1.bf16.msra.mxu0 0
        %3981 = vmatprep.subr.bf16.mxu0 0
        %3982 = vmatpush1.bf16.msra.mxu0 0
        %3983 = vmatprep.subr.bf16.mxu0 0
        %3984 = vmatpush1.bf16.msra.mxu0 0
        %3985 = vmatprep.subr.bf16.mxu0 0
        %3986 = vmatpush1.bf16.msra.mxu0 0
        %3987 = vmatprep.subr.bf16.mxu0 0
        %3988 = vmatpush1.bf16.msra.mxu0 0
        %3989 = vmatprep.subr.bf16.mxu0 0
        %3990 = vmatpush1.bf16.msra.mxu0 0
        %3991 = vmatprep.subr.bf16.mxu0 0
        %3992 = vmatpush1.bf16.msra.mxu0 0
        %3993 = vmatprep.subr.bf16.mxu0 0
        %3994 = vmatpush1.bf16.msra.mxu0 0
        %3995 = vmatprep.subr.bf16.mxu0 0
        %3996 = vmatpush1.bf16.msra.mxu0 0
        %3997 = vmatprep.subr.bf16.mxu0 0
        %3998 = vmatpush1.bf16.msra.mxu0 0
        %3999 = vmatprep.subr.bf16.mxu0 0
        %4000 = vmatpush1.bf16.msra.mxu0 0
        %4001 = vmatprep.subr.bf16.mxu0 0
        %4002 = vmatpush1.bf16.msra.mxu0 0
        %4003 = vmatprep.subr.bf16.mxu0 0
        %4004 = vmatpush1.bf16.msra.mxu0 0
        %4005 = vmatprep.mubr.bf16.mxu0 0
        %4006 = vmatmul.mubr.bf16.gmra.mrb[0].mxu0 %v2806
        %v4007 = vpop.f32.mrb[0].mxu0
        %v4008 = vadd.f32 %v3959, %v4007
        %v4009 = vpop.f32.mrb[0].mxu0
        %v4010 = vpop.f32.mrb[0].mxu0
        %v4011 = vpop.f32.mrb[0].mxu0
        %4012 = vdwg.mxu0
        %v4013 = vpack.c.bf16 %v3892, %v3891
        %v4014 = vpack.c.bf16 %v3948, %v3948
        %v4016 = vsel %vm1495, %v4013, 0
        %v4019 = vsel %vm1495, %v4014, 0
        %4021 = vmatprep.subr.bf16.mxu0 0
        %4022 = vmatpush1.bf16.xpose.msra.mxu0 %v4019
        %4023 = vmatprep.subr.bf16.mxu0 0
        %4024 = vmatpush1.bf16.xpose.msra.mxu0 0
        %4025 = vmatprep.subr.bf16.mxu0 0
        %4026 = vmatpush1.bf16.xpose.msra.mxu0 0
        %4027 = vmatprep.subr.bf16.mxu0 0
        %4028 = vmatpush1.bf16.xpose.msra.mxu0 0
        %4029 = vmatprep.subr.bf16.mxu0 0
        %4030 = vmatpush1.bf16.xpose.msra.mxu0 0
        %4031 = vmatprep.subr.bf16.mxu0 0
        %4032 = vmatpush1.bf16.xpose.msra.mxu0 0
        %4033 = vmatprep.subr.bf16.mxu0 0
        %4034 = vmatpush1.bf16.xpose.msra.mxu0 0
        %4035 = vmatprep.subr.bf16.mxu0 0
        %4036 = vmatpush1.bf16.xpose.msra.mxu0 0
        %4037 = vmatprep.subr.bf16.mxu0 0
        %4038 = vmatpush1.bf16.xpose.msra.mxu0 0
        %4039 = vmatprep.subr.bf16.mxu0 0
        %4040 = vmatpush1.bf16.xpose.msra.mxu0 0
        %4041 = vmatprep.subr.bf16.mxu0 0
        %4042 = vmatpush1.bf16.xpose.msra.mxu0 0
        %4043 = vmatprep.subr.bf16.mxu0 0
        %4044 = vmatpush1.bf16.xpose.msra.mxu0 0
        %4045 = vmatprep.subr.bf16.mxu0 0
        %4046 = vmatpush1.bf16.xpose.msra.mxu0 0
        %4047 = vmatprep.subr.bf16.mxu0 0
        %4048 = vmatpush1.bf16.xpose.msra.mxu0 0
        %4049 = vmatprep.subr.bf16.mxu0 0
        %4050 = vmatpush1.bf16.xpose.msra.mxu0 0
        %4051 = vmatprep.subr.bf16.mxu0 0
        %4052 = vmatpush1.bf16.xpose.msra.mxu0 0
        %4053 = vmatprep.mubr.bf16.mxu0 0
        %4054 = vmatmul.mubr.bf16.gmra.mrb[0].mxu0 %v4016
        %v4055 = vpop.f32.mrb[0].mxu0
        %v4056 = vadd.f32 0.0, %v4055
        %v4057 = vpop.f32.mrb[0].mxu0
        %v4058 = vpop.f32.mrb[0].mxu0
        %v4059 = vadd.f32 0.0, %v4058
        %v4060 = vpop.f32.mrb[0].mxu0
        %4061 = vdwg.mxu0
        %v4062 = vsel %vm1495, %v4056, -inf
        %4063 = vmax.xlane.f32.xlu0 %v4062
        %v4064 = vpop.xlane.xlu0 %4063
        %v4065 = vsel %vm1495, %v4059, -inf
        %4066 = vmax.xlane.f32.xlu0 %v4065
        %v4067 = vpop.xlane.xlu0 %4066
        %v4068 = vsub.f32 %v4056, %v4064
        %v4069 = vsub.f32 %v4059, %v4067
        %v4070 = vmul.f32 %v4068, 1.442695
        %v4071 = vpow.pop %v4070
        %v4072 = vmul.f32 %v4069, 1.442695
        %v4073 = vpow.pop %v4072
        %v4074 = vsel %vm1495, %v4071, 0.0
        %4075 = vadd.xlane.f32.xlu0 %v4074
        %v4076 = vpop.xlane.xlu0 %4075
        %v4077 = vsel %vm1495, %v4073, 0.0
        %4078 = vadd.xlane.f32.xlu0 %v4077
        %v4079 = vpop.xlane.xlu0 %4078
        %v4080 = vrcp.pop %v4076
        %v4081 = vrcp.pop %v4079
        %v4082 = vmul.f32 %v4071, %v4080
        %v4083 = vmul.f32 %v4073, %v4081
        %v4084 = vpack.c.bf16 %v4083, %v4082
        %v4085 = vpack.c.bf16 %v4008, %v4008
        %v4087 = vsel %vm1495, %v4084, 0
        %v4090 = vsel %vm1908, %v4085, 0
        %4092 = vmatprep.subr.bf16.mxu0 0
        %4093 = vmatpush1.bf16.msra.mxu0 %v4090
        %4094 = vmatprep.subr.bf16.mxu0 0
        %4095 = vmatpush1.bf16.msra.mxu0 0
        %4096 = vmatprep.subr.bf16.mxu0 0
        %4097 = vmatpush1.bf16.msra.mxu0 0
        %4098 = vmatprep.subr.bf16.mxu0 0
        %4099 = vmatpush1.bf16.msra.mxu0 0
        %4100 = vmatprep.subr.bf16.mxu0 0
        %4101 = vmatpush1.bf16.msra.mxu0 0
        %4102 = vmatprep.subr.bf16.mxu0 0
        %4103 = vmatpush1.bf16.msra.mxu0 0
        %4104 = vmatprep.subr.bf16.mxu0 0
        %4105 = vmatpush1.bf16.msra.mxu0 0
        %4106 = vmatprep.subr.bf16.mxu0 0
        %4107 = vmatpush1.bf16.msra.mxu0 0
        %4108 = vmatprep.subr.bf16.mxu0 0
        %4109 = vmatpush1.bf16.msra.mxu0 0
        %4110 = vmatprep.subr.bf16.mxu0 0
        %4111 = vmatpush1.bf16.msra.mxu0 0
        %4112 = vmatprep.subr.bf16.mxu0 0
        %4113 = vmatpush1.bf16.msra.mxu0 0
        %4114 = vmatprep.subr.bf16.mxu0 0
        %4115 = vmatpush1.bf16.msra.mxu0 0
        %4116 = vmatprep.subr.bf16.mxu0 0
        %4117 = vmatpush1.bf16.msra.mxu0 0
        %4118 = vmatprep.subr.bf16.mxu0 0
        %4119 = vmatpush1.bf16.msra.mxu0 0
        %4120 = vmatprep.subr.bf16.mxu0 0
        %4121 = vmatpush1.bf16.msra.mxu0 0
        %4122 = vmatprep.subr.bf16.mxu0 0
        %4123 = vmatpush1.bf16.msra.mxu0 0
        %4124 = vmatprep.mubr.bf16.mxu0 0
        %4125 = vmatmul.mubr.bf16.gmra.mrb[0].mxu0 %v4087
        %v4126 = vpop.f32.mrb[0].mxu0
        %v4127 = vadd.f32 0.0, %v4126
        %v4128 = vpop.f32.mrb[0].mxu0
        %v4129 = vpop.f32.mrb[0].mxu0
        %v4130 = vadd.f32 0.0, %v4129
        %v4131 = vpop.f32.mrb[0].mxu0
        %4132 = vdwg.mxu0
        %v4133 = vpack.c.bf16 %v4130, %v4127
        %v4135 = vsel %vm1495, %v4133, 0
        %v4138 = vsel %vm1908, %v3829, 0
        %4140 = vmatprep.subr.bf16.mxu0 0
        %4141 = vmatpush1.bf16.msra.mxu0 %v4138
        %4142 = vmatprep.subr.bf16.mxu0 0
        %4143 = vmatpush1.bf16.msra.mxu0 0
        %4144 = vmatprep.subr.bf16.mxu0 0
        %4145 = vmatpush1.bf16.msra.mxu0 0
        %4146 = vmatprep.subr.bf16.mxu0 0
        %4147 = vmatpush1.bf16.msra.mxu0 0
        %4148 = vmatprep.subr.bf16.mxu0 0
        %4149 = vmatpush1.bf16.msra.mxu0 0
        %4150 = vmatprep.subr.bf16.mxu0 0
        %4151 = vmatpush1.bf16.msra.mxu0 0
        %4152 = vmatprep.subr.bf16.mxu0 0
        %4153 = vmatpush1.bf16.msra.mxu0 0
        %4154 = vmatprep.subr.bf16.mxu0 0
        %4155 = vmatpush1.bf16.msra.mxu0 0
        %4156 = vmatprep.subr.bf16.mxu0 0
        %4157 = vmatpush1.bf16.msra.mxu0 0
        %4158 = vmatprep.subr.bf16.mxu0 0
        %4159 = vmatpush1.bf16.msra.mxu0 0
        %4160 = vmatprep.subr.bf16.mxu0 0
        %4161 = vmatpush1.bf16.msra.mxu0 0
        %4162 = vmatprep.subr.bf16.mxu0 0
        %4163 = vmatpush1.bf16.msra.mxu0 0
        %4164 = vmatprep.subr.bf16.mxu0 0
        %4165 = vmatpush1.bf16.msra.mxu0 0
        %4166 = vmatprep.subr.bf16.mxu0 0
        %4167 = vmatpush1.bf16.msra.mxu0 0
        %4168 = vmatprep.subr.bf16.mxu0 0
        %4169 = vmatpush1.bf16.msra.mxu0 0
        %4170 = vmatprep.subr.bf16.mxu0 0
        %4171 = vmatpush1.bf16.msra.mxu0 0
        %4172 = vmatprep.mubr.bf16.mxu0 0
        %4173 = vmatmul.mubr.bf16.gmra.mrb[0].mxu0 %v4135
        %v4174 = vpop.f32.mrb[0].mxu0
        %v4175 = vadd.f32 0.0, %v4174
        %v4176 = vpop.f32.mrb[0].mxu0
        %v4177 = vpop.f32.mrb[0].mxu0
        %v4178 = vadd.f32 0.0, %v4177
        %v4179 = vpop.f32.mrb[0].mxu0
        %4180 = vdwg.mxu0
        %v4181 = vadd.f32 %v3811, %v4175
        %v4182 = vadd.f32 %v3812, %v4178
        %v4183 = vld [vmem:[%s1210] sm:$0x1]
        %v4185 = vlaneseq
        %v4186 = vshrl.u32 %v4185, 7
        %v4187 = vsub.s32 0, %v4186
        %v4188 = vrot.slane %v4183, %v4187
        %v4190 = vadd.f32 %v4181, %v4188
        %v4191 = vadd.f32 %v4182, %v4188
        %v4192 = vadd.f32 %v4190, %v1243
        %v4193 = vadd.f32 %v4191, %v1244
        %v4194 = vld [vmem:[%s1213] sm:$0x1]
        %v4195 = vld [vmem:[%s1216] sm:$0x1]
        %v4196 = vsel %vm1247, %v4192, 0.0
        %4197 = vadd.xlane.f32.xlu0 %v4196
        %v4198 = vpop.xlane.xlu0 %4197
        %v4199 = vsel %vm1247, %v4193, 0.0
        %4200 = vadd.xlane.f32.xlu0 %v4199
        %v4201 = vpop.xlane.xlu0 %4200
        %v4202 = vmul.f32 %v4198, %v1254
        %v4203 = vmul.f32 %v4201, %v1254
        %v4204 = vsub.f32 %v4192, %v4202
        %v4205 = vsub.f32 %v4193, %v4203
        %v4206 = vmul.f32 %v4204, %v4204
        %v4207 = vmul.f32 %v4205, %v4205
        %v4208 = vsel %vm1247, %v4206, 0.0
        %4209 = vadd.xlane.f32.xlu0 %v4208
        %v4210 = vpop.xlane.xlu0 %4209
        %v4211 = vsel %vm1247, %v4207, 0.0
        %4212 = vadd.xlane.f32.xlu0 %v4211
        %v4213 = vpop.xlane.xlu0 %4212
        %v4214 = vmul.f32 %v4210, %v1254
        %v4215 = vmul.f32 %v4213, %v1254
        %v4216 = vadd.f32 %v4214, 1e-05
        %v4217 = vadd.f32 %v4215, 1e-05
        %v4218 = vrsqrt.pop %v4216
        %v4219 = vrsqrt.pop %v4217
        %v4220 = vmul.f32 %v4204, %v4218
        %v4221 = vmul.f32 %v4205, %v4219
        %v4223 = vlaneseq
        %v4224 = vshrl.u32 %v4223, 7
        %v4225 = vsub.s32 0, %v4224
        %v4226 = vrot.slane %v4194, %v4225
        %v4228 = vmul.f32 %v4220, %v4226
        %v4229 = vmul.f32 %v4221, %v4226
        %v4231 = vlaneseq
        %v4232 = vshrl.u32 %v4231, 7
        %v4233 = vsub.s32 0, %v4232
        %v4234 = vrot.slane %v4195, %v4233
        %v4236 = vadd.f32 %v4228, %v4234
        %v4237 = vadd.f32 %v4229, %v4234
        %v4238 = vpack.c.bf16 %v4237, %v4236
        %v4239 = vld [vmem:[%s1221] sm:$0xf]
        %v4240 = vld [vmem:[%s1221 + $0x4] sm:$0xf]
        %v4241 = vld [vmem:[%s1221 + $0x8] sm:$0xf]
        %v4242 = vld [vmem:[%s1221 + $0xc] sm:$0xf]
        %v4243 = vld [vmem:[%s1224] sm:$0x1]
        %v4245 = vlaneseq
        %v4246 = vshrl.u32 %v4245, 7
        %v4247 = vsub.s32 0, %v4246
        %v4248 = vrot.slane %v4243, %v4247
        %v4254 = vunpack.c.l.b16 %v4239
        %v4255 = vunpack.c.l.b16 %v4240
        %v4256 = vunpack.c.l.b16 %v4241
        %v4257 = vunpack.c.l.b16 %v4242
        %v4258 = vpack.c.b16 %v4255, %v4254
        %v4259 = vpack.c.b16 %v4257, %v4256
        %v4263 = vsel %vm1247, %v4238, 0
        %4265 = vmatprep.subr.bf16.mxu0 0
        %4266 = vmatpush1.bf16.msra.mxu0 %v4258
        %4267 = vmatprep.subr.bf16.mxu0 0
        %4268 = vmatpush1.bf16.msra.mxu0 %v4259
        %4269 = vmatprep.subr.bf16.mxu0 0
        %4270 = vmatpush1.bf16.msra.mxu0 0
        %4271 = vmatprep.subr.bf16.mxu0 0
        %4272 = vmatpush1.bf16.msra.mxu0 0
        %4273 = vmatprep.subr.bf16.mxu0 0
        %4274 = vmatpush1.bf16.msra.mxu0 0
        %4275 = vmatprep.subr.bf16.mxu0 0
        %4276 = vmatpush1.bf16.msra.mxu0 0
        %4277 = vmatprep.subr.bf16.mxu0 0
        %4278 = vmatpush1.bf16.msra.mxu0 0
        %4279 = vmatprep.subr.bf16.mxu0 0
        %4280 = vmatpush1.bf16.msra.mxu0 0
        %4281 = vmatprep.subr.bf16.mxu0 0
        %4282 = vmatpush1.bf16.msra.mxu0 0
        %4283 = vmatprep.subr.bf16.mxu0 0
        %4284 = vmatpush1.bf16.msra.mxu0 0
        %4285 = vmatprep.subr.bf16.mxu0 0
        %4286 = vmatpush1.bf16.msra.mxu0 0
        %4287 = vmatprep.subr.bf16.mxu0 0
        %4288 = vmatpush1.bf16.msra.mxu0 0
        %4289 = vmatprep.subr.bf16.mxu0 0
        %4290 = vmatpush1.bf16.msra.mxu0 0
        %4291 = vmatprep.subr.bf16.mxu0 0
        %4292 = vmatpush1.bf16.msra.mxu0 0
        %4293 = vmatprep.subr.bf16.mxu0 0
        %4294 = vmatpush1.bf16.msra.mxu0 0
        %4295 = vmatprep.subr.bf16.mxu0 0
        %4296 = vmatpush1.bf16.msra.mxu0 0
        %4297 = vmatprep.mubr.bf16.mxu0 0
        %4298 = vmatmul.mubr.bf16.gmra.mrb[0].mxu0 %v4263
        %v4299 = vpop.f32.mrb[0].mxu0
        %v4300 = vadd.f32 %v4248, %v4299
        %v4301 = vpop.f32.mrb[0].mxu0
        %v4302 = vpop.f32.mrb[0].mxu0
        %v4303 = vadd.f32 %v4248, %v4302
        %v4304 = vpop.f32.mrb[0].mxu0
        %4305 = vdwg.mxu0
        %v4306 = vmul.f32 %v4300, 0.044715
        %v4307 = vmul.f32 %v4303, 0.044715
        %v4308 = vmul.f32 %v4306, %v4300
        %v4309 = vmul.f32 %v4307, %v4303
        %v4310 = vmul.f32 %v4308, %v4300
        %v4311 = vmul.f32 %v4309, %v4303
        %v4312 = vadd.f32 %v4300, %v4310
        %v4313 = vadd.f32 %v4303, %v4311
        %v4314 = vmul.f32 %v4312, 0.7978846
        %v4315 = vmul.f32 %v4313, 0.7978846
        %v4316 = vmul.f32 %v4300, 0.5
        %v4317 = vmul.f32 %v4303, 0.5
        %v4318 = vtanh.pop %v4314
        %v4319 = vtanh.pop %v4315
        %v4320 = vadd.f32 %v4318, 1.0
        %v4321 = vadd.f32 %v4319, 1.0
        %v4322 = vmul.f32 %v4316, %v4320
        %v4323 = vmul.f32 %v4317, %v4321
        %v4324 = vpack.c.bf16 %v4323, %v4322
        %v4325 = vld [vmem:[%s1229] sm:$0xf]
        %v4326 = vld [vmem:[%s1229 + $0x4] sm:$0xf]
        %v4327 = vld [vmem:[%s1229 + $0x8] sm:$0xf]
        %v4328 = vld [vmem:[%s1229 + $0xc] sm:$0xf]
        %v4329 = vld [vmem:[%s1229 + $0x10] sm:$0xf]
        %v4330 = vld [vmem:[%s1229 + $0x14] sm:$0xf]
        %v4331 = vld [vmem:[%s1229 + $0x18] sm:$0xf]
        %v4332 = vld [vmem:[%s1229 + $0x1c] sm:$0xf]
        %v4333 = vld [vmem:[%s1232] sm:$0x1]
        %v4335 = vlaneseq
        %v4336 = vshrl.u32 %v4335, 7
        %v4337 = vsub.s32 0, %v4336
        %v4338 = vrot.slane %v4333, %v4337
        %v4348 = vunpack.c.l.b16 %v4325
        %v4349 = vunpack.c.l.b16 %v4326
        %v4350 = vunpack.c.l.b16 %v4327
        %v4351 = vunpack.c.l.b16 %v4328
        %v4352 = vunpack.c.l.b16 %v4329
        %v4353 = vunpack.c.l.b16 %v4330
        %v4354 = vunpack.c.l.b16 %v4331
        %v4355 = vunpack.c.l.b16 %v4332
        %v4356 = vpack.c.b16 %v4349, %v4348
        %v4357 = vpack.c.b16 %v4351, %v4350
        %v4358 = vpack.c.b16 %v4353, %v4352
        %v4359 = vpack.c.b16 %v4355, %v4354
        %vm4364 = vcmask 523264
        %v4366 = vsel %vm4364, %v4324, 0
        %4368 = vmatprep.subr.bf16.mxu0 0
        %4369 = vmatpush1.bf16.msra.mxu0 %v4356
        %4370 = vmatprep.subr.bf16.mxu0 0
        %4371 = vmatpush1.bf16.msra.mxu0 %v4357
        %4372 = vmatprep.subr.bf16.mxu0 0
        %4373 = vmatpush1.bf16.msra.mxu0 %v4358
        %4374 = vmatprep.subr.bf16.mxu0 0
        %4375 = vmatpush1.bf16.msra.mxu0 %v4359
        %4376 = vmatprep.subr.bf16.mxu0 0
        %4377 = vmatpush1.bf16.msra.mxu0 0
        %4378 = vmatprep.subr.bf16.mxu0 0
        %4379 = vmatpush1.bf16.msra.mxu0 0
        %4380 = vmatprep.subr.bf16.mxu0 0
        %4381 = vmatpush1.bf16.msra.mxu0 0
        %4382 = vmatprep.subr.bf16.mxu0 0
        %4383 = vmatpush1.bf16.msra.mxu0 0
        %4384 = vmatprep.subr.bf16.mxu0 0
        %4385 = vmatpush1.bf16.msra.mxu0 0
        %4386 = vmatprep.subr.bf16.mxu0 0
        %4387 = vmatpush1.bf16.msra.mxu0 0
        %4388 = vmatprep.subr.bf16.mxu0 0
        %4389 = vmatpush1.bf16.msra.mxu0 0
        %4390 = vmatprep.subr.bf16.mxu0 0
        %4391 = vmatpush1.bf16.msra.mxu0 0
        %4392 = vmatprep.subr.bf16.mxu0 0
        %4393 = vmatpush1.bf16.msra.mxu0 0
        %4394 = vmatprep.subr.bf16.mxu0 0
        %4395 = vmatpush1.bf16.msra.mxu0 0
        %4396 = vmatprep.subr.bf16.mxu0 0
        %4397 = vmatpush1.bf16.msra.mxu0 0
        %4398 = vmatprep.subr.bf16.mxu0 0
        %4399 = vmatpush1.bf16.msra.mxu0 0
        %4400 = vmatprep.mubr.bf16.mxu0 0
        %4401 = vmatmul.mubr.bf16.gmra.mrb[0].mxu0 %v4366
        %v4402 = vpop.f32.mrb[0].mxu0
        %v4403 = vadd.f32 %v4338, %v4402
        %v4404 = vpop.f32.mrb[0].mxu0
        %v4405 = vpop.f32.mrb[0].mxu0
        %v4406 = vadd.f32 %v4338, %v4405
        %v4407 = vpop.f32.mrb[0].mxu0
        %4408 = vdwg.mxu0
        %v4409 = vadd.f32 %v4403, %v4192
        %v4410 = vadd.f32 %v4406, %v4193
        %4411 = vst.msk [vmem:[#allocation2] sm:$0xff] %vm1247, %v4409
        %4412 = vst.msk [vmem:[#allocation2 + $0x8] sm:$0xff] %vm1247, %v4410
        %p4413 = scmp.eq.s32.totalorder %s45, 1
        // Predicated region
        $region129: #{estiformer_encoder_forward.1} parent=123 // pred_check
          %p4414 = pneg %p4413
        $region130: #{estiformer_encoder_forward.1} parent=123 // pred_check_branch
          %4416 = sbr.rel (%p4414) target = $region132
        $region131: #{estiformer_encoder_forward.1} parent=123 // pred_region
          %v4417 = vld [vmem:[#allocation2] sm:$0xff]
          %v4418 = vld [vmem:[#allocation2 + $0x8] sm:$0xff]
          %4419 = vst.msk [vmem:[%s1125] sm:$0xff] %vm1247, %v4417
          %4420 = vst.msk [vmem:[%s1125 + $0x8] sm:$0xff] %vm1247, %v4418
        $region132: #{estiformer_encoder_forward.1} parent=123 // pred_fallthru
          _
        %s4421 = sand.u32 %s736, 1
        %s4422 = scalar_lea.sflag [#allocation4], %s4421
        %s4423 = sand.u32 %s736, 1
        %s4424 = smul.addr %s4423, 16
        %s4425 = scalar_lea.vmem [#allocation3], %s4424
        // Predicated region
        $region133: #{estiformer_encoder_forward.1} parent=123 // pred_check
          %p4426 = pneg %p746
        $region134: #{estiformer_encoder_forward.1} parent=123 // pred_check_branch
          %4428 = sbr.rel (%p4426) target = $region136
        $region135: #{estiformer_encoder_forward.1} parent=123 // pred_region
          %s4430 = ssub.s32 256, 256
          %4431 = vsyncadd %s4422, %s4430
          %s4432 = smul.addr %s44, 2
          %s4433 = smul.addr %s4432, 128
          %s4434 = scalar_lea.hbm %s26, %s4433
          %s4435 = sshll.u32 %s4425, 4
          %s4436 = int_to_ptr.vmem [resolvable:$true] %s4435
          %4441 = dma.vmem_to_hbm [thread:$0]  %s4436, 256, %s4434, %s4422, 128, 128, 8
        $region136: #{estiformer_encoder_forward.1} parent=123 // pred_fallthru
          _
      $region124: #{estiformer_encoder_forward.1} parent=5 // pred_fallthru
        _
      %p4442 = scmp.le.s32.totalorder 2, %s35
      // Predicated region
      $region137: #{estiformer_encoder_forward.1} parent=5 // pred_check
        %p4443 = pneg %p4442
      $region138: #{estiformer_encoder_forward.1} parent=5 // pred_check_branch
        %4445 = sbr.rel (%p4443) target = $region140
      $region139: #{estiformer_encoder_forward.1} parent=5 // pred_region
        %s4446 = ssub.s32 %s35, 2
        // Predicated region
        $region141: #{estiformer_encoder_forward.1} parent=139 // pred_check
          %p4447 = pneg %p752
        $region142: #{estiformer_encoder_forward.1} parent=139 // pred_check_branch
          %4449 = sbr.rel (%p4447) target = $region144
        $region143: #{estiformer_encoder_forward.1} parent=139 // pred_region
          %s4450 = sand.u32 %s737, 1
          %s4451 = scalar_lea.sflag [#allocation4], %s4450
          %s4452 = sand.u32 %s737, 1
          %s4453 = smul.addr %s4452, 16
          %s4454 = scalar_lea.vmem [#allocation3], %s4453
          %4455 = dma.done %s4451, 256
        $region144: #{estiformer_encoder_forward.1} parent=139 // pred_fallthru
          _
      $region140: #{estiformer_encoder_forward.1} parent=5 // pred_fallthru
        _
    $region6: #{estiformer_encoder_forward.1} parent=1 // loop_footer
      %s39 = sadd.s32 1, %s35
    $region7: #{estiformer_encoder_forward.1} parent=1 // loop_footer_branch
      %34 = sbr.rel target = $region3
    $region8: #{estiformer_encoder_forward.1} parent=1 // loop_exit
      _
    %4456 = vsyncpa [#allocation4], 1
    %s4457 = scalar_lea.sflag [#allocation4], 1
    %4458 = vsyncpa %s4457, 1

</llo_original>
